<compile_context>
chip_gen: v7x
topology: tpu7x:2x2x1
jax: 0.10.0
libtpu: 0.0.40
codegen_flags: <defaults>
</compile_context>

<pallas_src>
import jax
import jax.numpy as jnp
import numpy as np
from jax.experimental import pallas as pl
from jax.experimental.pallas import tpu as pltpu


# ---------------------------------------------------------------------------
# Fused LeNet forward kernel (one grid step = one image)
# ---------------------------------------------------------------------------
def _lenet_kernel(x_ref, t1_ref, b1_ref, er1_ref, ec1_ref,
                  t2_ref, b2_ref, er2_ref, ec2_ref,
                  wf1_ref, bf1_ref, wf2_ref, bf2_ref, wf3_ref, bf3_ref,
                  o_ref):
    f32 = jnp.float32

    def dot(a, b):
        return jnp.dot(a, b, preferred_element_type=f32)

    x = x_ref[0]                                            # (28, 28), C_in == 1

    # conv1 + bias + ReLU  ->  c1: (24, 144) laid out as [oh, oc*24 + ow]
    c1 = dot(x[0:24, :], t1_ref[0])
    for di in range(1, 5):
        c1 = c1 + dot(x[di:di + 24, :], t1_ref[di])
    c1 = jnp.maximum(c1 + b1_ref[...], 0.0)

    # 2x2 max-pool  ->  s2: (12, 72) laid out as [oh, c*12 + ow]
    rmax = jnp.maximum(dot(er1_ref[0], c1), dot(er1_ref[1], c1))
    s2 = jnp.maximum(dot(rmax, ec1_ref[0]), dot(rmax, ec1_ref[1]))

    # conv2 + bias + ReLU  ->  c3: (8, 128) laid out as [oh, oc*8 + ow]
    c3 = dot(s2[0:8, :], t2_ref[0])
    for di in range(1, 5):
        c3 = c3 + dot(s2[di:di + 8, :], t2_ref[di])
    c3 = jnp.maximum(c3 + b2_ref[...], 0.0)

    # 2x2 max-pool  ->  s4: (4, 64) laid out as [oh, oc*4 + ow]
    rmax2 = jnp.maximum(dot(er2_ref[0], c3), dot(er2_ref[1], c3))
    s4 = jnp.maximum(dot(rmax2, ec2_ref[0]), dot(rmax2, ec2_ref[1]))

    # fc1 (torch.flatten's (C,H,W) order folded into the packed weight)  ->  (1, 128)
    f5 = bf1_ref[...]
    for h in range(4):
        f5 = f5 + dot(s4[h:h + 1, :], wf1_ref[h])
    f5 = jnp.maximum(f5, 0.0)

    # fc2 + fc3 (both ReLU'd, exactly like the reference module)
    f6 = jnp.maximum(dot(f5, wf2_ref[...]) + bf2_ref[...], 0.0)
    out = jnp.maximum(dot(f6, wf3_ref[...]) + bf3_ref[...], 0.0)

    o_ref[0] = jnp.broadcast_to(out, (8, 128))              # lane-dense, (8,128)-aligned store


# ---------------------------------------------------------------------------
# Forward wrapper: one pallas_call for the whole network
# ---------------------------------------------------------------------------
def lenet_forward(x_nchw, packed):
    B = x_nchw.shape[0]
    x_img = x_nchw.reshape(B, 28, 28)                       # C_in == 1: pure reshape, no transpose

    in_specs = [pl.BlockSpec((1, 28, 28), lambda b: (b, 0, 0))]
    for arr in packed:                                      # weights / selectors: whole-array blocks
        in_specs.append(
            pl.BlockSpec(arr.shape, (lambda n: (lambda b: (0,) * n))(arr.ndim)))

    out_pad = pl.pallas_call(
        _lenet_kernel,
        out_shape=jax.ShapeDtypeStruct((B, 8, 128), jnp.float32),
        grid=(B,),
        in_specs=in_specs,
        out_specs=pl.BlockSpec((1, 8, 128), lambda b: (b, 0, 0)),
        compiler_params=pltpu.CompilerParams(
            dimension_semantics=("parallel",)),
    )(x_img, *packed)
    return out_pad[:, 0, :10]                               # strip lane padding once, at the end


# ---------------------------------------------------------------------------
# One-time host-side packing of PyTorch-layout parameters into kernel operands
# ---------------------------------------------------------------------------
def pack_params(p):
    w1 = np.asarray(p["conv1_w"], np.float32)   # (6, 1, 5, 5)
    b1 = np.asarray(p["conv1_b"], np.float32)   # (6,)
    w2 = np.asarray(p["conv2_w"], np.float32)   # (16, 6, 5, 5)
    b2 = np.asarray(p["conv2_b"], np.float32)   # (16,)
    wf1 = np.asarray(p["fc1_w"], np.float32)    # (120, 256)
    bf1 = np.asarray(p["fc1_b"], np.float32)    # (120,)
    wf2 = np.asarray(p["fc2_w"], np.float32)    # (84, 120)
    bf2 = np.asarray(p["fc2_b"], np.float32)    # (84,)
    wf3 = np.asarray(p["fc3_w"], np.float32)    # (10, 84)
    bf3 = np.asarray(p["fc3_b"], np.float32)    # (10,)

    # conv1 Toeplitz slabs: t1[di, ow+dj, oc*24+ow] = w1[oc, 0, di, dj]
    t1 = np.zeros((5, 28, 6 * 24), np.float32)
    ow = np.arange(24)
    for di in range(5):
        for dj in range(5):
            for oc in range(6):
                t1[di, ow + dj, oc * 24 + ow] = w1[oc, 0, di, dj]
    b1r = np.repeat(b1, 24)[None, :]                                   # (1, 144)

    # conv2 Toeplitz slabs (channel contraction folded in):
    #   t2[di, c*12 + ow+dj, oc*8 + ow] = w2[oc, c, di, dj]
    t2 = np.zeros((5, 6 * 12, 128), np.float32)
    ow8 = np.arange(8)
    for di in range(5):
        for dj in range(5):
            for c in range(6):
                for oc in range(16):
                    t2[di, c * 12 + ow8 + dj, oc * 8 + ow8] = w2[oc, c, di, dj]
    b2r = np.repeat(b2, 8)[None, :]                                    # (1, 128)

    # even/odd row & column selectors implementing the 2x2 max-pools as matmuls
    def row_sel(n_out, parity):
        m = np.zeros((n_out, 2 * n_out), np.float32)
        m[np.arange(n_out), 2 * np.arange(n_out) + parity] = 1.0
        return m

    def col_sel(n_ch, w_out, parity):
        m = np.zeros((n_ch * 2 * w_out, n_ch * w_out), np.float32)
        j = np.arange(w_out)
        for c in range(n_ch):
            m[c * 2 * w_out + 2 * j + parity, c * w_out + j] = 1.0
        return m

    er1 = np.stack([row_sel(12, 0), row_sel(12, 1)])                   # (2, 12, 24)
    ec1 = np.stack([col_sel(6, 12, 0), col_sel(6, 12, 1)])             # (2, 144, 72)
    er2 = np.stack([row_sel(4, 0), row_sel(4, 1)])                     # (2, 4, 8)
    ec2 = np.stack([col_sel(16, 4, 0), col_sel(16, 4, 1)])             # (2, 128, 64)

    # fc1: fold torch.flatten's (C,H,W) ordering of the NCHW tensor into the weight:
    #   wf1p[h, oc*4 + w, n] = wf1[n, oc*16 + h*4 + w]        (N padded 120 -> 128)
    wf1p = np.zeros((4, 64, 128), np.float32)
    for h in range(4):
        for oc in range(16):
            for w in range(4):
                wf1p[h, oc * 4 + w, :120] = wf1[:, oc * 16 + h * 4 + w]
    bf1p = np.zeros((1, 128), np.float32); bf1p[0, :120] = bf1

    wf2p = np.zeros((128, 128), np.float32); wf2p[:120, :84] = wf2.T
    bf2p = np.zeros((1, 128), np.float32); bf2p[0, :84] = bf2
    wf3p = np.zeros((128, 128), np.float32); wf3p[:84, :10] = wf3.T
    bf3p = np.zeros((1, 128), np.float32); bf3p[0, :10] = bf3

    packed = (t1, b1r, er1, ec1, t2, b2r, er2, ec2,
              wf1p, bf1p, wf2p, bf2p, wf3p, bf3p)
    return tuple(jnp.asarray(a) for a in packed)


# ---------------------------------------------------------------------------
# Parameter init (PyTorch default-like) and a pure-JAX reference for validation
# ---------------------------------------------------------------------------
def init_params(key):
    def u(k, shape, fan_in):
        bound = 1.0 / np.sqrt(fan_in)
        return jax.random.uniform(k, shape, jnp.float32, -bound, bound)

    ks = jax.random.split(key, 10)
    return {
        "conv1_w": u(ks[0], (6, 1, 5, 5), 25),   "conv1_b": u(ks[1], (6,), 25),
        "conv2_w": u(ks[2], (16, 6, 5, 5), 150), "conv2_b": u(ks[3], (16,), 150),
        "fc1_w": u(ks[4], (120, 256), 256),      "fc1_b": u(ks[5], (120,), 256),
        "fc2_w": u(ks[6], (84, 120), 120),       "fc2_b": u(ks[7], (84,), 120),
        "fc3_w": u(ks[8], (10, 84), 84),         "fc3_b": u(ks[9], (10,), 84),
    }


def lenet_reference(x, p):
    hi = jax.lax.Precision.HIGHEST
    c1 = jax.lax.conv_general_dilated(x, p["conv1_w"], (1, 1), "VALID",
                                      dimension_numbers=("NCHW", "OIHW", "NCHW"), precision=hi)
    c1 = jax.nn.relu(c1 + p["conv1_b"][None, :, None, None])
    s2 = jax.lax.reduce_window(c1, -jnp.inf, jax.lax.max, (1, 1, 2, 2), (1, 1, 2, 2), "VALID")
    c3 = jax.lax.conv_general_dilated(s2, p["conv2_w"], (1, 1), "VALID",
                                      dimension_numbers=("NCHW", "OIHW", "NCHW"), precision=hi)
    c3 = jax.nn.relu(c3 + p["conv2_b"][None, :, None, None])
    s4 = jax.lax.reduce_window(c3, -jnp.inf, jax.lax.max, (1, 1, 2, 2), (1, 1, 2, 2), "VALID")
    flat = s4.reshape(s4.shape[0], -1)
    f5 = jax.nn.relu(jnp.dot(flat, p["fc1_w"].T, precision=hi) + p["fc1_b"])
    f6 = jax.nn.relu(jnp.dot(f5, p["fc2_w"].T, precision=hi) + p["fc2_b"])
    return jax.nn.relu(jnp.dot(f6, p["fc3_w"].T, precision=hi) + p["fc3_b"])


if __name__ == "__main__":
    key = jax.random.PRNGKey(0)
    k_x, k_p = jax.random.split(key)
    # fc1 expects 16*4*4 features -> single-channel 28x28 input.
    x = jax.random.normal(k_x, (2, 1, 28, 28), jnp.float32)
    params = init_params(k_p)
    packed = pack_params(params)                # one-time host-side weight packing

    fwd = jax.jit(lenet_forward)
    out = jax.block_until_ready(fwd(x, packed))
    assert out.shape == (2, 10)

    ref = jax.block_until_ready(jax.jit(lenet_reference)(x, params))
    err = float(jnp.max(jnp.abs(out - ref)))
    assert err < 5e-2, f"kernel/reference mismatch: max|diff| = {err}"
    print("KERNEL_OK")
</pallas_src>

<mosaic_0001>
module attributes {stable_mosaic.version = 11 : i64} {
  func.func @_lenet_kernel(%arg0: i32, %arg1: memref<1x28x28xf32, #tpu.memory_space<vmem>>, %arg2: memref<5x28x144xf32, #tpu.memory_space<vmem>>, %arg3: memref<1x144xf32, #tpu.memory_space<vmem>>, %arg4: memref<2x12x24xf32, #tpu.memory_space<vmem>>, %arg5: memref<2x144x72xf32, #tpu.memory_space<vmem>>, %arg6: memref<5x72x128xf32, #tpu.memory_space<vmem>>, %arg7: memref<1x128xf32, #tpu.memory_space<vmem>>, %arg8: memref<2x4x8xf32, #tpu.memory_space<vmem>>, %arg9: memref<2x128x64xf32, #tpu.memory_space<vmem>>, %arg10: memref<4x64x128xf32, #tpu.memory_space<vmem>>, %arg11: memref<1x128xf32, #tpu.memory_space<vmem>>, %arg12: memref<128x128xf32, #tpu.memory_space<vmem>>, %arg13: memref<1x128xf32, #tpu.memory_space<vmem>>, %arg14: memref<128x128xf32, #tpu.memory_space<vmem>>, %arg15: memref<1x128xf32, #tpu.memory_space<vmem>>, %arg16: memref<1x8x128xf32, #tpu.memory_space<vmem>>) attributes {dimension_semantics = [#tpu.dimension_semantics<parallel>], iteration_bounds = array<i64: 2>, scalar_prefetch = 0 : i64, scratch_operands = 0 : i64, tpu.core_type = #tpu.core_type<tc>, window_params = [{transform_indices = @transform_0, window_bounds = array<i64: 1, 28, 28>}, {pipeline_mode = #tpu.pipeline_mode<synchronous>, transform_indices = @transform_1, window_bounds = array<i64: 5, 28, 144>}, {pipeline_mode = #tpu.pipeline_mode<synchronous>, transform_indices = @transform_2, window_bounds = array<i64: 1, 144>}, {pipeline_mode = #tpu.pipeline_mode<synchronous>, transform_indices = @transform_3, window_bounds = array<i64: 2, 12, 24>}, {pipeline_mode = #tpu.pipeline_mode<synchronous>, transform_indices = @transform_4, window_bounds = array<i64: 2, 144, 72>}, {pipeline_mode = #tpu.pipeline_mode<synchronous>, transform_indices = @transform_5, window_bounds = array<i64: 5, 72, 128>}, {pipeline_mode = #tpu.pipeline_mode<synchronous>, transform_indices = @transform_6, window_bounds = array<i64: 1, 128>}, {pipeline_mode = #tpu.pipeline_mode<synchronous>, transform_indices = @transform_7, window_bounds = array<i64: 2, 4, 8>}, {pipeline_mode = #tpu.pipeline_mode<synchronous>, transform_indices = @transform_8, window_bounds = array<i64: 2, 128, 64>}, {pipeline_mode = #tpu.pipeline_mode<synchronous>, transform_indices = @transform_9, window_bounds = array<i64: 4, 64, 128>}, {pipeline_mode = #tpu.pipeline_mode<synchronous>, transform_indices = @transform_10, window_bounds = array<i64: 1, 128>}, {pipeline_mode = #tpu.pipeline_mode<synchronous>, transform_indices = @transform_11, window_bounds = array<i64: 128, 128>}, {pipeline_mode = #tpu.pipeline_mode<synchronous>, transform_indices = @transform_12, window_bounds = array<i64: 1, 128>}, {pipeline_mode = #tpu.pipeline_mode<synchronous>, transform_indices = @transform_13, window_bounds = array<i64: 128, 128>}, {pipeline_mode = #tpu.pipeline_mode<synchronous>, transform_indices = @transform_14, window_bounds = array<i64: 1, 128>}, {transform_indices = @transform_15, window_bounds = array<i64: 1, 8, 128>}]} {
    %c0 = arith.constant 0 : index
    %c0_0 = arith.constant 0 : index
    %c0_1 = arith.constant 0 : index
    %0 = vector.load %arg1[%c0, %c0_0, %c0_1] : memref<1x28x28xf32, #tpu.memory_space<vmem>>, vector<1x28x28xf32>
    %1 = vector.shape_cast %0 : vector<1x28x28xf32> to vector<28x28xf32>
    %2 = vector.extract_strided_slice %1 {offsets = [0, 0], sizes = [24, 28], strides = [1, 1]} : vector<28x28xf32> to vector<24x28xf32>
    %c0_2 = arith.constant 0 : index
    %c0_3 = arith.constant 0 : index
    %c0_4 = arith.constant 0 : index
    %3 = vector.load %arg2[%c0_2, %c0_3, %c0_4] : memref<5x28x144xf32, #tpu.memory_space<vmem>>, vector<1x28x144xf32>
    %4 = vector.shape_cast %3 : vector<1x28x144xf32> to vector<28x144xf32>
    %cst = arith.constant dense<0.000000e+00> : vector<24x144xf32>
    %5 = tpu.matmul %2, %4, %cst {dimension_numbers = #tpu.dot_dimension_numbers<[1], [0], [0], [1], [0, 0, 1, 1], [], []>} : vector<24x28xf32>, vector<28x144xf32>, vector<24x144xf32> -> vector<24x144xf32>
    %6 = vector.extract_strided_slice %1 {offsets = [1, 0], sizes = [24, 28], strides = [1, 1]} : vector<28x28xf32> to vector<24x28xf32>
    %c1 = arith.constant 1 : index
    %c0_5 = arith.constant 0 : index
    %c0_6 = arith.constant 0 : index
    %7 = vector.load %arg2[%c1, %c0_5, %c0_6] : memref<5x28x144xf32, #tpu.memory_space<vmem>>, vector<1x28x144xf32>
    %8 = vector.shape_cast %7 : vector<1x28x144xf32> to vector<28x144xf32>
    %cst_7 = arith.constant dense<0.000000e+00> : vector<24x144xf32>
    %9 = tpu.matmul %6, %8, %cst_7 {dimension_numbers = #tpu.dot_dimension_numbers<[1], [0], [0], [1], [0, 0, 1, 1], [], []>} : vector<24x28xf32>, vector<28x144xf32>, vector<24x144xf32> -> vector<24x144xf32>
    %10 = arith.addf %5, %9 : vector<24x144xf32>
    %11 = vector.extract_strided_slice %1 {offsets = [2, 0], sizes = [24, 28], strides = [1, 1]} : vector<28x28xf32> to vector<24x28xf32>
    %c2 = arith.constant 2 : index
    %c0_8 = arith.constant 0 : index
    %c0_9 = arith.constant 0 : index
    %12 = vector.load %arg2[%c2, %c0_8, %c0_9] : memref<5x28x144xf32, #tpu.memory_space<vmem>>, vector<1x28x144xf32>
    %13 = vector.shape_cast %12 : vector<1x28x144xf32> to vector<28x144xf32>
    %cst_10 = arith.constant dense<0.000000e+00> : vector<24x144xf32>
    %14 = tpu.matmul %11, %13, %cst_10 {dimension_numbers = #tpu.dot_dimension_numbers<[1], [0], [0], [1], [0, 0, 1, 1], [], []>} : vector<24x28xf32>, vector<28x144xf32>, vector<24x144xf32> -> vector<24x144xf32>
    %15 = arith.addf %10, %14 : vector<24x144xf32>
    %16 = vector.extract_strided_slice %1 {offsets = [3, 0], sizes = [24, 28], strides = [1, 1]} : vector<28x28xf32> to vector<24x28xf32>
    %c3 = arith.constant 3 : index
    %c0_11 = arith.constant 0 : index
    %c0_12 = arith.constant 0 : index
    %17 = vector.load %arg2[%c3, %c0_11, %c0_12] : memref<5x28x144xf32, #tpu.memory_space<vmem>>, vector<1x28x144xf32>
    %18 = vector.shape_cast %17 : vector<1x28x144xf32> to vector<28x144xf32>
    %cst_13 = arith.constant dense<0.000000e+00> : vector<24x144xf32>
    %19 = tpu.matmul %16, %18, %cst_13 {dimension_numbers = #tpu.dot_dimension_numbers<[1], [0], [0], [1], [0, 0, 1, 1], [], []>} : vector<24x28xf32>, vector<28x144xf32>, vector<24x144xf32> -> vector<24x144xf32>
    %20 = arith.addf %15, %19 : vector<24x144xf32>
    %21 = vector.extract_strided_slice %1 {offsets = [4, 0], sizes = [24, 28], strides = [1, 1]} : vector<28x28xf32> to vector<24x28xf32>
    %c4 = arith.constant 4 : index
    %c0_14 = arith.constant 0 : index
    %c0_15 = arith.constant 0 : index
    %22 = vector.load %arg2[%c4, %c0_14, %c0_15] : memref<5x28x144xf32, #tpu.memory_space<vmem>>, vector<1x28x144xf32>
    %23 = vector.shape_cast %22 : vector<1x28x144xf32> to vector<28x144xf32>
    %cst_16 = arith.constant dense<0.000000e+00> : vector<24x144xf32>
    %24 = tpu.matmul %21, %23, %cst_16 {dimension_numbers = #tpu.dot_dimension_numbers<[1], [0], [0], [1], [0, 0, 1, 1], [], []>} : vector<24x28xf32>, vector<28x144xf32>, vector<24x144xf32> -> vector<24x144xf32>
    %25 = arith.addf %20, %24 : vector<24x144xf32>
    %c0_17 = arith.constant 0 : index
    %c0_18 = arith.constant 0 : index
    %26 = vector.load %arg3[%c0_17, %c0_18] : memref<1x144xf32, #tpu.memory_space<vmem>>, vector<1x144xf32>
    %27 = vector.broadcast %26 : vector<1x144xf32> to vector<24x144xf32>
    %28 = arith.addf %25, %27 : vector<24x144xf32>
    %cst_19 = arith.constant 0.000000e+00 : f32
    %29 = vector.broadcast %cst_19 : f32 to vector<24x144xf32>
    %30 = arith.maximumf %28, %29 : vector<24x144xf32>
    %c0_20 = arith.constant 0 : index
    %c0_21 = arith.constant 0 : index
    %c0_22 = arith.constant 0 : index
    %31 = vector.load %arg4[%c0_20, %c0_21, %c0_22] : memref<2x12x24xf32, #tpu.memory_space<vmem>>, vector<1x12x24xf32>
    %32 = vector.shape_cast %31 : vector<1x12x24xf32> to vector<12x24xf32>
    %cst_23 = arith.constant dense<0.000000e+00> : vector<12x144xf32>
    %33 = tpu.matmul %32, %30, %cst_23 {dimension_numbers = #tpu.dot_dimension_numbers<[1], [0], [0], [1], [0, 0, 1, 1], [], []>} : vector<12x24xf32>, vector<24x144xf32>, vector<12x144xf32> -> vector<12x144xf32>
    %c1_24 = arith.constant 1 : index
    %c0_25 = arith.constant 0 : index
    %c0_26 = arith.constant 0 : index
    %34 = vector.load %arg4[%c1_24, %c0_25, %c0_26] : memref<2x12x24xf32, #tpu.memory_space<vmem>>, vector<1x12x24xf32>
    %35 = vector.shape_cast %34 : vector<1x12x24xf32> to vector<12x24xf32>
    %cst_27 = arith.constant dense<0.000000e+00> : vector<12x144xf32>
    %36 = tpu.matmul %35, %30, %cst_27 {dimension_numbers = #tpu.dot_dimension_numbers<[1], [0], [0], [1], [0, 0, 1, 1], [], []>} : vector<12x24xf32>, vector<24x144xf32>, vector<12x144xf32> -> vector<12x144xf32>
    %37 = arith.maximumf %33, %36 : vector<12x144xf32>
    %c0_28 = arith.constant 0 : index
    %c0_29 = arith.constant 0 : index
    %c0_30 = arith.constant 0 : index
    %38 = vector.load %arg5[%c0_28, %c0_29, %c0_30] : memref<2x144x72xf32, #tpu.memory_space<vmem>>, vector<1x144x72xf32>
    %39 = vector.shape_cast %38 : vector<1x144x72xf32> to vector<144x72xf32>
    %cst_31 = arith.constant dense<0.000000e+00> : vector<12x72xf32>
    %40 = tpu.matmul %37, %39, %cst_31 {dimension_numbers = #tpu.dot_dimension_numbers<[1], [0], [0], [1], [0, 0, 1, 1], [], []>} : vector<12x144xf32>, vector<144x72xf32>, vector<12x72xf32> -> vector<12x72xf32>
    %c1_32 = arith.constant 1 : index
    %c0_33 = arith.constant 0 : index
    %c0_34 = arith.constant 0 : index
    %41 = vector.load %arg5[%c1_32, %c0_33, %c0_34] : memref<2x144x72xf32, #tpu.memory_space<vmem>>, vector<1x144x72xf32>
    %42 = vector.shape_cast %41 : vector<1x144x72xf32> to vector<144x72xf32>
    %cst_35 = arith.constant dense<0.000000e+00> : vector<12x72xf32>
    %43 = tpu.matmul %37, %42, %cst_35 {dimension_numbers = #tpu.dot_dimension_numbers<[1], [0], [0], [1], [0, 0, 1, 1], [], []>} : vector<12x144xf32>, vector<144x72xf32>, vector<12x72xf32> -> vector<12x72xf32>
    %44 = arith.maximumf %40, %43 : vector<12x72xf32>
    %45 = vector.extract_strided_slice %44 {offsets = [0, 0], sizes = [8, 72], strides = [1, 1]} : vector<12x72xf32> to vector<8x72xf32>
    %c0_36 = arith.constant 0 : index
    %c0_37 = arith.constant 0 : index
    %c0_38 = arith.constant 0 : index
    %46 = vector.load %arg6[%c0_36, %c0_37, %c0_38] : memref<5x72x128xf32, #tpu.memory_space<vmem>>, vector<1x72x128xf32>
    %47 = vector.shape_cast %46 : vector<1x72x128xf32> to vector<72x128xf32>
    %cst_39 = arith.constant dense<0.000000e+00> : vector<8x128xf32>
    %48 = tpu.matmul %45, %47, %cst_39 {dimension_numbers = #tpu.dot_dimension_numbers<[1], [0], [0], [1], [0, 0, 1, 1], [], []>} : vector<8x72xf32>, vector<72x128xf32>, vector<8x128xf32> -> vector<8x128xf32>
    %49 = vector.extract_strided_slice %44 {offsets = [1, 0], sizes = [8, 72], strides = [1, 1]} : vector<12x72xf32> to vector<8x72xf32>
    %c1_40 = arith.constant 1 : index
    %c0_41 = arith.constant 0 : index
    %c0_42 = arith.constant 0 : index
    %50 = vector.load %arg6[%c1_40, %c0_41, %c0_42] : memref<5x72x128xf32, #tpu.memory_space<vmem>>, vector<1x72x128xf32>
    %51 = vector.shape_cast %50 : vector<1x72x128xf32> to vector<72x128xf32>
    %cst_43 = arith.constant dense<0.000000e+00> : vector<8x128xf32>
    %52 = tpu.matmul %49, %51, %cst_43 {dimension_numbers = #tpu.dot_dimension_numbers<[1], [0], [0], [1], [0, 0, 1, 1], [], []>} : vector<8x72xf32>, vector<72x128xf32>, vector<8x128xf32> -> vector<8x128xf32>
    %53 = arith.addf %48, %52 : vector<8x128xf32>
    %54 = vector.extract_strided_slice %44 {offsets = [2, 0], sizes = [8, 72], strides = [1, 1]} : vector<12x72xf32> to vector<8x72xf32>
    %c2_44 = arith.constant 2 : index
    %c0_45 = arith.constant 0 : index
    %c0_46 = arith.constant 0 : index
    %55 = vector.load %arg6[%c2_44, %c0_45, %c0_46] : memref<5x72x128xf32, #tpu.memory_space<vmem>>, vector<1x72x128xf32>
    %56 = vector.shape_cast %55 : vector<1x72x128xf32> to vector<72x128xf32>
    %cst_47 = arith.constant dense<0.000000e+00> : vector<8x128xf32>
    %57 = tpu.matmul %54, %56, %cst_47 {dimension_numbers = #tpu.dot_dimension_numbers<[1], [0], [0], [1], [0, 0, 1, 1], [], []>} : vector<8x72xf32>, vector<72x128xf32>, vector<8x128xf32> -> vector<8x128xf32>
    %58 = arith.addf %53, %57 : vector<8x128xf32>
    %59 = vector.extract_strided_slice %44 {offsets = [3, 0], sizes = [8, 72], strides = [1, 1]} : vector<12x72xf32> to vector<8x72xf32>
    %c3_48 = arith.constant 3 : index
    %c0_49 = arith.constant 0 : index
    %c0_50 = arith.constant 0 : index
    %60 = vector.load %arg6[%c3_48, %c0_49, %c0_50] : memref<5x72x128xf32, #tpu.memory_space<vmem>>, vector<1x72x128xf32>
    %61 = vector.shape_cast %60 : vector<1x72x128xf32> to vector<72x128xf32>
    %cst_51 = arith.constant dense<0.000000e+00> : vector<8x128xf32>
    %62 = tpu.matmul %59, %61, %cst_51 {dimension_numbers = #tpu.dot_dimension_numbers<[1], [0], [0], [1], [0, 0, 1, 1], [], []>} : vector<8x72xf32>, vector<72x128xf32>, vector<8x128xf32> -> vector<8x128xf32>
    %63 = arith.addf %58, %62 : vector<8x128xf32>
    %64 = vector.extract_strided_slice %44 {offsets = [4, 0], sizes = [8, 72], strides = [1, 1]} : vector<12x72xf32> to vector<8x72xf32>
    %c4_52 = arith.constant 4 : index
    %c0_53 = arith.constant 0 : index
    %c0_54 = arith.constant 0 : index
    %65 = vector.load %arg6[%c4_52, %c0_53, %c0_54] : memref<5x72x128xf32, #tpu.memory_space<vmem>>, vector<1x72x128xf32>
    %66 = vector.shape_cast %65 : vector<1x72x128xf32> to vector<72x128xf32>
    %cst_55 = arith.constant dense<0.000000e+00> : vector<8x128xf32>
    %67 = tpu.matmul %64, %66, %cst_55 {dimension_numbers = #tpu.dot_dimension_numbers<[1], [0], [0], [1], [0, 0, 1, 1], [], []>} : vector<8x72xf32>, vector<72x128xf32>, vector<8x128xf32> -> vector<8x128xf32>
    %68 = arith.addf %63, %67 : vector<8x128xf32>
    %c0_56 = arith.constant 0 : index
    %c0_57 = arith.constant 0 : index
    %69 = vector.load %arg7[%c0_56, %c0_57] : memref<1x128xf32, #tpu.memory_space<vmem>>, vector<1x128xf32>
    %70 = vector.broadcast %69 : vector<1x128xf32> to vector<8x128xf32>
    %71 = arith.addf %68, %70 : vector<8x128xf32>
    %cst_58 = arith.constant 0.000000e+00 : f32
    %72 = vector.broadcast %cst_58 : f32 to vector<8x128xf32>
    %73 = arith.maximumf %71, %72 : vector<8x128xf32>
    %c0_59 = arith.constant 0 : index
    %c0_60 = arith.constant 0 : index
    %c0_61 = arith.constant 0 : index
    %74 = vector.load %arg8[%c0_59, %c0_60, %c0_61] : memref<2x4x8xf32, #tpu.memory_space<vmem>>, vector<1x4x8xf32>
    %75 = vector.shape_cast %74 : vector<1x4x8xf32> to vector<4x8xf32>
    %cst_62 = arith.constant dense<0.000000e+00> : vector<4x128xf32>
    %76 = tpu.matmul %75, %73, %cst_62 {dimension_numbers = #tpu.dot_dimension_numbers<[1], [0], [0], [1], [0, 0, 1, 1], [], []>} : vector<4x8xf32>, vector<8x128xf32>, vector<4x128xf32> -> vector<4x128xf32>
    %c1_63 = arith.constant 1 : index
    %c0_64 = arith.constant 0 : index
    %c0_65 = arith.constant 0 : index
    %77 = vector.load %arg8[%c1_63, %c0_64, %c0_65] : memref<2x4x8xf32, #tpu.memory_space<vmem>>, vector<1x4x8xf32>
    %78 = vector.shape_cast %77 : vector<1x4x8xf32> to vector<4x8xf32>
    %cst_66 = arith.constant dense<0.000000e+00> : vector<4x128xf32>
    %79 = tpu.matmul %78, %73, %cst_66 {dimension_numbers = #tpu.dot_dimension_numbers<[1], [0], [0], [1], [0, 0, 1, 1], [], []>} : vector<4x8xf32>, vector<8x128xf32>, vector<4x128xf32> -> vector<4x128xf32>
    %80 = arith.maximumf %76, %79 : vector<4x128xf32>
    %c0_67 = arith.constant 0 : index
    %c0_68 = arith.constant 0 : index
    %c0_69 = arith.constant 0 : index
    %81 = vector.load %arg9[%c0_67, %c0_68, %c0_69] : memref<2x128x64xf32, #tpu.memory_space<vmem>>, vector<1x128x64xf32>
    %82 = vector.shape_cast %81 : vector<1x128x64xf32> to vector<128x64xf32>
    %cst_70 = arith.constant dense<0.000000e+00> : vector<4x64xf32>
    %83 = tpu.matmul %80, %82, %cst_70 {dimension_numbers = #tpu.dot_dimension_numbers<[1], [0], [0], [1], [0, 0, 1, 1], [], []>} : vector<4x128xf32>, vector<128x64xf32>, vector<4x64xf32> -> vector<4x64xf32>
    %c1_71 = arith.constant 1 : index
    %c0_72 = arith.constant 0 : index
    %c0_73 = arith.constant 0 : index
    %84 = vector.load %arg9[%c1_71, %c0_72, %c0_73] : memref<2x128x64xf32, #tpu.memory_space<vmem>>, vector<1x128x64xf32>
    %85 = vector.shape_cast %84 : vector<1x128x64xf32> to vector<128x64xf32>
    %cst_74 = arith.constant dense<0.000000e+00> : vector<4x64xf32>
    %86 = tpu.matmul %80, %85, %cst_74 {dimension_numbers = #tpu.dot_dimension_numbers<[1], [0], [0], [1], [0, 0, 1, 1], [], []>} : vector<4x128xf32>, vector<128x64xf32>, vector<4x64xf32> -> vector<4x64xf32>
    %87 = arith.maximumf %83, %86 : vector<4x64xf32>
    %c0_75 = arith.constant 0 : index
    %c0_76 = arith.constant 0 : index
    %88 = vector.load %arg11[%c0_75, %c0_76] : memref<1x128xf32, #tpu.memory_space<vmem>>, vector<1x128xf32>
    %89 = vector.extract_strided_slice %87 {offsets = [0, 0], sizes = [1, 64], strides = [1, 1]} : vector<4x64xf32> to vector<1x64xf32>
    %c0_77 = arith.constant 0 : index
    %c0_78 = arith.constant 0 : index
    %c0_79 = arith.constant 0 : index
    %90 = vector.load %arg10[%c0_77, %c0_78, %c0_79] : memref<4x64x128xf32, #tpu.memory_space<vmem>>, vector<1x64x128xf32>
    %91 = vector.shape_cast %90 : vector<1x64x128xf32> to vector<64x128xf32>
    %cst_80 = arith.constant dense<0.000000e+00> : vector<1x128xf32>
    %92 = tpu.matmul %89, %91, %cst_80 {dimension_numbers = #tpu.dot_dimension_numbers<[1], [0], [0], [1], [0, 0, 1, 1], [], []>} : vector<1x64xf32>, vector<64x128xf32>, vector<1x128xf32> -> vector<1x128xf32>
    %93 = arith.addf %88, %92 : vector<1x128xf32>
    %94 = vector.extract_strided_slice %87 {offsets = [1, 0], sizes = [1, 64], strides = [1, 1]} : vector<4x64xf32> to vector<1x64xf32>
    %c1_81 = arith.constant 1 : index
    %c0_82 = arith.constant 0 : index
    %c0_83 = arith.constant 0 : index
    %95 = vector.load %arg10[%c1_81, %c0_82, %c0_83] : memref<4x64x128xf32, #tpu.memory_space<vmem>>, vector<1x64x128xf32>
    %96 = vector.shape_cast %95 : vector<1x64x128xf32> to vector<64x128xf32>
    %cst_84 = arith.constant dense<0.000000e+00> : vector<1x128xf32>
    %97 = tpu.matmul %94, %96, %cst_84 {dimension_numbers = #tpu.dot_dimension_numbers<[1], [0], [0], [1], [0, 0, 1, 1], [], []>} : vector<1x64xf32>, vector<64x128xf32>, vector<1x128xf32> -> vector<1x128xf32>
    %98 = arith.addf %93, %97 : vector<1x128xf32>
    %99 = vector.extract_strided_slice %87 {offsets = [2, 0], sizes = [1, 64], strides = [1, 1]} : vector<4x64xf32> to vector<1x64xf32>
    %c2_85 = arith.constant 2 : index
    %c0_86 = arith.constant 0 : index
    %c0_87 = arith.constant 0 : index
    %100 = vector.load %arg10[%c2_85, %c0_86, %c0_87] : memref<4x64x128xf32, #tpu.memory_space<vmem>>, vector<1x64x128xf32>
    %101 = vector.shape_cast %100 : vector<1x64x128xf32> to vector<64x128xf32>
    %cst_88 = arith.constant dense<0.000000e+00> : vector<1x128xf32>
    %102 = tpu.matmul %99, %101, %cst_88 {dimension_numbers = #tpu.dot_dimension_numbers<[1], [0], [0], [1], [0, 0, 1, 1], [], []>} : vector<1x64xf32>, vector<64x128xf32>, vector<1x128xf32> -> vector<1x128xf32>
    %103 = arith.addf %98, %102 : vector<1x128xf32>
    %104 = vector.extract_strided_slice %87 {offsets = [3, 0], sizes = [1, 64], strides = [1, 1]} : vector<4x64xf32> to vector<1x64xf32>
    %c3_89 = arith.constant 3 : index
    %c0_90 = arith.constant 0 : index
    %c0_91 = arith.constant 0 : index
    %105 = vector.load %arg10[%c3_89, %c0_90, %c0_91] : memref<4x64x128xf32, #tpu.memory_space<vmem>>, vector<1x64x128xf32>
    %106 = vector.shape_cast %105 : vector<1x64x128xf32> to vector<64x128xf32>
    %cst_92 = arith.constant dense<0.000000e+00> : vector<1x128xf32>
    %107 = tpu.matmul %104, %106, %cst_92 {dimension_numbers = #tpu.dot_dimension_numbers<[1], [0], [0], [1], [0, 0, 1, 1], [], []>} : vector<1x64xf32>, vector<64x128xf32>, vector<1x128xf32> -> vector<1x128xf32>
    %108 = arith.addf %103, %107 : vector<1x128xf32>
    %cst_93 = arith.constant 0.000000e+00 : f32
    %109 = vector.broadcast %cst_93 : f32 to vector<1x128xf32>
    %110 = arith.maximumf %108, %109 : vector<1x128xf32>
    %c0_94 = arith.constant 0 : index
    %c0_95 = arith.constant 0 : index
    %111 = vector.load %arg12[%c0_94, %c0_95] : memref<128x128xf32, #tpu.memory_space<vmem>>, vector<128x128xf32>
    %cst_96 = arith.constant dense<0.000000e+00> : vector<1x128xf32>
    %112 = tpu.matmul %110, %111, %cst_96 {dimension_numbers = #tpu.dot_dimension_numbers<[1], [0], [0], [1], [0, 0, 1, 1], [], []>} : vector<1x128xf32>, vector<128x128xf32>, vector<1x128xf32> -> vector<1x128xf32>
    %c0_97 = arith.constant 0 : index
    %c0_98 = arith.constant 0 : index
    %113 = vector.load %arg13[%c0_97, %c0_98] : memref<1x128xf32, #tpu.memory_space<vmem>>, vector<1x128xf32>
    %114 = arith.addf %112, %113 : vector<1x128xf32>
    %cst_99 = arith.constant 0.000000e+00 : f32
    %115 = vector.broadcast %cst_99 : f32 to vector<1x128xf32>
    %116 = arith.maximumf %114, %115 : vector<1x128xf32>
    %c0_100 = arith.constant 0 : index
    %c0_101 = arith.constant 0 : index
    %117 = vector.load %arg14[%c0_100, %c0_101] : memref<128x128xf32, #tpu.memory_space<vmem>>, vector<128x128xf32>
    %cst_102 = arith.constant dense<0.000000e+00> : vector<1x128xf32>
    %118 = tpu.matmul %116, %117, %cst_102 {dimension_numbers = #tpu.dot_dimension_numbers<[1], [0], [0], [1], [0, 0, 1, 1], [], []>} : vector<1x128xf32>, vector<128x128xf32>, vector<1x128xf32> -> vector<1x128xf32>
    %c0_103 = arith.constant 0 : index
    %c0_104 = arith.constant 0 : index
    %119 = vector.load %arg15[%c0_103, %c0_104] : memref<1x128xf32, #tpu.memory_space<vmem>>, vector<1x128xf32>
    %120 = arith.addf %118, %119 : vector<1x128xf32>
    %cst_105 = arith.constant 0.000000e+00 : f32
    %121 = vector.broadcast %cst_105 : f32 to vector<1x128xf32>
    %122 = arith.maximumf %120, %121 : vector<1x128xf32>
    %123 = vector.shape_cast %122 : vector<1x128xf32> to vector<1x128xf32>
    %124 = vector.broadcast %123 : vector<1x128xf32> to vector<8x128xf32>
    %c0_106 = arith.constant 0 : index
    %c0_107 = arith.constant 0 : index
    %c0_108 = arith.constant 0 : index
    %125 = vector.load %arg16[%c0_106, %c0_107, %c0_108] : memref<1x8x128xf32, #tpu.memory_space<vmem>>, vector<1x8x128xf32>
    %126 = vector.shape_cast %125 : vector<1x8x128xf32> to vector<8x128xf32>
    %127 = vector.shape_cast %124 : vector<8x128xf32> to vector<1x8x128xf32>
    tpu.vector_store %arg16[%c0_106, %c0_107, %c0_108], %127 {strides = array<i32>} : memref<1x8x128xf32, #tpu.memory_space<vmem>>, vector<1x8x128xf32>,
    return
  }
  func.func @transform_0(%arg0: i32) -> (i32, i32, i32) {
    %c0_i32 = arith.constant 0 : i32
    %c0_i32_0 = arith.constant 0 : i32
    %c0_i32_1 = arith.constant 0 : i32
    return %arg0, %c0_i32, %c0_i32_0 : i32, i32, i32
  }
  func.func @transform_1(%arg0: i32) -> (i32, i32, i32) {
    %c0_i32 = arith.constant 0 : i32
    %c0_i32_0 = arith.constant 0 : i32
    %c0_i32_1 = arith.constant 0 : i32
    %c0_i32_2 = arith.constant 0 : i32
    return %c0_i32, %c0_i32_0, %c0_i32_1 : i32, i32, i32
  }
  func.func @transform_2(%arg0: i32) -> (i32, i32) {
    %c0_i32 = arith.constant 0 : i32
    %c0_i32_0 = arith.constant 0 : i32
    %c0_i32_1 = arith.constant 0 : i32
    return %c0_i32, %c0_i32_0 : i32, i32
  }
  func.func @transform_3(%arg0: i32) -> (i32, i32, i32) {
    %c0_i32 = arith.constant 0 : i32
    %c0_i32_0 = arith.constant 0 : i32
    %c0_i32_1 = arith.constant 0 : i32
    %c0_i32_2 = arith.constant 0 : i32
    return %c0_i32, %c0_i32_0, %c0_i32_1 : i32, i32, i32
  }
  func.func @transform_4(%arg0: i32) -> (i32, i32, i32) {
    %c0_i32 = arith.constant 0 : i32
    %c0_i32_0 = arith.constant 0 : i32
    %c0_i32_1 = arith.constant 0 : i32
    %c0_i32_2 = arith.constant 0 : i32
    return %c0_i32, %c0_i32_0, %c0_i32_1 : i32, i32, i32
  }
  func.func @transform_5(%arg0: i32) -> (i32, i32, i32) {
    %c0_i32 = arith.constant 0 : i32
    %c0_i32_0 = arith.constant 0 : i32
    %c0_i32_1 = arith.constant 0 : i32
    %c0_i32_2 = arith.constant 0 : i32
    return %c0_i32, %c0_i32_0, %c0_i32_1 : i32, i32, i32
  }
  func.func @transform_6(%arg0: i32) -> (i32, i32) {
    %c0_i32 = arith.constant 0 : i32
    %c0_i32_0 = arith.constant 0 : i32
    %c0_i32_1 = arith.constant 0 : i32
    return %c0_i32, %c0_i32_0 : i32, i32
  }
  func.func @transform_7(%arg0: i32) -> (i32, i32, i32) {
    %c0_i32 = arith.constant 0 : i32
    %c0_i32_0 = arith.constant 0 : i32
    %c0_i32_1 = arith.constant 0 : i32
    %c0_i32_2 = arith.constant 0 : i32
    return %c0_i32, %c0_i32_0, %c0_i32_1 : i32, i32, i32
  }
  func.func @transform_8(%arg0: i32) -> (i32, i32, i32) {
    %c0_i32 = arith.constant 0 : i32
    %c0_i32_0 = arith.constant 0 : i32
    %c0_i32_1 = arith.constant 0 : i32
    %c0_i32_2 = arith.constant 0 : i32
    return %c0_i32, %c0_i32_0, %c0_i32_1 : i32, i32, i32
  }
  func.func @transform_9(%arg0: i32) -> (i32, i32, i32) {
    %c0_i32 = arith.constant 0 : i32
    %c0_i32_0 = arith.constant 0 : i32
    %c0_i32_1 = arith.constant 0 : i32
    %c0_i32_2 = arith.constant 0 : i32
    return %c0_i32, %c0_i32_0, %c0_i32_1 : i32, i32, i32
  }
  func.func @transform_10(%arg0: i32) -> (i32, i32) {
    %c0_i32 = arith.constant 0 : i32
    %c0_i32_0 = arith.constant 0 : i32
    %c0_i32_1 = arith.constant 0 : i32
    return %c0_i32, %c0_i32_0 : i32, i32
  }
  func.func @transform_11(%arg0: i32) -> (i32, i32) {
    %c0_i32 = arith.constant 0 : i32
    %c0_i32_0 = arith.constant 0 : i32
    %c0_i32_1 = arith.constant 0 : i32
    return %c0_i32, %c0_i32_0 : i32, i32
  }
  func.func @transform_12(%arg0: i32) -> (i32, i32) {
    %c0_i32 = arith.constant 0 : i32
    %c0_i32_0 = arith.constant 0 : i32
    %c0_i32_1 = arith.constant 0 : i32
    return %c0_i32, %c0_i32_0 : i32, i32
  }
  func.func @transform_13(%arg0: i32) -> (i32, i32) {
    %c0_i32 = arith.constant 0 : i32
    %c0_i32_0 = arith.constant 0 : i32
    %c0_i32_1 = arith.constant 0 : i32
    return %c0_i32, %c0_i32_0 : i32, i32
  }
  func.func @transform_14(%arg0: i32) -> (i32, i32) {
    %c0_i32 = arith.constant 0 : i32
    %c0_i32_0 = arith.constant 0 : i32
    %c0_i32_1 = arith.constant 0 : i32
    return %c0_i32, %c0_i32_0 : i32, i32
  }
  func.func @transform_15(%arg0: i32) -> (i32, i32, i32) {
    %c0_i32 = arith.constant 0 : i32
    %c0_i32_0 = arith.constant 0 : i32
    %c0_i32_1 = arith.constant 0 : i32
    return %arg0, %c0_i32, %c0_i32_0 : i32, i32, i32
  }
}

</mosaic_0001>

<llo_original>
// kernel: lenet_forward.1
$region0: #{lenet_forward.1}
  #allocation0 [shape = 'u32[]', space=smem, size = 0x4, offset = 0x4, fixed_abs, tag = 'smem constant byte address 0x4 - core index']
  #allocation1 [shape = 'u32[144,128]{1,0:T(1,128)}', space=vmem, size = 0x12000, scoped, tag = 'internal scratch']
  %s0 = inlined_call_operand.vmem [shape: f32[2,28,28], index: 0, kind: input, shape index: {}]
  %s1 = inlined_call_operand.vmem [shape: f32[5,28,144], index: 1, kind: input, shape index: {}]
  %s2 = inlined_call_operand.vmem [shape: f32[1,144], index: 2, kind: input, shape index: {}]
  %s3 = inlined_call_operand.vmem [shape: f32[2,12,24], index: 3, kind: input, shape index: {}]
  %s4 = inlined_call_operand.hbm [shape: f32[2,144,72], index: 4, kind: input, shape index: {}]
  %s5 = inlined_call_operand.vmem [shape: f32[5,72,128], index: 5, kind: input, shape index: {}]
  %s6 = inlined_call_operand.vmem [shape: f32[1,128], index: 6, kind: input, shape index: {}]
  %s7 = inlined_call_operand.vmem [shape: f32[2,4,8], index: 7, kind: input, shape index: {}]
  %s8 = inlined_call_operand.vmem [shape: f32[2,128,64], index: 8, kind: input, shape index: {}]
  %s9 = inlined_call_operand.hbm [shape: f32[4,64,128], index: 9, kind: input, shape index: {}]
  %s10 = inlined_call_operand.vmem [shape: f32[1,128], index: 10, kind: input, shape index: {}]
  %s11 = inlined_call_operand.hbm [shape: f32[128,128], index: 11, kind: input, shape index: {}]
  %s12 = inlined_call_operand.vmem [shape: f32[1,128], index: 12, kind: input, shape index: {}]
  %s13 = inlined_call_operand.hbm [shape: f32[128,128], index: 13, kind: input, shape index: {}]
  %s14 = inlined_call_operand.vmem [shape: f32[1,128], index: 14, kind: input, shape index: {}]
  %s15 = inlined_call_operand.vmem [shape: f32[2,8,128], index: 15, kind: output, shape index: {}]
  %s16 = sld [smem:[#allocation0]]
  $region109: #{lenet_forward.1} parent=0
    _
  %s18 = ssub.s32 1, %s16
  %s19 = scalar_select 0, %s18, %s16
  $region1: #{lenet_forward.1} parent=0
    #allocation2 [shape = 'u8[147456]{0}', space=vmem, size = 0x24000, scoped, tag = 'input window, operand 4, single buffered']
    #allocation3 [shape = 's32[2]{0}', space=sflag, size = 0x8, scoped, tag = 'scoped memory for lenet_forward.1']
    #allocation4 [shape = 'u8[131072]{0}', space=vmem, size = 0x20000, scoped, tag = 'input window, operand 9, single buffered']
    #allocation5 [shape = 's32[1]{0}', space=sflag, size = 0x4, scoped, tag = 'scoped memory for lenet_forward.1']
    #allocation6 [shape = 'u8[65536]{0}', space=vmem, size = 0x10000, scoped, tag = 'input window, operand 11, single buffered']
    #allocation7 [shape = 'u8[65536]{0}', space=vmem, size = 0x10000, scoped, tag = 'input window, operand 13, single buffered']
    #allocation8 [shape = 's32[1]{0}', space=sflag, size = 0x4, scoped, tag = 'scoped memory for lenet_forward.1']
    %20 = vsyncpa [#allocation3], 0
    %21 = vsyncpa [#allocation5], 0
    %22 = vsyncpa [#allocation8], 0
    loop: start=0, step=1, limit=4
    $region2: #{lenet_forward.1} parent=1 // loop_pre_header
      _
    $region3: #{lenet_forward.1} parent=1 // loop_header
      %s24 = sphi 0, %s28
      %p25 = scmp.ge.s32.totalorder %s24, 4
      %s34 = sphi 0, %s36
      %s37 = sphi 0, %s34
      %s38 = sphi 0, %s37
      %s54 = sphi 0, %s38
      %s58 = sphi 0, %s58
      %s60 = sphi 0, %s58
      %s61 = sphi 0, %s60
      %s75 = sphi 0, %s61
      %s79 = sphi 0, %s79
      %s81 = sphi 0, %s79
      %s82 = sphi 0, %s81
      %s96 = sphi 0, %s82
      %s100 = sphi 0, %s100
      %s102 = sphi 0, %s100
      %s103 = sphi 0, %s102
      %s117 = sphi 0, %s103
      %s121 = sphi 0, %s121
      %s123 = sphi 0, %s121
      %s124 = sphi 0, %s123
      %s138 = sphi 0, %s124
      %s142 = sphi 0, %s142
      %s144 = sphi 0, %s142
      %s145 = sphi 0, %s144
      %s159 = sphi 0, %s145
      %s163 = sphi 0, %s163
      %s165 = sphi 0, %s163
      %s166 = sphi 0, %s165
      %s180 = sphi 0, %s166
      %s184 = sphi 0, %s184
      %s186 = sphi 0, %s184
      %s187 = sphi 0, %s186
      %s201 = sphi 0, %s187
      %s205 = sphi 0, %s205
      %s207 = sphi 0, %s205
      %s208 = sphi 0, %s207
      %s222 = sphi 0, %s208
      %s226 = sphi 0, %s226
      %s228 = sphi 0, %s226
      %s229 = sphi 0, %s228
      %s243 = sphi 0, %s229
      %s247 = sphi 0, %s247
      %s249 = sphi 0, %s247
      %s250 = sphi 0, %s249
      %s264 = sphi 0, %s250
      %s268 = sphi 0, %s268
      %s270 = sphi 0, %s268
      %s271 = sphi 0, %s270
      %s285 = sphi 0, %s271
      %s289 = sphi 0, %s289
      %s291 = sphi 0, %s289
      %s292 = sphi 0, %s291
      %s306 = sphi 0, %s292
      %s310 = sphi 0, %s310
      %s312 = sphi 0, %s310
      %s313 = sphi 0, %s312
      %s327 = sphi 0, %s313
      %s331 = sphi 0, %s331
      %s333 = sphi 0, %s331
      %s334 = sphi 0, %s333
      %s348 = sphi 0, %s334
      %s354 = sphi 0, %s356
      %s357 = sphi 0, %s354
      %s358 = sphi 0, %s357
      %s374 = sphi 0, %s358
    $region4: #{lenet_forward.1} parent=1 // loop_header_branch
      %27 = sbr.rel (%p25) target = $region8
    $region5: #{lenet_forward.1} parent=1 // loop_body
      %s29 = ssub.s32 %s24, 1
      %s30 = ssub.s32 %s24, 2
      %s31 = sadd.s32 %s24, 1
      %s32 = ssub.s32 %s24, %s31
      %p33 = scmp.eq.s32.totalorder %s32, 0
      %s35 = sadd.s32 %s34, 1
      %s36 = scalar_select %p33, %s34, %s35
      %p39 = pneg %p33
      %p40 = scmp.eq.s32.totalorder %s24, 1
      %p41 = por %p39, %p40
      %p42 = scmp.ne.s32.totalorder %s34, %s37
      %p43 = scmp.eq.s32.totalorder %s24, 0
      %p44 = por %p42, %p43
      %p45 = scmp.ne.s32.totalorder %s34, %s37
      %p46 = scmp.eq.s32.totalorder %s29, 1
      %p47 = por %p45, %p46
      %p48 = scmp.ne.s32.totalorder %s37, %s38
      %p49 = scmp.eq.s32.totalorder %s29, 0
      %p50 = por %p48, %p49
      %p51 = scmp.ne.s32.totalorder %s37, %s38
      %p52 = scmp.eq.s32.totalorder %s30, 1
      %p53 = por %p51, %p52
      %p55 = scmp.ne.s32.totalorder %s38, %s54
      %p56 = scmp.eq.s32.totalorder %s30, 0
      %p57 = por %p55, %p56
      %s59 = sadd.s32 %s58, 1
      %p62 = scmp.eq.s32.totalorder %s24, 1
      %p63 = scmp.ne.s32.totalorder %s58, %s60
      %p64 = scmp.eq.s32.totalorder %s24, 0
      %p65 = por %p63, %p64
      %p66 = scmp.ne.s32.totalorder %s58, %s60
      %p67 = scmp.eq.s32.totalorder %s29, 1
      %p68 = por %p66, %p67
      %p69 = scmp.ne.s32.totalorder %s60, %s61
      %p70 = scmp.eq.s32.totalorder %s29, 0
      %p71 = por %p69, %p70
      %p72 = scmp.ne.s32.totalorder %s60, %s61
      %p73 = scmp.eq.s32.totalorder %s30, 1
      %p74 = por %p72, %p73
      %p76 = scmp.ne.s32.totalorder %s61, %s75
      %p77 = scmp.eq.s32.totalorder %s30, 0
      %p78 = por %p76, %p77
      %s80 = sadd.s32 %s79, 1
      %p83 = scmp.eq.s32.totalorder %s24, 1
      %p84 = scmp.ne.s32.totalorder %s79, %s81
      %p85 = scmp.eq.s32.totalorder %s24, 0
      %p86 = por %p84, %p85
      %p87 = scmp.ne.s32.totalorder %s79, %s81
      %p88 = scmp.eq.s32.totalorder %s29, 1
      %p89 = por %p87, %p88
      %p90 = scmp.ne.s32.totalorder %s81, %s82
      %p91 = scmp.eq.s32.totalorder %s29, 0
      %p92 = por %p90, %p91
      %p93 = scmp.ne.s32.totalorder %s81, %s82
      %p94 = scmp.eq.s32.totalorder %s30, 1
      %p95 = por %p93, %p94
      %p97 = scmp.ne.s32.totalorder %s82, %s96
      %p98 = scmp.eq.s32.totalorder %s30, 0
      %p99 = por %p97, %p98
      %s101 = sadd.s32 %s100, 1
      %p104 = scmp.eq.s32.totalorder %s24, 1
      %p105 = scmp.ne.s32.totalorder %s100, %s102
      %p106 = scmp.eq.s32.totalorder %s24, 0
      %p107 = por %p105, %p106
      %p108 = scmp.ne.s32.totalorder %s100, %s102
      %p109 = scmp.eq.s32.totalorder %s29, 1
      %p110 = por %p108, %p109
      %p111 = scmp.ne.s32.totalorder %s102, %s103
      %p112 = scmp.eq.s32.totalorder %s29, 0
      %p113 = por %p111, %p112
      %p114 = scmp.ne.s32.totalorder %s102, %s103
      %p115 = scmp.eq.s32.totalorder %s30, 1
      %p116 = por %p114, %p115
      %p118 = scmp.ne.s32.totalorder %s103, %s117
      %p119 = scmp.eq.s32.totalorder %s30, 0
      %p120 = por %p118, %p119
      %s122 = sadd.s32 %s121, 1
      %p125 = scmp.eq.s32.totalorder %s24, 1
      %p126 = scmp.ne.s32.totalorder %s121, %s123
      %p127 = scmp.eq.s32.totalorder %s24, 0
      %p128 = por %p126, %p127
      %p129 = scmp.ne.s32.totalorder %s121, %s123
      %p130 = scmp.eq.s32.totalorder %s29, 1
      %p131 = por %p129, %p130
      %p132 = scmp.ne.s32.totalorder %s123, %s124
      %p133 = scmp.eq.s32.totalorder %s29, 0
      %p134 = por %p132, %p133
      %p135 = scmp.ne.s32.totalorder %s123, %s124
      %p136 = scmp.eq.s32.totalorder %s30, 1
      %p137 = por %p135, %p136
      %p139 = scmp.ne.s32.totalorder %s124, %s138
      %p140 = scmp.eq.s32.totalorder %s30, 0
      %p141 = por %p139, %p140
      %s143 = sadd.s32 %s142, 1
      %p146 = scmp.eq.s32.totalorder %s24, 1
      %p147 = scmp.ne.s32.totalorder %s142, %s144
      %p148 = scmp.eq.s32.totalorder %s24, 0
      %p149 = por %p147, %p148
      %p150 = scmp.ne.s32.totalorder %s142, %s144
      %p151 = scmp.eq.s32.totalorder %s29, 1
      %p152 = por %p150, %p151
      %p153 = scmp.ne.s32.totalorder %s144, %s145
      %p154 = scmp.eq.s32.totalorder %s29, 0
      %p155 = por %p153, %p154
      %p156 = scmp.ne.s32.totalorder %s144, %s145
      %p157 = scmp.eq.s32.totalorder %s30, 1
      %p158 = por %p156, %p157
      %p160 = scmp.ne.s32.totalorder %s145, %s159
      %p161 = scmp.eq.s32.totalorder %s30, 0
      %p162 = por %p160, %p161
      %s164 = sadd.s32 %s163, 1
      %p167 = scmp.eq.s32.totalorder %s24, 1
      %p168 = scmp.ne.s32.totalorder %s163, %s165
      %p169 = scmp.eq.s32.totalorder %s24, 0
      %p170 = por %p168, %p169
      %p171 = scmp.ne.s32.totalorder %s163, %s165
      %p172 = scmp.eq.s32.totalorder %s29, 1
      %p173 = por %p171, %p172
      %p174 = scmp.ne.s32.totalorder %s165, %s166
      %p175 = scmp.eq.s32.totalorder %s29, 0
      %p176 = por %p174, %p175
      %p177 = scmp.ne.s32.totalorder %s165, %s166
      %p178 = scmp.eq.s32.totalorder %s30, 1
      %p179 = por %p177, %p178
      %p181 = scmp.ne.s32.totalorder %s166, %s180
      %p182 = scmp.eq.s32.totalorder %s30, 0
      %p183 = por %p181, %p182
      %s185 = sadd.s32 %s184, 1
      %p188 = scmp.eq.s32.totalorder %s24, 1
      %p189 = scmp.ne.s32.totalorder %s184, %s186
      %p190 = scmp.eq.s32.totalorder %s24, 0
      %p191 = por %p189, %p190
      %p192 = scmp.ne.s32.totalorder %s184, %s186
      %p193 = scmp.eq.s32.totalorder %s29, 1
      %p194 = por %p192, %p193
      %p195 = scmp.ne.s32.totalorder %s186, %s187
      %p196 = scmp.eq.s32.totalorder %s29, 0
      %p197 = por %p195, %p196
      %p198 = scmp.ne.s32.totalorder %s186, %s187
      %p199 = scmp.eq.s32.totalorder %s30, 1
      %p200 = por %p198, %p199
      %p202 = scmp.ne.s32.totalorder %s187, %s201
      %p203 = scmp.eq.s32.totalorder %s30, 0
      %p204 = por %p202, %p203
      %s206 = sadd.s32 %s205, 1
      %p209 = scmp.eq.s32.totalorder %s24, 1
      %p210 = scmp.ne.s32.totalorder %s205, %s207
      %p211 = scmp.eq.s32.totalorder %s24, 0
      %p212 = por %p210, %p211
      %p213 = scmp.ne.s32.totalorder %s205, %s207
      %p214 = scmp.eq.s32.totalorder %s29, 1
      %p215 = por %p213, %p214
      %p216 = scmp.ne.s32.totalorder %s207, %s208
      %p217 = scmp.eq.s32.totalorder %s29, 0
      %p218 = por %p216, %p217
      %p219 = scmp.ne.s32.totalorder %s207, %s208
      %p220 = scmp.eq.s32.totalorder %s30, 1
      %p221 = por %p219, %p220
      %p223 = scmp.ne.s32.totalorder %s208, %s222
      %p224 = scmp.eq.s32.totalorder %s30, 0
      %p225 = por %p223, %p224
      %s227 = sadd.s32 %s226, 1
      %p230 = scmp.eq.s32.totalorder %s24, 1
      %p231 = scmp.ne.s32.totalorder %s226, %s228
      %p232 = scmp.eq.s32.totalorder %s24, 0
      %p233 = por %p231, %p232
      %p234 = scmp.ne.s32.totalorder %s226, %s228
      %p235 = scmp.eq.s32.totalorder %s29, 1
      %p236 = por %p234, %p235
      %p237 = scmp.ne.s32.totalorder %s228, %s229
      %p238 = scmp.eq.s32.totalorder %s29, 0
      %p239 = por %p237, %p238
      %p240 = scmp.ne.s32.totalorder %s228, %s229
      %p241 = scmp.eq.s32.totalorder %s30, 1
      %p242 = por %p240, %p241
      %p244 = scmp.ne.s32.totalorder %s229, %s243
      %p245 = scmp.eq.s32.totalorder %s30, 0
      %p246 = por %p244, %p245
      %s248 = sadd.s32 %s247, 1
      %p251 = scmp.eq.s32.totalorder %s24, 1
      %p252 = scmp.ne.s32.totalorder %s247, %s249
      %p253 = scmp.eq.s32.totalorder %s24, 0
      %p254 = por %p252, %p253
      %p255 = scmp.ne.s32.totalorder %s247, %s249
      %p256 = scmp.eq.s32.totalorder %s29, 1
      %p257 = por %p255, %p256
      %p258 = scmp.ne.s32.totalorder %s249, %s250
      %p259 = scmp.eq.s32.totalorder %s29, 0
      %p260 = por %p258, %p259
      %p261 = scmp.ne.s32.totalorder %s249, %s250
      %p262 = scmp.eq.s32.totalorder %s30, 1
      %p263 = por %p261, %p262
      %p265 = scmp.ne.s32.totalorder %s250, %s264
      %p266 = scmp.eq.s32.totalorder %s30, 0
      %p267 = por %p265, %p266
      %s269 = sadd.s32 %s268, 1
      %p272 = scmp.eq.s32.totalorder %s24, 1
      %p273 = scmp.ne.s32.totalorder %s268, %s270
      %p274 = scmp.eq.s32.totalorder %s24, 0
      %p275 = por %p273, %p274
      %p276 = scmp.ne.s32.totalorder %s268, %s270
      %p277 = scmp.eq.s32.totalorder %s29, 1
      %p278 = por %p276, %p277
      %p279 = scmp.ne.s32.totalorder %s270, %s271
      %p280 = scmp.eq.s32.totalorder %s29, 0
      %p281 = por %p279, %p280
      %p282 = scmp.ne.s32.totalorder %s270, %s271
      %p283 = scmp.eq.s32.totalorder %s30, 1
      %p284 = por %p282, %p283
      %p286 = scmp.ne.s32.totalorder %s271, %s285
      %p287 = scmp.eq.s32.totalorder %s30, 0
      %p288 = por %p286, %p287
      %s290 = sadd.s32 %s289, 1
      %p293 = scmp.eq.s32.totalorder %s24, 1
      %p294 = scmp.ne.s32.totalorder %s289, %s291
      %p295 = scmp.eq.s32.totalorder %s24, 0
      %p296 = por %p294, %p295
      %p297 = scmp.ne.s32.totalorder %s289, %s291
      %p298 = scmp.eq.s32.totalorder %s29, 1
      %p299 = por %p297, %p298
      %p300 = scmp.ne.s32.totalorder %s291, %s292
      %p301 = scmp.eq.s32.totalorder %s29, 0
      %p302 = por %p300, %p301
      %p303 = scmp.ne.s32.totalorder %s291, %s292
      %p304 = scmp.eq.s32.totalorder %s30, 1
      %p305 = por %p303, %p304
      %p307 = scmp.ne.s32.totalorder %s292, %s306
      %p308 = scmp.eq.s32.totalorder %s30, 0
      %p309 = por %p307, %p308
      %s311 = sadd.s32 %s310, 1
      %p314 = scmp.eq.s32.totalorder %s24, 1
      %p315 = scmp.ne.s32.totalorder %s310, %s312
      %p316 = scmp.eq.s32.totalorder %s24, 0
      %p317 = por %p315, %p316
      %p318 = scmp.ne.s32.totalorder %s310, %s312
      %p319 = scmp.eq.s32.totalorder %s29, 1
      %p320 = por %p318, %p319
      %p321 = scmp.ne.s32.totalorder %s312, %s313
      %p322 = scmp.eq.s32.totalorder %s29, 0
      %p323 = por %p321, %p322
      %p324 = scmp.ne.s32.totalorder %s312, %s313
      %p325 = scmp.eq.s32.totalorder %s30, 1
      %p326 = por %p324, %p325
      %p328 = scmp.ne.s32.totalorder %s313, %s327
      %p329 = scmp.eq.s32.totalorder %s30, 0
      %p330 = por %p328, %p329
      %s332 = sadd.s32 %s331, 1
      %p335 = scmp.eq.s32.totalorder %s24, 1
      %p336 = scmp.ne.s32.totalorder %s331, %s333
      %p337 = scmp.eq.s32.totalorder %s24, 0
      %p338 = por %p336, %p337
      %p339 = scmp.ne.s32.totalorder %s331, %s333
      %p340 = scmp.eq.s32.totalorder %s29, 1
      %p341 = por %p339, %p340
      %p342 = scmp.ne.s32.totalorder %s333, %s334
      %p343 = scmp.eq.s32.totalorder %s29, 0
      %p344 = por %p342, %p343
      %p345 = scmp.ne.s32.totalorder %s333, %s334
      %p346 = scmp.eq.s32.totalorder %s30, 1
      %p347 = por %p345, %p346
      %p349 = scmp.ne.s32.totalorder %s334, %s348
      %p350 = scmp.eq.s32.totalorder %s30, 0
      %p351 = por %p349, %p350
      %s352 = ssub.s32 %s24, %s31
      %p353 = scmp.eq.s32.totalorder %s352, 0
      %s355 = sadd.s32 %s354, 1
      %s356 = scalar_select %p353, %s354, %s355
      %p359 = pneg %p353
      %p360 = scmp.eq.s32.totalorder %s24, 1
      %p361 = por %p359, %p360
      %p362 = scmp.ne.s32.totalorder %s354, %s357
      %p363 = scmp.eq.s32.totalorder %s24, 0
      %p364 = por %p362, %p363
      %p365 = scmp.ne.s32.totalorder %s354, %s357
      %p366 = scmp.eq.s32.totalorder %s29, 1
      %p367 = por %p365, %p366
      %p368 = scmp.ne.s32.totalorder %s357, %s358
      %p369 = scmp.eq.s32.totalorder %s29, 0
      %p370 = por %p368, %p369
      %p371 = scmp.ne.s32.totalorder %s357, %s358
      %p372 = scmp.eq.s32.totalorder %s30, 1
      %p373 = por %p371, %p372
      %p375 = scmp.ne.s32.totalorder %s358, %s374
      %p376 = scmp.eq.s32.totalorder %s30, 0
      %p377 = por %p375, %p376
      %p378 = scmp.le.s32.totalorder 1, %s24
      %p379 = scmp.lt.s32.totalorder %s24, 3
      %p380 = pnand %p378, %p379
      %p381 = pneg %p380
      // Predicated region
      $region9: #{lenet_forward.1} parent=5 // pred_check
        _
      $region10: #{lenet_forward.1} parent=5 // pred_check_branch
        %383 = sbr.rel (%p380) target = $region12
      $region11: #{lenet_forward.1} parent=5 // pred_region
        %s384 = ssub.s32 %s24, 1
        // Predicated region
        $region13: #{lenet_forward.1} parent=11 // pred_check
          %p385 = pneg %p71
        $region14: #{lenet_forward.1} parent=11 // pred_check_branch
          %387 = sbr.rel (%p385) target = $region16
        $region15: #{lenet_forward.1} parent=11 // pred_region
          _
        $region16: #{lenet_forward.1} parent=11 // pred_fallthru
          _
        // Predicated region
        $region17: #{lenet_forward.1} parent=11 // pred_check
          %p388 = pneg %p92
        $region18: #{lenet_forward.1} parent=11 // pred_check_branch
          %390 = sbr.rel (%p388) target = $region20
        $region19: #{lenet_forward.1} parent=11 // pred_region
          _
        $region20: #{lenet_forward.1} parent=11 // pred_fallthru
          _
        // Predicated region
        $region21: #{lenet_forward.1} parent=11 // pred_check
          %p391 = pneg %p113
        $region22: #{lenet_forward.1} parent=11 // pred_check_branch
          %393 = sbr.rel (%p391) target = $region24
        $region23: #{lenet_forward.1} parent=11 // pred_region
          _
        $region24: #{lenet_forward.1} parent=11 // pred_fallthru
          _
        // Predicated region
        $region25: #{lenet_forward.1} parent=11 // pred_check
          %p394 = pneg %p134
        $region26: #{lenet_forward.1} parent=11 // pred_check_branch
          %396 = sbr.rel (%p394) target = $region28
        $region27: #{lenet_forward.1} parent=11 // pred_region
          %s398 = ssub.s32 4608, 4608
          %399 = vsyncadd [#allocation3], %s398
          %s400 = sshll.u32 [#allocation2], 4
          %s401 = int_to_ptr.vmem [resolvable:$true] %s400
          %406 = dma.hbm_to_vmem [thread:$0]  %s4, 4608, %s401, [#allocation3], 128, 128, 8
        $region28: #{lenet_forward.1} parent=11 // pred_fallthru
          _
        // Predicated region
        $region29: #{lenet_forward.1} parent=11 // pred_check
          %p407 = pneg %p155
        $region30: #{lenet_forward.1} parent=11 // pred_check_branch
          %409 = sbr.rel (%p407) target = $region32
        $region31: #{lenet_forward.1} parent=11 // pred_region
          _
        $region32: #{lenet_forward.1} parent=11 // pred_fallthru
          _
        // Predicated region
        $region33: #{lenet_forward.1} parent=11 // pred_check
          %p410 = pneg %p176
        $region34: #{lenet_forward.1} parent=11 // pred_check_branch
          %412 = sbr.rel (%p410) target = $region36
        $region35: #{lenet_forward.1} parent=11 // pred_region
          _
        $region36: #{lenet_forward.1} parent=11 // pred_fallthru
          _
        // Predicated region
        $region37: #{lenet_forward.1} parent=11 // pred_check
          %p413 = pneg %p197
        $region38: #{lenet_forward.1} parent=11 // pred_check_branch
          %415 = sbr.rel (%p413) target = $region40
        $region39: #{lenet_forward.1} parent=11 // pred_region
          _
        $region40: #{lenet_forward.1} parent=11 // pred_fallthru
          _
        // Predicated region
        $region41: #{lenet_forward.1} parent=11 // pred_check
          %p416 = pneg %p218
        $region42: #{lenet_forward.1} parent=11 // pred_check_branch
          %418 = sbr.rel (%p416) target = $region44
        $region43: #{lenet_forward.1} parent=11 // pred_region
          _
        $region44: #{lenet_forward.1} parent=11 // pred_fallthru
          _
        // Predicated region
        $region45: #{lenet_forward.1} parent=11 // pred_check
          %p419 = pneg %p239
        $region46: #{lenet_forward.1} parent=11 // pred_check_branch
          %421 = sbr.rel (%p419) target = $region48
        $region47: #{lenet_forward.1} parent=11 // pred_region
          %s423 = ssub.s32 4096, 4096
          %424 = vsyncadd [#allocation5], %s423
          %s425 = sshll.u32 [#allocation4], 4
          %s426 = int_to_ptr.vmem [resolvable:$true] %s425
          %431 = dma.hbm_to_vmem [thread:$0]  %s9, 4096, %s426, [#allocation5], 128, 128, 8
        $region48: #{lenet_forward.1} parent=11 // pred_fallthru
          _
        // Predicated region
        $region49: #{lenet_forward.1} parent=11 // pred_check
          %p432 = pneg %p260
        $region50: #{lenet_forward.1} parent=11 // pred_check_branch
          %434 = sbr.rel (%p432) target = $region52
        $region51: #{lenet_forward.1} parent=11 // pred_region
          _
        $region52: #{lenet_forward.1} parent=11 // pred_fallthru
          _
        // Predicated region
        $region53: #{lenet_forward.1} parent=11 // pred_check
          %p435 = pneg %p281
        $region54: #{lenet_forward.1} parent=11 // pred_check_branch
          %437 = sbr.rel (%p435) target = $region56
        $region55: #{lenet_forward.1} parent=11 // pred_region
          %s439 = ssub.s32 2048, 2048
          %440 = vsyncadd [#allocation5], %s439
          %s441 = sshll.u32 [#allocation6], 4
          %s442 = int_to_ptr.vmem [resolvable:$true] %s441
          %447 = dma.hbm_to_vmem [thread:$0]  %s11, 2048, %s442, [#allocation5], 128, 128, 8
        $region56: #{lenet_forward.1} parent=11 // pred_fallthru
          _
        // Predicated region
        $region57: #{lenet_forward.1} parent=11 // pred_check
          %p448 = pneg %p302
        $region58: #{lenet_forward.1} parent=11 // pred_check_branch
          %450 = sbr.rel (%p448) target = $region60
        $region59: #{lenet_forward.1} parent=11 // pred_region
          _
        $region60: #{lenet_forward.1} parent=11 // pred_fallthru
          _
        // Predicated region
        $region61: #{lenet_forward.1} parent=11 // pred_check
          %p451 = pneg %p323
        $region62: #{lenet_forward.1} parent=11 // pred_check_branch
          %453 = sbr.rel (%p451) target = $region64
        $region63: #{lenet_forward.1} parent=11 // pred_region
          %s455 = ssub.s32 2048, 2048
          %456 = vsyncadd [#allocation8], %s455
          %s457 = sshll.u32 [#allocation7], 4
          %s458 = int_to_ptr.vmem [resolvable:$true] %s457
          %463 = dma.hbm_to_vmem [thread:$0]  %s13, 2048, %s458, [#allocation8], 128, 128, 8
        $region64: #{lenet_forward.1} parent=11 // pred_fallthru
          _
        // Predicated region
        $region65: #{lenet_forward.1} parent=11 // pred_check
          %p464 = pneg %p344
        $region66: #{lenet_forward.1} parent=11 // pred_check_branch
          %466 = sbr.rel (%p464) target = $region68
        $region67: #{lenet_forward.1} parent=11 // pred_region
          _
        $region68: #{lenet_forward.1} parent=11 // pred_fallthru
          _
      $region12: #{lenet_forward.1} parent=5 // pred_fallthru
        _
      %p467 = scmp.lt.s32.totalorder %s24, 2
      // Predicated region
      $region69: #{lenet_forward.1} parent=5 // pred_check
        %p468 = pneg %p467
      $region70: #{lenet_forward.1} parent=5 // pred_check_branch
        %470 = sbr.rel (%p468) target = $region72
      $region71: #{lenet_forward.1} parent=5 // pred_region
        // Predicated region
        $region73: #{lenet_forward.1} parent=71 // pred_check
          %p471 = pneg %p44
        $region74: #{lenet_forward.1} parent=71 // pred_check_branch
          %473 = sbr.rel (%p471) target = $region76
        $region75: #{lenet_forward.1} parent=71 // pred_region
          %p474 = scmp.lt.s32.totalorder %s24, 1
          %s475 = scalar_select %p474, %s24, 1
          %s476 = smul.addr %s475, 4
          %s477 = smul.addr %s476, 8
          %s478 = scalar_lea.vmem %s0, %s477
        $region76: #{lenet_forward.1} parent=71 // pred_fallthru
          _
      $region72: #{lenet_forward.1} parent=5 // pred_fallthru
        _
      %p479 = scmp.le.s32.totalorder 1, %s24
      %p480 = scmp.lt.s32.totalorder %s24, 3
      %p481 = pnand %p479, %p480
      %p482 = pneg %p481
      // Predicated region
      $region77: #{lenet_forward.1} parent=5 // pred_check
        _
      $region78: #{lenet_forward.1} parent=5 // pred_check_branch
        %484 = sbr.rel (%p481) target = $region80
      $region79: #{lenet_forward.1} parent=5 // pred_region
        %s485 = ssub.s32 %s24, 1
        // Predicated region
        $region81: #{lenet_forward.1} parent=79 // pred_check
          %p486 = pneg %p134
        $region82: #{lenet_forward.1} parent=79 // pred_check_branch
          %488 = sbr.rel (%p486) target = $region84
        $region83: #{lenet_forward.1} parent=79 // pred_region
          %489 = dma.done [#allocation3], 4608
        $region84: #{lenet_forward.1} parent=79 // pred_fallthru
          _
        // Predicated region
        $region85: #{lenet_forward.1} parent=79 // pred_check
          %p490 = pneg %p239
        $region86: #{lenet_forward.1} parent=79 // pred_check_branch
          %492 = sbr.rel (%p490) target = $region88
        $region87: #{lenet_forward.1} parent=79 // pred_region
          %493 = dma.done [#allocation5], 4096
        $region88: #{lenet_forward.1} parent=79 // pred_fallthru
          _
        // Predicated region
        $region89: #{lenet_forward.1} parent=79 // pred_check
          %p494 = pneg %p281
        $region90: #{lenet_forward.1} parent=79 // pred_check_branch
          %496 = sbr.rel (%p494) target = $region92
        $region91: #{lenet_forward.1} parent=79 // pred_region
          %497 = dma.done [#allocation5], 2048
        $region92: #{lenet_forward.1} parent=79 // pred_fallthru
          _
        // Predicated region
        $region93: #{lenet_forward.1} parent=79 // pred_check
          %p498 = pneg %p323
        $region94: #{lenet_forward.1} parent=79 // pred_check_branch
          %500 = sbr.rel (%p498) target = $region96
        $region95: #{lenet_forward.1} parent=79 // pred_region
          %501 = dma.done [#allocation8], 2048
        $region96: #{lenet_forward.1} parent=79 // pred_fallthru
          _
        %p502 = scmp.lt.s32.totalorder %s29, 1
        %s503 = scalar_select %p502, %s29, 1
        %s504 = smul.addr %s503, 4
        %s505 = smul.addr %s504, 8
        %s506 = scalar_lea.vmem %s0, %s505
        %p507 = pneg %p50
        %p508 = pneg %p47
        %p509 = pneg %p71
        %p510 = pneg %p68
        %p511 = pneg %p92
        %p512 = pneg %p89
        %p513 = pneg %p113
        %p514 = pneg %p110
        %p515 = pneg %p134
        %p516 = pneg %p131
        %p517 = pneg %p155
        %p518 = pneg %p152
        %p519 = pneg %p176
        %p520 = pneg %p173
        %p521 = pneg %p197
        %p522 = pneg %p194
        %p523 = pneg %p218
        %p524 = pneg %p215
        %p525 = pneg %p239
        %p526 = pneg %p236
        %p527 = pneg %p260
        %p528 = pneg %p257
        %p529 = pneg %p281
        %p530 = pneg %p278
        %p531 = pneg %p302
        %p532 = pneg %p299
        %p533 = pneg %p323
        %p534 = pneg %p320
        %p535 = pneg %p344
        %p536 = pneg %p341
        %p537 = pneg %p370
        %p538 = pneg %p367
        %p539 = scmp.lt.s32.totalorder %s29, 1
        %s540 = scalar_select %p539, %s29, 1
        %s541 = smul.addr %s540, 8
        %s542 = scalar_lea.vmem %s15, %s541
        %p543 = scmp.lt.s32.totalorder %s29, 1
        %s544 = scalar_select %p543, %s29, 1
        %s545 = smul.addr %s544, 4
        %s546 = smul.addr %s545, 8
        %s547 = scalar_lea.vmem %s0, %s546
        %p548 = scmp.lt.s32.totalorder %s29, 1
        %s549 = scalar_select %p548, %s29, 1
        %s550 = smul.addr %s549, 8
        %s551 = scalar_lea.vmem %s15, %s550
        %v552 = vld [vmem:[%s547] sm:$0xff]
        %v553 = vld [vmem:[%s547 + $0x8] sm:$0xff]
        %v554 = vld [vmem:[%s547 + $0x10] sm:$0xff]
        %v555 = vld [vmem:[%s547 + $0x18] sm:$0xf]
        %v556 = vld [vmem:[%s1] sm:$0xff]
        %v557 = vld [vmem:[%s1 + $0x8] sm:$0xff]
        %v558 = vld [vmem:[%s1 + $0x10] sm:$0xff]
        %v559 = vld [vmem:[%s1 + $0x18] sm:$0xff]
        %v560 = vld [vmem:[%s1 + $0x20] sm:$0xff]
        %v561 = vld [vmem:[%s1 + $0x28] sm:$0xff]
        %v562 = vld [vmem:[%s1 + $0x30] sm:$0xf]
        %v563 = vld [vmem:[%s1 + $0x38] sm:$0xf]
        %s564 = scalar_lea.vmem %s1, 64
        %v565 = vld [vmem:[%s564] sm:$0xff]
        %v566 = vld [vmem:[%s564 + $0x8] sm:$0xff]
        %v567 = vld [vmem:[%s564 + $0x10] sm:$0xff]
        %v568 = vld [vmem:[%s564 + $0x18] sm:$0xff]
        %v569 = vld [vmem:[%s564 + $0x20] sm:$0xff]
        %v570 = vld [vmem:[%s564 + $0x28] sm:$0xff]
        %v571 = vld [vmem:[%s564 + $0x30] sm:$0xf]
        %v572 = vld [vmem:[%s564 + $0x38] sm:$0xf]
        %vm577 = vcmask 1046528
        %v578 = vrot.slane %v552, 1
        %v579 = vrot.slane %v553, 1
        %v580 = vsel %vm577, %v578, %v579
        %v581 = vrot.slane %v554, 1
        %v582 = vsel %vm577, %v579, %v581
        %v583 = vrot.slane %v555, 1
        %v584 = vsel %vm577, %v581, %v583
        %vm585 = vcmask 228352
        %v586 = vsel %vm585, %v580, 0
        %v588 = vsel %vm585, %v582, 0
        %v590 = vsel %vm585, %v584, 0
        %vm592 = vcmask 1043456
        %v594 = vsel %vm592, %v571, 0
        %v597 = vsel %vm592, %v572, 0
        %599 = vmatprep.subr.mxu0 %v566
        %600 = vmatpush1.msra.mxu0 %v565
        %601 = vmatprep.subr.mxu0 %v568
        %602 = vmatpush1.msra.mxu0 %v567
        %603 = vmatprep.subr.mxu0 %v570
        %604 = vmatpush1.msra.mxu0 %v569
        %605 = vmatprep.subr.mxu0 %v597
        %606 = vmatpush1.msra.mxu0 %v594
        %607 = vmatprep.subr.mxu0 0.0
        %608 = vmatpush1.msra.mxu0 0.0
        %609 = vmatprep.subr.mxu0 0.0
        %610 = vmatpush1.msra.mxu0 0.0
        %611 = vmatprep.subr.mxu0 0.0
        %612 = vmatpush1.msra.mxu0 0.0
        %613 = vmatprep.subr.mxu0 0.0
        %614 = vmatpush1.msra.mxu0 0.0
        %615 = vmatprep.subr.mxu0 0.0
        %616 = vmatpush1.msra.mxu0 0.0
        %617 = vmatprep.subr.mxu0 0.0
        %618 = vmatpush1.msra.mxu0 0.0
        %619 = vmatprep.subr.mxu0 0.0
        %620 = vmatpush1.msra.mxu0 0.0
        %621 = vmatprep.subr.mxu0 0.0
        %622 = vmatpush1.msra.mxu0 0.0
        %623 = vmatprep.subr.mxu0 0.0
        %624 = vmatpush1.msra.mxu0 0.0
        %625 = vmatprep.subr.mxu0 0.0
        %626 = vmatpush1.msra.mxu0 0.0
        %627 = vmatprep.subr.mxu0 0.0
        %628 = vmatpush1.msra.mxu0 0.0
        %629 = vmatprep.subr.mxu0 0.0
        %630 = vmatpush1.msra.mxu0 0.0
        %631 = vmatprep.subr.mxu0 0.0
        %632 = vmatpush1.msra.mxu0 0.0
        %633 = vmatprep.subr.mxu0 0.0
        %634 = vmatpush1.msra.mxu0 0.0
        %635 = vmatprep.subr.mxu0 0.0
        %636 = vmatpush1.msra.mxu0 0.0
        %637 = vmatprep.subr.mxu0 0.0
        %638 = vmatpush1.msra.mxu0 0.0
        %639 = vmatprep.subr.mxu0 0.0
        %640 = vmatpush1.msra.mxu0 0.0
        %641 = vmatprep.subr.mxu0 0.0
        %642 = vmatpush1.msra.mxu0 0.0
        %643 = vmatprep.subr.mxu0 0.0
        %644 = vmatpush1.msra.mxu0 0.0
        %645 = vmatprep.subr.mxu0 0.0
        %646 = vmatpush1.msra.mxu0 0.0
        %647 = vmatprep.subr.mxu0 0.0
        %648 = vmatpush1.msra.mxu0 0.0
        %649 = vmatprep.subr.mxu0 0.0
        %650 = vmatpush1.msra.mxu0 0.0
        %651 = vmatprep.subr.mxu0 0.0
        %652 = vmatpush1.msra.mxu0 0.0
        %653 = vmatprep.subr.mxu0 0.0
        %654 = vmatpush1.msra.mxu0 0.0
        %655 = vmatprep.subr.mxu0 0.0
        %656 = vmatpush1.msra.mxu0 0.0
        %657 = vmatprep.subr.mxu0 0.0
        %658 = vmatpush1.msra.mxu0 0.0
        %659 = vmatprep.subr.mxu0 0.0
        %660 = vmatpush1.msra.mxu0 0.0
        %661 = vmatprep.subr.mxu0 0.0
        %662 = vmatpush1.msra.mxu0 0.0
        %663 = vmatprep.mubr.f32.mxu0 0.0
        %664 = vmatmul.mubr.f32.gmra.mrb[0].mxu0 %v586
        %v665 = vpop.f32.mrb[0].mxu0
        %v666 = vadd.f32 0.0, %v665
        %v667 = vpop.f32.mrb[0].mxu0
        %v668 = vadd.f32 0.0, %v667
        %669 = vmatprep.mubr.f32.mxu0 0.0
        %670 = vmatmul.mubr.f32.gmra.mrb[0].mxu0 %v588
        %v671 = vpop.f32.mrb[0].mxu0
        %v672 = vadd.f32 0.0, %v671
        %v673 = vpop.f32.mrb[0].mxu0
        %v674 = vadd.f32 0.0, %v673
        %675 = vmatprep.mubr.f32.mxu0 0.0
        %676 = vmatmul.mubr.f32.gmra.mrb[0].mxu0 %v590
        %v677 = vpop.f32.mrb[0].mxu0
        %v678 = vadd.f32 0.0, %v677
        %v679 = vpop.f32.mrb[0].mxu0
        %v680 = vadd.f32 0.0, %v679
        %681 = vdwg.mxu0
        %v682 = vsel %vm585, %v552, 0
        %v684 = vsel %vm585, %v553, 0
        %v686 = vsel %vm585, %v554, 0
        %v689 = vsel %vm592, %v562, 0
        %v692 = vsel %vm592, %v563, 0
        %694 = vmatprep.subr.mxu0 %v557
        %695 = vmatpush1.msra.mxu0 %v556
        %696 = vmatprep.subr.mxu0 %v559
        %697 = vmatpush1.msra.mxu0 %v558
        %698 = vmatprep.subr.mxu0 %v561
        %699 = vmatpush1.msra.mxu0 %v560
        %700 = vmatprep.subr.mxu0 %v692
        %701 = vmatpush1.msra.mxu0 %v689
        %702 = vmatprep.subr.mxu0 0.0
        %703 = vmatpush1.msra.mxu0 0.0
        %704 = vmatprep.subr.mxu0 0.0
        %705 = vmatpush1.msra.mxu0 0.0
        %706 = vmatprep.subr.mxu0 0.0
        %707 = vmatpush1.msra.mxu0 0.0
        %708 = vmatprep.subr.mxu0 0.0
        %709 = vmatpush1.msra.mxu0 0.0
        %710 = vmatprep.subr.mxu0 0.0
        %711 = vmatpush1.msra.mxu0 0.0
        %712 = vmatprep.subr.mxu0 0.0
        %713 = vmatpush1.msra.mxu0 0.0
        %714 = vmatprep.subr.mxu0 0.0
        %715 = vmatpush1.msra.mxu0 0.0
        %716 = vmatprep.subr.mxu0 0.0
        %717 = vmatpush1.msra.mxu0 0.0
        %718 = vmatprep.subr.mxu0 0.0
        %719 = vmatpush1.msra.mxu0 0.0
        %720 = vmatprep.subr.mxu0 0.0
        %721 = vmatpush1.msra.mxu0 0.0
        %722 = vmatprep.subr.mxu0 0.0
        %723 = vmatpush1.msra.mxu0 0.0
        %724 = vmatprep.subr.mxu0 0.0
        %725 = vmatpush1.msra.mxu0 0.0
        %726 = vmatprep.subr.mxu0 0.0
        %727 = vmatpush1.msra.mxu0 0.0
        %728 = vmatprep.subr.mxu0 0.0
        %729 = vmatpush1.msra.mxu0 0.0
        %730 = vmatprep.subr.mxu0 0.0
        %731 = vmatpush1.msra.mxu0 0.0
        %732 = vmatprep.subr.mxu0 0.0
        %733 = vmatpush1.msra.mxu0 0.0
        %734 = vmatprep.subr.mxu0 0.0
        %735 = vmatpush1.msra.mxu0 0.0
        %736 = vmatprep.subr.mxu0 0.0
        %737 = vmatpush1.msra.mxu0 0.0
        %738 = vmatprep.subr.mxu0 0.0
        %739 = vmatpush1.msra.mxu0 0.0
        %740 = vmatprep.subr.mxu0 0.0
        %741 = vmatpush1.msra.mxu0 0.0
        %742 = vmatprep.subr.mxu0 0.0
        %743 = vmatpush1.msra.mxu0 0.0
        %744 = vmatprep.subr.mxu0 0.0
        %745 = vmatpush1.msra.mxu0 0.0
        %746 = vmatprep.subr.mxu0 0.0
        %747 = vmatpush1.msra.mxu0 0.0
        %748 = vmatprep.subr.mxu0 0.0
        %749 = vmatpush1.msra.mxu0 0.0
        %750 = vmatprep.subr.mxu0 0.0
        %751 = vmatpush1.msra.mxu0 0.0
        %752 = vmatprep.subr.mxu0 0.0
        %753 = vmatpush1.msra.mxu0 0.0
        %754 = vmatprep.subr.mxu0 0.0
        %755 = vmatpush1.msra.mxu0 0.0
        %756 = vmatprep.subr.mxu0 0.0
        %757 = vmatpush1.msra.mxu0 0.0
        %758 = vmatprep.mubr.f32.mxu0 0.0
        %759 = vmatmul.mubr.f32.gmra.mrb[0].mxu0 %v682
        %v760 = vpop.f32.mrb[0].mxu0
        %v761 = vadd.f32 %v666, %v760
        %v762 = vpop.f32.mrb[0].mxu0
        %v763 = vadd.f32 %v668, %v762
        %764 = vmatprep.mubr.f32.mxu0 0.0
        %765 = vmatmul.mubr.f32.gmra.mrb[0].mxu0 %v684
        %v766 = vpop.f32.mrb[0].mxu0
        %v767 = vadd.f32 %v672, %v766
        %v768 = vpop.f32.mrb[0].mxu0
        %v769 = vadd.f32 %v674, %v768
        %770 = vmatprep.mubr.f32.mxu0 0.0
        %771 = vmatmul.mubr.f32.gmra.mrb[0].mxu0 %v686
        %v772 = vpop.f32.mrb[0].mxu0
        %v773 = vadd.f32 %v678, %v772
        %v774 = vpop.f32.mrb[0].mxu0
        %v775 = vadd.f32 %v680, %v774
        %776 = vdwg.mxu0
        %s777 = scalar_lea.vmem %s1, 128
        %v778 = vld [vmem:[%s777] sm:$0xff]
        %v779 = vld [vmem:[%s777 + $0x8] sm:$0xff]
        %v780 = vld [vmem:[%s777 + $0x10] sm:$0xff]
        %v781 = vld [vmem:[%s777 + $0x18] sm:$0xff]
        %v782 = vld [vmem:[%s777 + $0x20] sm:$0xff]
        %v783 = vld [vmem:[%s777 + $0x28] sm:$0xff]
        %v784 = vld [vmem:[%s777 + $0x30] sm:$0xf]
        %v785 = vld [vmem:[%s777 + $0x38] sm:$0xf]
        %vm786 = vcmask 1045504
        %v787 = vrot.slane %v552, 2
        %v788 = vrot.slane %v553, 2
        %v789 = vsel %vm786, %v787, %v788
        %v790 = vrot.slane %v554, 2
        %v791 = vsel %vm786, %v788, %v790
        %v792 = vrot.slane %v555, 2
        %v793 = vsel %vm786, %v790, %v792
        %v794 = vsel %vm585, %v789, 0
        %v796 = vsel %vm585, %v791, 0
        %v798 = vsel %vm585, %v793, 0
        %v801 = vsel %vm592, %v784, 0
        %v804 = vsel %vm592, %v785, 0
        %806 = vmatprep.subr.mxu0 %v779
        %807 = vmatpush1.msra.mxu0 %v778
        %808 = vmatprep.subr.mxu0 %v781
        %809 = vmatpush1.msra.mxu0 %v780
        %810 = vmatprep.subr.mxu0 %v783
        %811 = vmatpush1.msra.mxu0 %v782
        %812 = vmatprep.subr.mxu0 %v804
        %813 = vmatpush1.msra.mxu0 %v801
        %814 = vmatprep.subr.mxu0 0.0
        %815 = vmatpush1.msra.mxu0 0.0
        %816 = vmatprep.subr.mxu0 0.0
        %817 = vmatpush1.msra.mxu0 0.0
        %818 = vmatprep.subr.mxu0 0.0
        %819 = vmatpush1.msra.mxu0 0.0
        %820 = vmatprep.subr.mxu0 0.0
        %821 = vmatpush1.msra.mxu0 0.0
        %822 = vmatprep.subr.mxu0 0.0
        %823 = vmatpush1.msra.mxu0 0.0
        %824 = vmatprep.subr.mxu0 0.0
        %825 = vmatpush1.msra.mxu0 0.0
        %826 = vmatprep.subr.mxu0 0.0
        %827 = vmatpush1.msra.mxu0 0.0
        %828 = vmatprep.subr.mxu0 0.0
        %829 = vmatpush1.msra.mxu0 0.0
        %830 = vmatprep.subr.mxu0 0.0
        %831 = vmatpush1.msra.mxu0 0.0
        %832 = vmatprep.subr.mxu0 0.0
        %833 = vmatpush1.msra.mxu0 0.0
        %834 = vmatprep.subr.mxu0 0.0
        %835 = vmatpush1.msra.mxu0 0.0
        %836 = vmatprep.subr.mxu0 0.0
        %837 = vmatpush1.msra.mxu0 0.0
        %838 = vmatprep.subr.mxu0 0.0
        %839 = vmatpush1.msra.mxu0 0.0
        %840 = vmatprep.subr.mxu0 0.0
        %841 = vmatpush1.msra.mxu0 0.0
        %842 = vmatprep.subr.mxu0 0.0
        %843 = vmatpush1.msra.mxu0 0.0
        %844 = vmatprep.subr.mxu0 0.0
        %845 = vmatpush1.msra.mxu0 0.0
        %846 = vmatprep.subr.mxu0 0.0
        %847 = vmatpush1.msra.mxu0 0.0
        %848 = vmatprep.subr.mxu0 0.0
        %849 = vmatpush1.msra.mxu0 0.0
        %850 = vmatprep.subr.mxu0 0.0
        %851 = vmatpush1.msra.mxu0 0.0
        %852 = vmatprep.subr.mxu0 0.0
        %853 = vmatpush1.msra.mxu0 0.0
        %854 = vmatprep.subr.mxu0 0.0
        %855 = vmatpush1.msra.mxu0 0.0
        %856 = vmatprep.subr.mxu0 0.0
        %857 = vmatpush1.msra.mxu0 0.0
        %858 = vmatprep.subr.mxu0 0.0
        %859 = vmatpush1.msra.mxu0 0.0
        %860 = vmatprep.subr.mxu0 0.0
        %861 = vmatpush1.msra.mxu0 0.0
        %862 = vmatprep.subr.mxu0 0.0
        %863 = vmatpush1.msra.mxu0 0.0
        %864 = vmatprep.subr.mxu0 0.0
        %865 = vmatpush1.msra.mxu0 0.0
        %866 = vmatprep.subr.mxu0 0.0
        %867 = vmatpush1.msra.mxu0 0.0
        %868 = vmatprep.subr.mxu0 0.0
        %869 = vmatpush1.msra.mxu0 0.0
        %870 = vmatprep.mubr.f32.mxu0 0.0
        %871 = vmatmul.mubr.f32.gmra.mrb[0].mxu0 %v794
        %v872 = vpop.f32.mrb[0].mxu0
        %v873 = vadd.f32 0.0, %v872
        %v874 = vpop.f32.mrb[0].mxu0
        %v875 = vadd.f32 0.0, %v874
        %876 = vmatprep.mubr.f32.mxu0 0.0
        %877 = vmatmul.mubr.f32.gmra.mrb[0].mxu0 %v796
        %v878 = vpop.f32.mrb[0].mxu0
        %v879 = vadd.f32 0.0, %v878
        %v880 = vpop.f32.mrb[0].mxu0
        %v881 = vadd.f32 0.0, %v880
        %882 = vmatprep.mubr.f32.mxu0 0.0
        %883 = vmatmul.mubr.f32.gmra.mrb[0].mxu0 %v798
        %v884 = vpop.f32.mrb[0].mxu0
        %v885 = vadd.f32 0.0, %v884
        %v886 = vpop.f32.mrb[0].mxu0
        %v887 = vadd.f32 0.0, %v886
        %888 = vdwg.mxu0
        %v889 = vadd.f32 %v761, %v873
        %v890 = vadd.f32 %v763, %v875
        %v891 = vadd.f32 %v767, %v879
        %v892 = vadd.f32 %v769, %v881
        %v893 = vadd.f32 %v773, %v885
        %v894 = vadd.f32 %v775, %v887
        %s895 = scalar_lea.vmem %s1, 192
        %v896 = vld [vmem:[%s895] sm:$0xff]
        %v897 = vld [vmem:[%s895 + $0x8] sm:$0xff]
        %v898 = vld [vmem:[%s895 + $0x10] sm:$0xff]
        %v899 = vld [vmem:[%s895 + $0x18] sm:$0xff]
        %v900 = vld [vmem:[%s895 + $0x20] sm:$0xff]
        %v901 = vld [vmem:[%s895 + $0x28] sm:$0xff]
        %v902 = vld [vmem:[%s895 + $0x30] sm:$0xf]
        %v903 = vld [vmem:[%s895 + $0x38] sm:$0xf]
        %vm904 = vcmask 1044480
        %v905 = vrot.slane %v552, 3
        %v906 = vrot.slane %v553, 3
        %v907 = vsel %vm904, %v905, %v906
        %v908 = vrot.slane %v554, 3
        %v909 = vsel %vm904, %v906, %v908
        %v910 = vrot.slane %v555, 3
        %v911 = vsel %vm904, %v908, %v910
        %v912 = vsel %vm585, %v907, 0
        %v914 = vsel %vm585, %v909, 0
        %v916 = vsel %vm585, %v911, 0
        %v919 = vsel %vm592, %v902, 0
        %v922 = vsel %vm592, %v903, 0
        %924 = vmatprep.subr.mxu0 %v897
        %925 = vmatpush1.msra.mxu0 %v896
        %926 = vmatprep.subr.mxu0 %v899
        %927 = vmatpush1.msra.mxu0 %v898
        %928 = vmatprep.subr.mxu0 %v901
        %929 = vmatpush1.msra.mxu0 %v900
        %930 = vmatprep.subr.mxu0 %v922
        %931 = vmatpush1.msra.mxu0 %v919
        %932 = vmatprep.subr.mxu0 0.0
        %933 = vmatpush1.msra.mxu0 0.0
        %934 = vmatprep.subr.mxu0 0.0
        %935 = vmatpush1.msra.mxu0 0.0
        %936 = vmatprep.subr.mxu0 0.0
        %937 = vmatpush1.msra.mxu0 0.0
        %938 = vmatprep.subr.mxu0 0.0
        %939 = vmatpush1.msra.mxu0 0.0
        %940 = vmatprep.subr.mxu0 0.0
        %941 = vmatpush1.msra.mxu0 0.0
        %942 = vmatprep.subr.mxu0 0.0
        %943 = vmatpush1.msra.mxu0 0.0
        %944 = vmatprep.subr.mxu0 0.0
        %945 = vmatpush1.msra.mxu0 0.0
        %946 = vmatprep.subr.mxu0 0.0
        %947 = vmatpush1.msra.mxu0 0.0
        %948 = vmatprep.subr.mxu0 0.0
        %949 = vmatpush1.msra.mxu0 0.0
        %950 = vmatprep.subr.mxu0 0.0
        %951 = vmatpush1.msra.mxu0 0.0
        %952 = vmatprep.subr.mxu0 0.0
        %953 = vmatpush1.msra.mxu0 0.0
        %954 = vmatprep.subr.mxu0 0.0
        %955 = vmatpush1.msra.mxu0 0.0
        %956 = vmatprep.subr.mxu0 0.0
        %957 = vmatpush1.msra.mxu0 0.0
        %958 = vmatprep.subr.mxu0 0.0
        %959 = vmatpush1.msra.mxu0 0.0
        %960 = vmatprep.subr.mxu0 0.0
        %961 = vmatpush1.msra.mxu0 0.0
        %962 = vmatprep.subr.mxu0 0.0
        %963 = vmatpush1.msra.mxu0 0.0
        %964 = vmatprep.subr.mxu0 0.0
        %965 = vmatpush1.msra.mxu0 0.0
        %966 = vmatprep.subr.mxu0 0.0
        %967 = vmatpush1.msra.mxu0 0.0
        %968 = vmatprep.subr.mxu0 0.0
        %969 = vmatpush1.msra.mxu0 0.0
        %970 = vmatprep.subr.mxu0 0.0
        %971 = vmatpush1.msra.mxu0 0.0
        %972 = vmatprep.subr.mxu0 0.0
        %973 = vmatpush1.msra.mxu0 0.0
        %974 = vmatprep.subr.mxu0 0.0
        %975 = vmatpush1.msra.mxu0 0.0
        %976 = vmatprep.subr.mxu0 0.0
        %977 = vmatpush1.msra.mxu0 0.0
        %978 = vmatprep.subr.mxu0 0.0
        %979 = vmatpush1.msra.mxu0 0.0
        %980 = vmatprep.subr.mxu0 0.0
        %981 = vmatpush1.msra.mxu0 0.0
        %982 = vmatprep.subr.mxu0 0.0
        %983 = vmatpush1.msra.mxu0 0.0
        %984 = vmatprep.subr.mxu0 0.0
        %985 = vmatpush1.msra.mxu0 0.0
        %986 = vmatprep.subr.mxu0 0.0
        %987 = vmatpush1.msra.mxu0 0.0
        %988 = vmatprep.mubr.f32.mxu0 0.0
        %989 = vmatmul.mubr.f32.gmra.mrb[0].mxu0 %v912
        %v990 = vpop.f32.mrb[0].mxu0
        %v991 = vadd.f32 0.0, %v990
        %v992 = vpop.f32.mrb[0].mxu0
        %v993 = vadd.f32 0.0, %v992
        %994 = vmatprep.mubr.f32.mxu0 0.0
        %995 = vmatmul.mubr.f32.gmra.mrb[0].mxu0 %v914
        %v996 = vpop.f32.mrb[0].mxu0
        %v997 = vadd.f32 0.0, %v996
        %v998 = vpop.f32.mrb[0].mxu0
        %v999 = vadd.f32 0.0, %v998
        %1000 = vmatprep.mubr.f32.mxu0 0.0
        %1001 = vmatmul.mubr.f32.gmra.mrb[0].mxu0 %v916
        %v1002 = vpop.f32.mrb[0].mxu0
        %v1003 = vadd.f32 0.0, %v1002
        %v1004 = vpop.f32.mrb[0].mxu0
        %v1005 = vadd.f32 0.0, %v1004
        %1006 = vdwg.mxu0
        %v1007 = vadd.f32 %v889, %v991
        %v1008 = vadd.f32 %v890, %v993
        %v1009 = vadd.f32 %v891, %v997
        %v1010 = vadd.f32 %v892, %v999
        %v1011 = vadd.f32 %v893, %v1003
        %v1012 = vadd.f32 %v894, %v1005
        %s1013 = scalar_lea.vmem %s1, 256
        %v1014 = vld [vmem:[%s1013] sm:$0xff]
        %v1015 = vld [vmem:[%s1013 + $0x8] sm:$0xff]
        %v1016 = vld [vmem:[%s1013 + $0x10] sm:$0xff]
        %v1017 = vld [vmem:[%s1013 + $0x18] sm:$0xff]
        %v1018 = vld [vmem:[%s1013 + $0x20] sm:$0xff]
        %v1019 = vld [vmem:[%s1013 + $0x28] sm:$0xff]
        %v1020 = vld [vmem:[%s1013 + $0x30] sm:$0xf]
        %v1021 = vld [vmem:[%s1013 + $0x38] sm:$0xf]
        %v1022 = vrot.slane %v552, 4
        %v1023 = vrot.slane %v553, 4
        %v1024 = vsel %vm592, %v1022, %v1023
        %v1025 = vrot.slane %v554, 4
        %v1026 = vsel %vm592, %v1023, %v1025
        %v1027 = vrot.slane %v555, 4
        %v1028 = vsel %vm592, %v1025, %v1027
        %v1029 = vsel %vm585, %v1024, 0
        %v1031 = vsel %vm585, %v1026, 0
        %v1033 = vsel %vm585, %v1028, 0
        %v1036 = vsel %vm592, %v1020, 0
        %v1039 = vsel %vm592, %v1021, 0
        %1041 = vmatprep.subr.mxu0 %v1015
        %1042 = vmatpush1.msra.mxu0 %v1014
        %1043 = vmatprep.subr.mxu0 %v1017
        %1044 = vmatpush1.msra.mxu0 %v1016
        %1045 = vmatprep.subr.mxu0 %v1019
        %1046 = vmatpush1.msra.mxu0 %v1018
        %1047 = vmatprep.subr.mxu0 %v1039
        %1048 = vmatpush1.msra.mxu0 %v1036
        %1049 = vmatprep.subr.mxu0 0.0
        %1050 = vmatpush1.msra.mxu0 0.0
        %1051 = vmatprep.subr.mxu0 0.0
        %1052 = vmatpush1.msra.mxu0 0.0
        %1053 = vmatprep.subr.mxu0 0.0
        %1054 = vmatpush1.msra.mxu0 0.0
        %1055 = vmatprep.subr.mxu0 0.0
        %1056 = vmatpush1.msra.mxu0 0.0
        %1057 = vmatprep.subr.mxu0 0.0
        %1058 = vmatpush1.msra.mxu0 0.0
        %1059 = vmatprep.subr.mxu0 0.0
        %1060 = vmatpush1.msra.mxu0 0.0
        %1061 = vmatprep.subr.mxu0 0.0
        %1062 = vmatpush1.msra.mxu0 0.0
        %1063 = vmatprep.subr.mxu0 0.0
        %1064 = vmatpush1.msra.mxu0 0.0
        %1065 = vmatprep.subr.mxu0 0.0
        %1066 = vmatpush1.msra.mxu0 0.0
        %1067 = vmatprep.subr.mxu0 0.0
        %1068 = vmatpush1.msra.mxu0 0.0
        %1069 = vmatprep.subr.mxu0 0.0
        %1070 = vmatpush1.msra.mxu0 0.0
        %1071 = vmatprep.subr.mxu0 0.0
        %1072 = vmatpush1.msra.mxu0 0.0
        %1073 = vmatprep.subr.mxu0 0.0
        %1074 = vmatpush1.msra.mxu0 0.0
        %1075 = vmatprep.subr.mxu0 0.0
        %1076 = vmatpush1.msra.mxu0 0.0
        %1077 = vmatprep.subr.mxu0 0.0
        %1078 = vmatpush1.msra.mxu0 0.0
        %1079 = vmatprep.subr.mxu0 0.0
        %1080 = vmatpush1.msra.mxu0 0.0
        %1081 = vmatprep.subr.mxu0 0.0
        %1082 = vmatpush1.msra.mxu0 0.0
        %1083 = vmatprep.subr.mxu0 0.0
        %1084 = vmatpush1.msra.mxu0 0.0
        %1085 = vmatprep.subr.mxu0 0.0
        %1086 = vmatpush1.msra.mxu0 0.0
        %1087 = vmatprep.subr.mxu0 0.0
        %1088 = vmatpush1.msra.mxu0 0.0
        %1089 = vmatprep.subr.mxu0 0.0
        %1090 = vmatpush1.msra.mxu0 0.0
        %1091 = vmatprep.subr.mxu0 0.0
        %1092 = vmatpush1.msra.mxu0 0.0
        %1093 = vmatprep.subr.mxu0 0.0
        %1094 = vmatpush1.msra.mxu0 0.0
        %1095 = vmatprep.subr.mxu0 0.0
        %1096 = vmatpush1.msra.mxu0 0.0
        %1097 = vmatprep.subr.mxu0 0.0
        %1098 = vmatpush1.msra.mxu0 0.0
        %1099 = vmatprep.subr.mxu0 0.0
        %1100 = vmatpush1.msra.mxu0 0.0
        %1101 = vmatprep.subr.mxu0 0.0
        %1102 = vmatpush1.msra.mxu0 0.0
        %1103 = vmatprep.subr.mxu0 0.0
        %1104 = vmatpush1.msra.mxu0 0.0
        %1105 = vmatprep.mubr.f32.mxu0 0.0
        %1106 = vmatmul.mubr.f32.gmra.mrb[0].mxu0 %v1029
        %v1107 = vpop.f32.mrb[0].mxu0
        %v1108 = vadd.f32 0.0, %v1107
        %v1109 = vpop.f32.mrb[0].mxu0
        %v1110 = vadd.f32 0.0, %v1109
        %1111 = vmatprep.mubr.f32.mxu0 0.0
        %1112 = vmatmul.mubr.f32.gmra.mrb[0].mxu0 %v1031
        %v1113 = vpop.f32.mrb[0].mxu0
        %v1114 = vadd.f32 0.0, %v1113
        %v1115 = vpop.f32.mrb[0].mxu0
        %v1116 = vadd.f32 0.0, %v1115
        %1117 = vmatprep.mubr.f32.mxu0 0.0
        %1118 = vmatmul.mubr.f32.gmra.mrb[0].mxu0 %v1033
        %v1119 = vpop.f32.mrb[0].mxu0
        %v1120 = vadd.f32 0.0, %v1119
        %v1121 = vpop.f32.mrb[0].mxu0
        %v1122 = vadd.f32 0.0, %v1121
        %1123 = vdwg.mxu0
        %v1124 = vadd.f32 %v1007, %v1108
        %v1125 = vadd.f32 %v1008, %v1110
        %v1126 = vadd.f32 %v1009, %v1114
        %v1127 = vadd.f32 %v1010, %v1116
        %v1128 = vadd.f32 %v1011, %v1120
        %v1129 = vadd.f32 %v1012, %v1122
        %v1130 = vld [vmem:[%s2] sm:$0x3]
        %v1132 = vlaneseq
        %v1133 = vshrl.u32 %v1132, 7
        %v1134 = vsub.s32 0, %v1133
        %v1135 = vrot.slane %v1130, %v1134
        %v1136 = vlaneseq
        %v1137 = vshrl.u32 %v1136, 7
        %v1138 = vsub.s32 1, %v1137
        %v1139 = vrot.slane %v1130, %v1138
        %v1142 = vadd.f32 %v1124, %v1135
        %v1143 = vadd.f32 %v1125, %v1139
        %v1144 = vadd.f32 %v1126, %v1135
        %v1145 = vadd.f32 %v1127, %v1139
        %v1146 = vadd.f32 %v1128, %v1135
        %v1147 = vadd.f32 %v1129, %v1139
        %v1148 = vmax.f32 %v1142, 0.0
        %v1149 = vmax.f32 %v1143, 0.0
        %v1150 = vmax.f32 %v1144, 0.0
        %v1151 = vmax.f32 %v1145, 0.0
        %v1152 = vmax.f32 %v1146, 0.0
        %v1153 = vmax.f32 %v1147, 0.0
        %v1154 = vld [vmem:[%s3] sm:$0xff]
        %v1155 = vld [vmem:[%s3 + $0x8] sm:$0xf]
        %vm1156 = vcmask 195584
        %v1158 = vsel %vm1156, %v1154, 0
        %v1161 = vsel %vm1156, %v1155, 0
        %1163 = vmatprep.subr.mxu0 %v1149
        %1164 = vmatpush1.msra.mxu0 %v1148
        %1165 = vmatprep.subr.mxu0 %v1151
        %1166 = vmatpush1.msra.mxu0 %v1150
        %1167 = vmatprep.subr.mxu0 %v1153
        %1168 = vmatpush1.msra.mxu0 %v1152
        %1169 = vmatprep.subr.mxu0 0.0
        %1170 = vmatpush1.msra.mxu0 0.0
        %1171 = vmatprep.subr.mxu0 0.0
        %1172 = vmatpush1.msra.mxu0 0.0
        %1173 = vmatprep.subr.mxu0 0.0
        %1174 = vmatpush1.msra.mxu0 0.0
        %1175 = vmatprep.subr.mxu0 0.0
        %1176 = vmatpush1.msra.mxu0 0.0
        %1177 = vmatprep.subr.mxu0 0.0
        %1178 = vmatpush1.msra.mxu0 0.0
        %1179 = vmatprep.subr.mxu0 0.0
        %1180 = vmatpush1.msra.mxu0 0.0
        %1181 = vmatprep.subr.mxu0 0.0
        %1182 = vmatpush1.msra.mxu0 0.0
        %1183 = vmatprep.subr.mxu0 0.0
        %1184 = vmatpush1.msra.mxu0 0.0
        %1185 = vmatprep.subr.mxu0 0.0
        %1186 = vmatpush1.msra.mxu0 0.0
        %1187 = vmatprep.subr.mxu0 0.0
        %1188 = vmatpush1.msra.mxu0 0.0
        %1189 = vmatprep.subr.mxu0 0.0
        %1190 = vmatpush1.msra.mxu0 0.0
        %1191 = vmatprep.subr.mxu0 0.0
        %1192 = vmatpush1.msra.mxu0 0.0
        %1193 = vmatprep.subr.mxu0 0.0
        %1194 = vmatpush1.msra.mxu0 0.0
        %1195 = vmatprep.subr.mxu0 0.0
        %1196 = vmatpush1.msra.mxu0 0.0
        %1197 = vmatprep.subr.mxu0 0.0
        %1198 = vmatpush1.msra.mxu0 0.0
        %1199 = vmatprep.subr.mxu0 0.0
        %1200 = vmatpush1.msra.mxu0 0.0
        %1201 = vmatprep.subr.mxu0 0.0
        %1202 = vmatpush1.msra.mxu0 0.0
        %1203 = vmatprep.subr.mxu0 0.0
        %1204 = vmatpush1.msra.mxu0 0.0
        %1205 = vmatprep.subr.mxu0 0.0
        %1206 = vmatpush1.msra.mxu0 0.0
        %1207 = vmatprep.subr.mxu0 0.0
        %1208 = vmatpush1.msra.mxu0 0.0
        %1209 = vmatprep.subr.mxu0 0.0
        %1210 = vmatpush1.msra.mxu0 0.0
        %1211 = vmatprep.subr.mxu0 0.0
        %1212 = vmatpush1.msra.mxu0 0.0
        %1213 = vmatprep.subr.mxu0 0.0
        %1214 = vmatpush1.msra.mxu0 0.0
        %1215 = vmatprep.subr.mxu0 0.0
        %1216 = vmatpush1.msra.mxu0 0.0
        %1217 = vmatprep.subr.mxu0 0.0
        %1218 = vmatpush1.msra.mxu0 0.0
        %1219 = vmatprep.subr.mxu0 0.0
        %1220 = vmatpush1.msra.mxu0 0.0
        %1221 = vmatprep.subr.mxu0 0.0
        %1222 = vmatpush1.msra.mxu0 0.0
        %1223 = vmatprep.subr.mxu0 0.0
        %1224 = vmatpush1.msra.mxu0 0.0
        %1225 = vmatprep.subr.mxu0 0.0
        %1226 = vmatpush1.msra.mxu0 0.0
        %1227 = vmatprep.mubr.f32.mxu0 0.0
        %1228 = vmatmul.mubr.f32.gmra.mrb[0].mxu0 %v1158
        %v1229 = vpop.f32.mrb[0].mxu0
        %v1230 = vadd.f32 0.0, %v1229
        %v1231 = vpop.f32.mrb[0].mxu0
        %v1232 = vadd.f32 0.0, %v1231
        %1233 = vmatprep.mubr.f32.mxu0 0.0
        %1234 = vmatmul.mubr.f32.gmra.mrb[0].mxu0 %v1161
        %v1235 = vpop.f32.mrb[0].mxu0
        %v1236 = vadd.f32 0.0, %v1235
        %v1237 = vpop.f32.mrb[0].mxu0
        %v1238 = vadd.f32 0.0, %v1237
        %1239 = vdwg.mxu0
        %s1240 = scalar_lea.vmem %s3, 16
        %v1241 = vld [vmem:[%s1240] sm:$0xff]
        %v1242 = vld [vmem:[%s1240 + $0x8] sm:$0xf]
        %v1244 = vsel %vm1156, %v1241, 0
        %v1247 = vsel %vm1156, %v1242, 0
        %1249 = vmatprep.subr.mxu0 %v1149
        %1250 = vmatpush1.msra.mxu0 %v1148
        %1251 = vmatprep.subr.mxu0 %v1151
        %1252 = vmatpush1.msra.mxu0 %v1150
        %1253 = vmatprep.subr.mxu0 %v1153
        %1254 = vmatpush1.msra.mxu0 %v1152
        %1255 = vmatprep.subr.mxu0 0.0
        %1256 = vmatpush1.msra.mxu0 0.0
        %1257 = vmatprep.subr.mxu0 0.0
        %1258 = vmatpush1.msra.mxu0 0.0
        %1259 = vmatprep.subr.mxu0 0.0
        %1260 = vmatpush1.msra.mxu0 0.0
        %1261 = vmatprep.subr.mxu0 0.0
        %1262 = vmatpush1.msra.mxu0 0.0
        %1263 = vmatprep.subr.mxu0 0.0
        %1264 = vmatpush1.msra.mxu0 0.0
        %1265 = vmatprep.subr.mxu0 0.0
        %1266 = vmatpush1.msra.mxu0 0.0
        %1267 = vmatprep.subr.mxu0 0.0
        %1268 = vmatpush1.msra.mxu0 0.0
        %1269 = vmatprep.subr.mxu0 0.0
        %1270 = vmatpush1.msra.mxu0 0.0
        %1271 = vmatprep.subr.mxu0 0.0
        %1272 = vmatpush1.msra.mxu0 0.0
        %1273 = vmatprep.subr.mxu0 0.0
        %1274 = vmatpush1.msra.mxu0 0.0
        %1275 = vmatprep.subr.mxu0 0.0
        %1276 = vmatpush1.msra.mxu0 0.0
        %1277 = vmatprep.subr.mxu0 0.0
        %1278 = vmatpush1.msra.mxu0 0.0
        %1279 = vmatprep.subr.mxu0 0.0
        %1280 = vmatpush1.msra.mxu0 0.0
        %1281 = vmatprep.subr.mxu0 0.0
        %1282 = vmatpush1.msra.mxu0 0.0
        %1283 = vmatprep.subr.mxu0 0.0
        %1284 = vmatpush1.msra.mxu0 0.0
        %1285 = vmatprep.subr.mxu0 0.0
        %1286 = vmatpush1.msra.mxu0 0.0
        %1287 = vmatprep.subr.mxu0 0.0
        %1288 = vmatpush1.msra.mxu0 0.0
        %1289 = vmatprep.subr.mxu0 0.0
        %1290 = vmatpush1.msra.mxu0 0.0
        %1291 = vmatprep.subr.mxu0 0.0
        %1292 = vmatpush1.msra.mxu0 0.0
        %1293 = vmatprep.subr.mxu0 0.0
        %1294 = vmatpush1.msra.mxu0 0.0
        %1295 = vmatprep.subr.mxu0 0.0
        %1296 = vmatpush1.msra.mxu0 0.0
        %1297 = vmatprep.subr.mxu0 0.0
        %1298 = vmatpush1.msra.mxu0 0.0
        %1299 = vmatprep.subr.mxu0 0.0
        %1300 = vmatpush1.msra.mxu0 0.0
        %1301 = vmatprep.subr.mxu0 0.0
        %1302 = vmatpush1.msra.mxu0 0.0
        %1303 = vmatprep.subr.mxu0 0.0
        %1304 = vmatpush1.msra.mxu0 0.0
        %1305 = vmatprep.subr.mxu0 0.0
        %1306 = vmatpush1.msra.mxu0 0.0
        %1307 = vmatprep.subr.mxu0 0.0
        %1308 = vmatpush1.msra.mxu0 0.0
        %1309 = vmatprep.subr.mxu0 0.0
        %1310 = vmatpush1.msra.mxu0 0.0
        %1311 = vmatprep.subr.mxu0 0.0
        %1312 = vmatpush1.msra.mxu0 0.0
        %1313 = vmatprep.mubr.f32.mxu0 0.0
        %1314 = vmatmul.mubr.f32.gmra.mrb[0].mxu0 %v1244
        %v1315 = vpop.f32.mrb[0].mxu0
        %v1316 = vadd.f32 0.0, %v1315
        %v1317 = vpop.f32.mrb[0].mxu0
        %v1318 = vadd.f32 0.0, %v1317
        %1319 = vmatprep.mubr.f32.mxu0 0.0
        %1320 = vmatmul.mubr.f32.gmra.mrb[0].mxu0 %v1247
        %v1321 = vpop.f32.mrb[0].mxu0
        %v1322 = vadd.f32 0.0, %v1321
        %v1323 = vpop.f32.mrb[0].mxu0
        %v1324 = vadd.f32 0.0, %v1323
        %1325 = vdwg.mxu0
        %v1326 = vmax.f32 %v1230, %v1316
        %v1327 = vmax.f32 %v1232, %v1318
        %v1328 = vmax.f32 %v1236, %v1322
        %v1329 = vmax.f32 %v1238, %v1324
        %v1330 = vld [vmem:[#allocation2] sm:$0xff]
        %v1331 = vld [vmem:[#allocation2 + $0x8] sm:$0xff]
        %v1332 = vld [vmem:[#allocation2 + $0x10] sm:$0xff]
        %v1333 = vld [vmem:[#allocation2 + $0x18] sm:$0xff]
        %v1334 = vld [vmem:[#allocation2 + $0x20] sm:$0xff]
        %v1335 = vld [vmem:[#allocation2 + $0x28] sm:$0xff]
        %v1336 = vld [vmem:[#allocation2 + $0x30] sm:$0xff]
        %v1337 = vld [vmem:[#allocation2 + $0x38] sm:$0xff]
        %v1338 = vld [vmem:[#allocation2 + $0x40] sm:$0xff]
        %v1339 = vld [vmem:[#allocation2 + $0x48] sm:$0xff]
        %v1340 = vld [vmem:[#allocation2 + $0x50] sm:$0xff]
        %v1341 = vld [vmem:[#allocation2 + $0x58] sm:$0xff]
        %v1342 = vld [vmem:[#allocation2 + $0x60] sm:$0xff]
        %v1343 = vld [vmem:[#allocation2 + $0x68] sm:$0xff]
        %v1344 = vld [vmem:[#allocation2 + $0x70] sm:$0xff]
        %v1345 = vld [vmem:[#allocation2 + $0x78] sm:$0xff]
        %v1346 = vld [vmem:[#allocation2 + $0x80] sm:$0xff]
        %v1347 = vld [vmem:[#allocation2 + $0x88] sm:$0xff]
        %vm1348 = vcmask 130048
        %v1350 = vsel %vm1348, %v1327, 0
        %v1353 = vsel %vm1348, %v1329, 0
        %1355 = vmatprep.subr.mxu0 0.0
        %1356 = vmatpush1.msra.mxu0 %v1330
        %1357 = vmatprep.subr.mxu0 0.0
        %1358 = vmatpush1.msra.mxu0 %v1331
        %1359 = vmatprep.subr.mxu0 0.0
        %1360 = vmatpush1.msra.mxu0 %v1332
        %1361 = vmatprep.subr.mxu0 0.0
        %1362 = vmatpush1.msra.mxu0 %v1333
        %1363 = vmatprep.subr.mxu0 0.0
        %1364 = vmatpush1.msra.mxu0 %v1334
        %1365 = vmatprep.subr.mxu0 0.0
        %1366 = vmatpush1.msra.mxu0 %v1335
        %1367 = vmatprep.subr.mxu0 0.0
        %1368 = vmatpush1.msra.mxu0 %v1336
        %1369 = vmatprep.subr.mxu0 0.0
        %1370 = vmatpush1.msra.mxu0 %v1337
        %1371 = vmatprep.subr.mxu0 0.0
        %1372 = vmatpush1.msra.mxu0 %v1338
        %1373 = vmatprep.subr.mxu0 0.0
        %1374 = vmatpush1.msra.mxu0 %v1339
        %1375 = vmatprep.subr.mxu0 0.0
        %1376 = vmatpush1.msra.mxu0 %v1340
        %1377 = vmatprep.subr.mxu0 0.0
        %1378 = vmatpush1.msra.mxu0 %v1341
        %1379 = vmatprep.subr.mxu0 0.0
        %1380 = vmatpush1.msra.mxu0 %v1342
        %1381 = vmatprep.subr.mxu0 0.0
        %1382 = vmatpush1.msra.mxu0 %v1343
        %1383 = vmatprep.subr.mxu0 0.0
        %1384 = vmatpush1.msra.mxu0 %v1344
        %1385 = vmatprep.subr.mxu0 0.0
        %1386 = vmatpush1.msra.mxu0 %v1345
        %1387 = vmatprep.subr.mxu0 0.0
        %1388 = vmatpush1.msra.mxu0 %v1346
        %1389 = vmatprep.subr.mxu0 0.0
        %1390 = vmatpush1.msra.mxu0 %v1347
        %1391 = vmatprep.subr.mxu0 0.0
        %1392 = vmatpush1.msra.mxu0 0.0
        %1393 = vmatprep.subr.mxu0 0.0
        %1394 = vmatpush1.msra.mxu0 0.0
        %1395 = vmatprep.subr.mxu0 0.0
        %1396 = vmatpush1.msra.mxu0 0.0
        %1397 = vmatprep.subr.mxu0 0.0
        %1398 = vmatpush1.msra.mxu0 0.0
        %1399 = vmatprep.subr.mxu0 0.0
        %1400 = vmatpush1.msra.mxu0 0.0
        %1401 = vmatprep.subr.mxu0 0.0
        %1402 = vmatpush1.msra.mxu0 0.0
        %1403 = vmatprep.subr.mxu0 0.0
        %1404 = vmatpush1.msra.mxu0 0.0
        %1405 = vmatprep.subr.mxu0 0.0
        %1406 = vmatpush1.msra.mxu0 0.0
        %1407 = vmatprep.subr.mxu0 0.0
        %1408 = vmatpush1.msra.mxu0 0.0
        %1409 = vmatprep.subr.mxu0 0.0
        %1410 = vmatpush1.msra.mxu0 0.0
        %1411 = vmatprep.subr.mxu0 0.0
        %1412 = vmatpush1.msra.mxu0 0.0
        %1413 = vmatprep.subr.mxu0 0.0
        %1414 = vmatpush1.msra.mxu0 0.0
        %1415 = vmatprep.subr.mxu0 0.0
        %1416 = vmatpush1.msra.mxu0 0.0
        %1417 = vmatprep.subr.mxu0 0.0
        %1418 = vmatpush1.msra.mxu0 0.0
        %1419 = vmatprep.mubr.f32.mxu0 %v1350
        %1420 = vmatmul.mubr.f32.gmra.mrb[0].mxu0 %v1326
        %v1421 = vpop.f32.mrb[0].mxu0
        %v1422 = vadd.f32 0.0, %v1421
        %v1423 = vpop.f32.mrb[0].mxu0
        %1424 = vmatprep.mubr.f32.mxu0 %v1353
        %1425 = vmatmul.mubr.f32.gmra.mrb[0].mxu0 %v1328
        %v1426 = vpop.f32.mrb[0].mxu0
        %v1427 = vadd.f32 0.0, %v1426
        %v1428 = vpop.f32.mrb[0].mxu0
        %1429 = vdwg.mxu0
        %s1430 = scalar_lea.vmem [#allocation2], 144
        %v1431 = vld [vmem:[%s1430] sm:$0xff]
        %v1432 = vld [vmem:[%s1430 + $0x8] sm:$0xff]
        %v1433 = vld [vmem:[%s1430 + $0x10] sm:$0xff]
        %v1434 = vld [vmem:[%s1430 + $0x18] sm:$0xff]
        %v1435 = vld [vmem:[%s1430 + $0x20] sm:$0xff]
        %v1436 = vld [vmem:[%s1430 + $0x28] sm:$0xff]
        %v1437 = vld [vmem:[%s1430 + $0x30] sm:$0xff]
        %v1438 = vld [vmem:[%s1430 + $0x38] sm:$0xff]
        %v1439 = vld [vmem:[%s1430 + $0x40] sm:$0xff]
        %v1440 = vld [vmem:[%s1430 + $0x48] sm:$0xff]
        %v1441 = vld [vmem:[%s1430 + $0x50] sm:$0xff]
        %v1442 = vld [vmem:[%s1430 + $0x58] sm:$0xff]
        %v1443 = vld [vmem:[%s1430 + $0x60] sm:$0xff]
        %v1444 = vld [vmem:[%s1430 + $0x68] sm:$0xff]
        %v1445 = vld [vmem:[%s1430 + $0x70] sm:$0xff]
        %v1446 = vld [vmem:[%s1430 + $0x78] sm:$0xff]
        %v1447 = vld [vmem:[%s1430 + $0x80] sm:$0xff]
        %v1448 = vld [vmem:[%s1430 + $0x88] sm:$0xff]
        %1449 = vmatprep.subr.mxu0 0.0
        %1450 = vmatpush1.msra.mxu0 %v1431
        %1451 = vmatprep.subr.mxu0 0.0
        %1452 = vmatpush1.msra.mxu0 %v1432
        %1453 = vmatprep.subr.mxu0 0.0
        %1454 = vmatpush1.msra.mxu0 %v1433
        %1455 = vmatprep.subr.mxu0 0.0
        %1456 = vmatpush1.msra.mxu0 %v1434
        %1457 = vmatprep.subr.mxu0 0.0
        %1458 = vmatpush1.msra.mxu0 %v1435
        %1459 = vmatprep.subr.mxu0 0.0
        %1460 = vmatpush1.msra.mxu0 %v1436
        %1461 = vmatprep.subr.mxu0 0.0
        %1462 = vmatpush1.msra.mxu0 %v1437
        %1463 = vmatprep.subr.mxu0 0.0
        %1464 = vmatpush1.msra.mxu0 %v1438
        %1465 = vmatprep.subr.mxu0 0.0
        %1466 = vmatpush1.msra.mxu0 %v1439
        %1467 = vmatprep.subr.mxu0 0.0
        %1468 = vmatpush1.msra.mxu0 %v1440
        %1469 = vmatprep.subr.mxu0 0.0
        %1470 = vmatpush1.msra.mxu0 %v1441
        %1471 = vmatprep.subr.mxu0 0.0
        %1472 = vmatpush1.msra.mxu0 %v1442
        %1473 = vmatprep.subr.mxu0 0.0
        %1474 = vmatpush1.msra.mxu0 %v1443
        %1475 = vmatprep.subr.mxu0 0.0
        %1476 = vmatpush1.msra.mxu0 %v1444
        %1477 = vmatprep.subr.mxu0 0.0
        %1478 = vmatpush1.msra.mxu0 %v1445
        %1479 = vmatprep.subr.mxu0 0.0
        %1480 = vmatpush1.msra.mxu0 %v1446
        %1481 = vmatprep.subr.mxu0 0.0
        %1482 = vmatpush1.msra.mxu0 %v1447
        %1483 = vmatprep.subr.mxu0 0.0
        %1484 = vmatpush1.msra.mxu0 %v1448
        %1485 = vmatprep.subr.mxu0 0.0
        %1486 = vmatpush1.msra.mxu0 0.0
        %1487 = vmatprep.subr.mxu0 0.0
        %1488 = vmatpush1.msra.mxu0 0.0
        %1489 = vmatprep.subr.mxu0 0.0
        %1490 = vmatpush1.msra.mxu0 0.0
        %1491 = vmatprep.subr.mxu0 0.0
        %1492 = vmatpush1.msra.mxu0 0.0
        %1493 = vmatprep.subr.mxu0 0.0
        %1494 = vmatpush1.msra.mxu0 0.0
        %1495 = vmatprep.subr.mxu0 0.0
        %1496 = vmatpush1.msra.mxu0 0.0
        %1497 = vmatprep.subr.mxu0 0.0
        %1498 = vmatpush1.msra.mxu0 0.0
        %1499 = vmatprep.subr.mxu0 0.0
        %1500 = vmatpush1.msra.mxu0 0.0
        %1501 = vmatprep.subr.mxu0 0.0
        %1502 = vmatpush1.msra.mxu0 0.0
        %1503 = vmatprep.subr.mxu0 0.0
        %1504 = vmatpush1.msra.mxu0 0.0
        %1505 = vmatprep.subr.mxu0 0.0
        %1506 = vmatpush1.msra.mxu0 0.0
        %1507 = vmatprep.subr.mxu0 0.0
        %1508 = vmatpush1.msra.mxu0 0.0
        %1509 = vmatprep.subr.mxu0 0.0
        %1510 = vmatpush1.msra.mxu0 0.0
        %1511 = vmatprep.subr.mxu0 0.0
        %1512 = vmatpush1.msra.mxu0 0.0
        %1513 = vmatprep.mubr.f32.mxu0 %v1350
        %1514 = vmatmul.mubr.f32.gmra.mrb[0].mxu0 %v1326
        %v1515 = vpop.f32.mrb[0].mxu0
        %v1516 = vadd.f32 0.0, %v1515
        %v1517 = vpop.f32.mrb[0].mxu0
        %1518 = vmatprep.mubr.f32.mxu0 %v1353
        %1519 = vmatmul.mubr.f32.gmra.mrb[0].mxu0 %v1328
        %v1520 = vpop.f32.mrb[0].mxu0
        %v1521 = vadd.f32 0.0, %v1520
        %v1522 = vpop.f32.mrb[0].mxu0
        %1523 = vdwg.mxu0
        %v1524 = vmax.f32 %v1422, %v1516
        %v1525 = vmax.f32 %v1427, %v1521
        %v1526 = vld [vmem:[%s5] sm:$0xff]
        %v1527 = vld [vmem:[%s5 + $0x8] sm:$0xff]
        %v1528 = vld [vmem:[%s5 + $0x10] sm:$0xff]
        %v1529 = vld [vmem:[%s5 + $0x18] sm:$0xff]
        %v1530 = vld [vmem:[%s5 + $0x20] sm:$0xff]
        %v1531 = vld [vmem:[%s5 + $0x28] sm:$0xff]
        %v1532 = vld [vmem:[%s5 + $0x30] sm:$0xff]
        %v1533 = vld [vmem:[%s5 + $0x38] sm:$0xff]
        %v1534 = vld [vmem:[%s5 + $0x40] sm:$0xff]
        %s1535 = scalar_lea.vmem %s5, 72
        %v1536 = vld [vmem:[%s1535] sm:$0xff]
        %v1537 = vld [vmem:[%s1535 + $0x8] sm:$0xff]
        %v1538 = vld [vmem:[%s1535 + $0x10] sm:$0xff]
        %v1539 = vld [vmem:[%s1535 + $0x18] sm:$0xff]
        %v1540 = vld [vmem:[%s1535 + $0x20] sm:$0xff]
        %v1541 = vld [vmem:[%s1535 + $0x28] sm:$0xff]
        %v1542 = vld [vmem:[%s1535 + $0x30] sm:$0xff]
        %v1543 = vld [vmem:[%s1535 + $0x38] sm:$0xff]
        %v1544 = vld [vmem:[%s1535 + $0x40] sm:$0xff]
        %v1547 = vrot.slane %v1524, 1
        %v1548 = vrot.slane %v1525, 1
        %v1549 = vsel %vm577, %v1547, %v1548
        %vm1550 = vcmask 588800
        %v1551 = vsel %vm1550, %v1549, 0
        %1553 = vmatprep.subr.mxu0 0.0
        %1554 = vmatpush1.msra.mxu0 %v1536
        %1555 = vmatprep.subr.mxu0 0.0
        %1556 = vmatpush1.msra.mxu0 %v1537
        %1557 = vmatprep.subr.mxu0 0.0
        %1558 = vmatpush1.msra.mxu0 %v1538
        %1559 = vmatprep.subr.mxu0 0.0
        %1560 = vmatpush1.msra.mxu0 %v1539
        %1561 = vmatprep.subr.mxu0 0.0
        %1562 = vmatpush1.msra.mxu0 %v1540
        %1563 = vmatprep.subr.mxu0 0.0
        %1564 = vmatpush1.msra.mxu0 %v1541
        %1565 = vmatprep.subr.mxu0 0.0
        %1566 = vmatpush1.msra.mxu0 %v1542
        %1567 = vmatprep.subr.mxu0 0.0
        %1568 = vmatpush1.msra.mxu0 %v1543
        %1569 = vmatprep.subr.mxu0 0.0
        %1570 = vmatpush1.msra.mxu0 %v1544
        %1571 = vmatprep.subr.mxu0 0.0
        %1572 = vmatpush1.msra.mxu0 0.0
        %1573 = vmatprep.subr.mxu0 0.0
        %1574 = vmatpush1.msra.mxu0 0.0
        %1575 = vmatprep.subr.mxu0 0.0
        %1576 = vmatpush1.msra.mxu0 0.0
        %1577 = vmatprep.subr.mxu0 0.0
        %1578 = vmatpush1.msra.mxu0 0.0
        %1579 = vmatprep.subr.mxu0 0.0
        %1580 = vmatpush1.msra.mxu0 0.0
        %1581 = vmatprep.subr.mxu0 0.0
        %1582 = vmatpush1.msra.mxu0 0.0
        %1583 = vmatprep.subr.mxu0 0.0
        %1584 = vmatpush1.msra.mxu0 0.0
        %1585 = vmatprep.subr.mxu0 0.0
        %1586 = vmatpush1.msra.mxu0 0.0
        %1587 = vmatprep.subr.mxu0 0.0
        %1588 = vmatpush1.msra.mxu0 0.0
        %1589 = vmatprep.subr.mxu0 0.0
        %1590 = vmatpush1.msra.mxu0 0.0
        %1591 = vmatprep.subr.mxu0 0.0
        %1592 = vmatpush1.msra.mxu0 0.0
        %1593 = vmatprep.subr.mxu0 0.0
        %1594 = vmatpush1.msra.mxu0 0.0
        %1595 = vmatprep.subr.mxu0 0.0
        %1596 = vmatpush1.msra.mxu0 0.0
        %1597 = vmatprep.subr.mxu0 0.0
        %1598 = vmatpush1.msra.mxu0 0.0
        %1599 = vmatprep.subr.mxu0 0.0
        %1600 = vmatpush1.msra.mxu0 0.0
        %1601 = vmatprep.subr.mxu0 0.0
        %1602 = vmatpush1.msra.mxu0 0.0
        %1603 = vmatprep.subr.mxu0 0.0
        %1604 = vmatpush1.msra.mxu0 0.0
        %1605 = vmatprep.subr.mxu0 0.0
        %1606 = vmatpush1.msra.mxu0 0.0
        %1607 = vmatprep.subr.mxu0 0.0
        %1608 = vmatpush1.msra.mxu0 0.0
        %1609 = vmatprep.subr.mxu0 0.0
        %1610 = vmatpush1.msra.mxu0 0.0
        %1611 = vmatprep.subr.mxu0 0.0
        %1612 = vmatpush1.msra.mxu0 0.0
        %1613 = vmatprep.subr.mxu0 0.0
        %1614 = vmatpush1.msra.mxu0 0.0
        %1615 = vmatprep.subr.mxu0 0.0
        %1616 = vmatpush1.msra.mxu0 0.0
        %1617 = vmatprep.mubr.f32.mxu0 0.0
        %1618 = vmatmul.mubr.f32.gmra.mrb[0].mxu0 %v1551
        %v1619 = vpop.f32.mrb[0].mxu0
        %v1620 = vadd.f32 0.0, %v1619
        %v1621 = vpop.f32.mrb[0].mxu0
        %1622 = vdwg.mxu0
        %v1623 = vsel %vm1550, %v1524, 0
        %1625 = vmatprep.subr.mxu0 0.0
        %1626 = vmatpush1.msra.mxu0 %v1526
        %1627 = vmatprep.subr.mxu0 0.0
        %1628 = vmatpush1.msra.mxu0 %v1527
        %1629 = vmatprep.subr.mxu0 0.0
        %1630 = vmatpush1.msra.mxu0 %v1528
        %1631 = vmatprep.subr.mxu0 0.0
        %1632 = vmatpush1.msra.mxu0 %v1529
        %1633 = vmatprep.subr.mxu0 0.0
        %1634 = vmatpush1.msra.mxu0 %v1530
        %1635 = vmatprep.subr.mxu0 0.0
        %1636 = vmatpush1.msra.mxu0 %v1531
        %1637 = vmatprep.subr.mxu0 0.0
        %1638 = vmatpush1.msra.mxu0 %v1532
        %1639 = vmatprep.subr.mxu0 0.0
        %1640 = vmatpush1.msra.mxu0 %v1533
        %1641 = vmatprep.subr.mxu0 0.0
        %1642 = vmatpush1.msra.mxu0 %v1534
        %1643 = vmatprep.subr.mxu0 0.0
        %1644 = vmatpush1.msra.mxu0 0.0
        %1645 = vmatprep.subr.mxu0 0.0
        %1646 = vmatpush1.msra.mxu0 0.0
        %1647 = vmatprep.subr.mxu0 0.0
        %1648 = vmatpush1.msra.mxu0 0.0
        %1649 = vmatprep.subr.mxu0 0.0
        %1650 = vmatpush1.msra.mxu0 0.0
        %1651 = vmatprep.subr.mxu0 0.0
        %1652 = vmatpush1.msra.mxu0 0.0
        %1653 = vmatprep.subr.mxu0 0.0
        %1654 = vmatpush1.msra.mxu0 0.0
        %1655 = vmatprep.subr.mxu0 0.0
        %1656 = vmatpush1.msra.mxu0 0.0
        %1657 = vmatprep.subr.mxu0 0.0
        %1658 = vmatpush1.msra.mxu0 0.0
        %1659 = vmatprep.subr.mxu0 0.0
        %1660 = vmatpush1.msra.mxu0 0.0
        %1661 = vmatprep.subr.mxu0 0.0
        %1662 = vmatpush1.msra.mxu0 0.0
        %1663 = vmatprep.subr.mxu0 0.0
        %1664 = vmatpush1.msra.mxu0 0.0
        %1665 = vmatprep.subr.mxu0 0.0
        %1666 = vmatpush1.msra.mxu0 0.0
        %1667 = vmatprep.subr.mxu0 0.0
        %1668 = vmatpush1.msra.mxu0 0.0
        %1669 = vmatprep.subr.mxu0 0.0
        %1670 = vmatpush1.msra.mxu0 0.0
        %1671 = vmatprep.subr.mxu0 0.0
        %1672 = vmatpush1.msra.mxu0 0.0
        %1673 = vmatprep.subr.mxu0 0.0
        %1674 = vmatpush1.msra.mxu0 0.0
        %1675 = vmatprep.subr.mxu0 0.0
        %1676 = vmatpush1.msra.mxu0 0.0
        %1677 = vmatprep.subr.mxu0 0.0
        %1678 = vmatpush1.msra.mxu0 0.0
        %1679 = vmatprep.subr.mxu0 0.0
        %1680 = vmatpush1.msra.mxu0 0.0
        %1681 = vmatprep.subr.mxu0 0.0
        %1682 = vmatpush1.msra.mxu0 0.0
        %1683 = vmatprep.subr.mxu0 0.0
        %1684 = vmatpush1.msra.mxu0 0.0
        %1685 = vmatprep.subr.mxu0 0.0
        %1686 = vmatpush1.msra.mxu0 0.0
        %1687 = vmatprep.subr.mxu0 0.0
        %1688 = vmatpush1.msra.mxu0 0.0
        %1689 = vmatprep.mubr.f32.mxu0 0.0
        %1690 = vmatmul.mubr.f32.gmra.mrb[0].mxu0 %v1623
        %v1691 = vpop.f32.mrb[0].mxu0
        %v1692 = vadd.f32 %v1620, %v1691
        %v1693 = vpop.f32.mrb[0].mxu0
        %1694 = vdwg.mxu0
        %s1695 = scalar_lea.vmem %s5, 144
        %v1696 = vld [vmem:[%s1695] sm:$0xff]
        %v1697 = vld [vmem:[%s1695 + $0x8] sm:$0xff]
        %v1698 = vld [vmem:[%s1695 + $0x10] sm:$0xff]
        %v1699 = vld [vmem:[%s1695 + $0x18] sm:$0xff]
        %v1700 = vld [vmem:[%s1695 + $0x20] sm:$0xff]
        %v1701 = vld [vmem:[%s1695 + $0x28] sm:$0xff]
        %v1702 = vld [vmem:[%s1695 + $0x30] sm:$0xff]
        %v1703 = vld [vmem:[%s1695 + $0x38] sm:$0xff]
        %v1704 = vld [vmem:[%s1695 + $0x40] sm:$0xff]
        %v1705 = vrot.slane %v1524, 2
        %v1706 = vrot.slane %v1525, 2
        %v1707 = vsel %vm786, %v1705, %v1706
        %v1708 = vsel %vm1550, %v1707, 0
        %1710 = vmatprep.subr.mxu0 0.0
        %1711 = vmatpush1.msra.mxu0 %v1696
        %1712 = vmatprep.subr.mxu0 0.0
        %1713 = vmatpush1.msra.mxu0 %v1697
        %1714 = vmatprep.subr.mxu0 0.0
        %1715 = vmatpush1.msra.mxu0 %v1698
        %1716 = vmatprep.subr.mxu0 0.0
        %1717 = vmatpush1.msra.mxu0 %v1699
        %1718 = vmatprep.subr.mxu0 0.0
        %1719 = vmatpush1.msra.mxu0 %v1700
        %1720 = vmatprep.subr.mxu0 0.0
        %1721 = vmatpush1.msra.mxu0 %v1701
        %1722 = vmatprep.subr.mxu0 0.0
        %1723 = vmatpush1.msra.mxu0 %v1702
        %1724 = vmatprep.subr.mxu0 0.0
        %1725 = vmatpush1.msra.mxu0 %v1703
        %1726 = vmatprep.subr.mxu0 0.0
        %1727 = vmatpush1.msra.mxu0 %v1704
        %1728 = vmatprep.subr.mxu0 0.0
        %1729 = vmatpush1.msra.mxu0 0.0
        %1730 = vmatprep.subr.mxu0 0.0
        %1731 = vmatpush1.msra.mxu0 0.0
        %1732 = vmatprep.subr.mxu0 0.0
        %1733 = vmatpush1.msra.mxu0 0.0
        %1734 = vmatprep.subr.mxu0 0.0
        %1735 = vmatpush1.msra.mxu0 0.0
        %1736 = vmatprep.subr.mxu0 0.0
        %1737 = vmatpush1.msra.mxu0 0.0
        %1738 = vmatprep.subr.mxu0 0.0
        %1739 = vmatpush1.msra.mxu0 0.0
        %1740 = vmatprep.subr.mxu0 0.0
        %1741 = vmatpush1.msra.mxu0 0.0
        %1742 = vmatprep.subr.mxu0 0.0
        %1743 = vmatpush1.msra.mxu0 0.0
        %1744 = vmatprep.subr.mxu0 0.0
        %1745 = vmatpush1.msra.mxu0 0.0
        %1746 = vmatprep.subr.mxu0 0.0
        %1747 = vmatpush1.msra.mxu0 0.0
        %1748 = vmatprep.subr.mxu0 0.0
        %1749 = vmatpush1.msra.mxu0 0.0
        %1750 = vmatprep.subr.mxu0 0.0
        %1751 = vmatpush1.msra.mxu0 0.0
        %1752 = vmatprep.subr.mxu0 0.0
        %1753 = vmatpush1.msra.mxu0 0.0
        %1754 = vmatprep.subr.mxu0 0.0
        %1755 = vmatpush1.msra.mxu0 0.0
        %1756 = vmatprep.subr.mxu0 0.0
        %1757 = vmatpush1.msra.mxu0 0.0
        %1758 = vmatprep.subr.mxu0 0.0
        %1759 = vmatpush1.msra.mxu0 0.0
        %1760 = vmatprep.subr.mxu0 0.0
        %1761 = vmatpush1.msra.mxu0 0.0
        %1762 = vmatprep.subr.mxu0 0.0
        %1763 = vmatpush1.msra.mxu0 0.0
        %1764 = vmatprep.subr.mxu0 0.0
        %1765 = vmatpush1.msra.mxu0 0.0
        %1766 = vmatprep.subr.mxu0 0.0
        %1767 = vmatpush1.msra.mxu0 0.0
        %1768 = vmatprep.subr.mxu0 0.0
        %1769 = vmatpush1.msra.mxu0 0.0
        %1770 = vmatprep.subr.mxu0 0.0
        %1771 = vmatpush1.msra.mxu0 0.0
        %1772 = vmatprep.subr.mxu0 0.0
        %1773 = vmatpush1.msra.mxu0 0.0
        %1774 = vmatprep.mubr.f32.mxu0 0.0
        %1775 = vmatmul.mubr.f32.gmra.mrb[0].mxu0 %v1708
        %v1776 = vpop.f32.mrb[0].mxu0
        %v1777 = vadd.f32 0.0, %v1776
        %v1778 = vpop.f32.mrb[0].mxu0
        %1779 = vdwg.mxu0
        %v1780 = vadd.f32 %v1692, %v1777
        %s1781 = scalar_lea.vmem %s5, 216
        %v1782 = vld [vmem:[%s1781] sm:$0xff]
        %v1783 = vld [vmem:[%s1781 + $0x8] sm:$0xff]
        %v1784 = vld [vmem:[%s1781 + $0x10] sm:$0xff]
        %v1785 = vld [vmem:[%s1781 + $0x18] sm:$0xff]
        %v1786 = vld [vmem:[%s1781 + $0x20] sm:$0xff]
        %v1787 = vld [vmem:[%s1781 + $0x28] sm:$0xff]
        %v1788 = vld [vmem:[%s1781 + $0x30] sm:$0xff]
        %v1789 = vld [vmem:[%s1781 + $0x38] sm:$0xff]
        %v1790 = vld [vmem:[%s1781 + $0x40] sm:$0xff]
        %v1791 = vrot.slane %v1524, 3
        %v1792 = vrot.slane %v1525, 3
        %v1793 = vsel %vm904, %v1791, %v1792
        %v1794 = vsel %vm1550, %v1793, 0
        %1796 = vmatprep.subr.mxu0 0.0
        %1797 = vmatpush1.msra.mxu0 %v1782
        %1798 = vmatprep.subr.mxu0 0.0
        %1799 = vmatpush1.msra.mxu0 %v1783
        %1800 = vmatprep.subr.mxu0 0.0
        %1801 = vmatpush1.msra.mxu0 %v1784
        %1802 = vmatprep.subr.mxu0 0.0
        %1803 = vmatpush1.msra.mxu0 %v1785
        %1804 = vmatprep.subr.mxu0 0.0
        %1805 = vmatpush1.msra.mxu0 %v1786
        %1806 = vmatprep.subr.mxu0 0.0
        %1807 = vmatpush1.msra.mxu0 %v1787
        %1808 = vmatprep.subr.mxu0 0.0
        %1809 = vmatpush1.msra.mxu0 %v1788
        %1810 = vmatprep.subr.mxu0 0.0
        %1811 = vmatpush1.msra.mxu0 %v1789
        %1812 = vmatprep.subr.mxu0 0.0
        %1813 = vmatpush1.msra.mxu0 %v1790
        %1814 = vmatprep.subr.mxu0 0.0
        %1815 = vmatpush1.msra.mxu0 0.0
        %1816 = vmatprep.subr.mxu0 0.0
        %1817 = vmatpush1.msra.mxu0 0.0
        %1818 = vmatprep.subr.mxu0 0.0
        %1819 = vmatpush1.msra.mxu0 0.0
        %1820 = vmatprep.subr.mxu0 0.0
        %1821 = vmatpush1.msra.mxu0 0.0
        %1822 = vmatprep.subr.mxu0 0.0
        %1823 = vmatpush1.msra.mxu0 0.0
        %1824 = vmatprep.subr.mxu0 0.0
        %1825 = vmatpush1.msra.mxu0 0.0
        %1826 = vmatprep.subr.mxu0 0.0
        %1827 = vmatpush1.msra.mxu0 0.0
        %1828 = vmatprep.subr.mxu0 0.0
        %1829 = vmatpush1.msra.mxu0 0.0
        %1830 = vmatprep.subr.mxu0 0.0
        %1831 = vmatpush1.msra.mxu0 0.0
        %1832 = vmatprep.subr.mxu0 0.0
        %1833 = vmatpush1.msra.mxu0 0.0
        %1834 = vmatprep.subr.mxu0 0.0
        %1835 = vmatpush1.msra.mxu0 0.0
        %1836 = vmatprep.subr.mxu0 0.0
        %1837 = vmatpush1.msra.mxu0 0.0
        %1838 = vmatprep.subr.mxu0 0.0
        %1839 = vmatpush1.msra.mxu0 0.0
        %1840 = vmatprep.subr.mxu0 0.0
        %1841 = vmatpush1.msra.mxu0 0.0
        %1842 = vmatprep.subr.mxu0 0.0
        %1843 = vmatpush1.msra.mxu0 0.0
        %1844 = vmatprep.subr.mxu0 0.0
        %1845 = vmatpush1.msra.mxu0 0.0
        %1846 = vmatprep.subr.mxu0 0.0
        %1847 = vmatpush1.msra.mxu0 0.0
        %1848 = vmatprep.subr.mxu0 0.0
        %1849 = vmatpush1.msra.mxu0 0.0
        %1850 = vmatprep.subr.mxu0 0.0
        %1851 = vmatpush1.msra.mxu0 0.0
        %1852 = vmatprep.subr.mxu0 0.0
        %1853 = vmatpush1.msra.mxu0 0.0
        %1854 = vmatprep.subr.mxu0 0.0
        %1855 = vmatpush1.msra.mxu0 0.0
        %1856 = vmatprep.subr.mxu0 0.0
        %1857 = vmatpush1.msra.mxu0 0.0
        %1858 = vmatprep.subr.mxu0 0.0
        %1859 = vmatpush1.msra.mxu0 0.0
        %1860 = vmatprep.mubr.f32.mxu0 0.0
        %1861 = vmatmul.mubr.f32.gmra.mrb[0].mxu0 %v1794
        %v1862 = vpop.f32.mrb[0].mxu0
        %v1863 = vadd.f32 0.0, %v1862
        %v1864 = vpop.f32.mrb[0].mxu0
        %1865 = vdwg.mxu0
        %v1866 = vadd.f32 %v1780, %v1863
        %s1867 = scalar_lea.vmem %s5, 288
        %v1868 = vld [vmem:[%s1867] sm:$0xff]
        %v1869 = vld [vmem:[%s1867 + $0x8] sm:$0xff]
        %v1870 = vld [vmem:[%s1867 + $0x10] sm:$0xff]
        %v1871 = vld [vmem:[%s1867 + $0x18] sm:$0xff]
        %v1872 = vld [vmem:[%s1867 + $0x20] sm:$0xff]
        %v1873 = vld [vmem:[%s1867 + $0x28] sm:$0xff]
        %v1874 = vld [vmem:[%s1867 + $0x30] sm:$0xff]
        %v1875 = vld [vmem:[%s1867 + $0x38] sm:$0xff]
        %v1876 = vld [vmem:[%s1867 + $0x40] sm:$0xff]
        %v1877 = vrot.slane %v1524, 4
        %v1878 = vrot.slane %v1525, 4
        %v1879 = vsel %vm592, %v1877, %v1878
        %v1880 = vsel %vm1550, %v1879, 0
        %1882 = vmatprep.subr.mxu0 0.0
        %1883 = vmatpush1.msra.mxu0 %v1868
        %1884 = vmatprep.subr.mxu0 0.0
        %1885 = vmatpush1.msra.mxu0 %v1869
        %1886 = vmatprep.subr.mxu0 0.0
        %1887 = vmatpush1.msra.mxu0 %v1870
        %1888 = vmatprep.subr.mxu0 0.0
        %1889 = vmatpush1.msra.mxu0 %v1871
        %1890 = vmatprep.subr.mxu0 0.0
        %1891 = vmatpush1.msra.mxu0 %v1872
        %1892 = vmatprep.subr.mxu0 0.0
        %1893 = vmatpush1.msra.mxu0 %v1873
        %1894 = vmatprep.subr.mxu0 0.0
        %1895 = vmatpush1.msra.mxu0 %v1874
        %1896 = vmatprep.subr.mxu0 0.0
        %1897 = vmatpush1.msra.mxu0 %v1875
        %1898 = vmatprep.subr.mxu0 0.0
        %1899 = vmatpush1.msra.mxu0 %v1876
        %1900 = vmatprep.subr.mxu0 0.0
        %1901 = vmatpush1.msra.mxu0 0.0
        %1902 = vmatprep.subr.mxu0 0.0
        %1903 = vmatpush1.msra.mxu0 0.0
        %1904 = vmatprep.subr.mxu0 0.0
        %1905 = vmatpush1.msra.mxu0 0.0
        %1906 = vmatprep.subr.mxu0 0.0
        %1907 = vmatpush1.msra.mxu0 0.0
        %1908 = vmatprep.subr.mxu0 0.0
        %1909 = vmatpush1.msra.mxu0 0.0
        %1910 = vmatprep.subr.mxu0 0.0
        %1911 = vmatpush1.msra.mxu0 0.0
        %1912 = vmatprep.subr.mxu0 0.0
        %1913 = vmatpush1.msra.mxu0 0.0
        %1914 = vmatprep.subr.mxu0 0.0
        %1915 = vmatpush1.msra.mxu0 0.0
        %1916 = vmatprep.subr.mxu0 0.0
        %1917 = vmatpush1.msra.mxu0 0.0
        %1918 = vmatprep.subr.mxu0 0.0
        %1919 = vmatpush1.msra.mxu0 0.0
        %1920 = vmatprep.subr.mxu0 0.0
        %1921 = vmatpush1.msra.mxu0 0.0
        %1922 = vmatprep.subr.mxu0 0.0
        %1923 = vmatpush1.msra.mxu0 0.0
        %1924 = vmatprep.subr.mxu0 0.0
        %1925 = vmatpush1.msra.mxu0 0.0
        %1926 = vmatprep.subr.mxu0 0.0
        %1927 = vmatpush1.msra.mxu0 0.0
        %1928 = vmatprep.subr.mxu0 0.0
        %1929 = vmatpush1.msra.mxu0 0.0
        %1930 = vmatprep.subr.mxu0 0.0
        %1931 = vmatpush1.msra.mxu0 0.0
        %1932 = vmatprep.subr.mxu0 0.0
        %1933 = vmatpush1.msra.mxu0 0.0
        %1934 = vmatprep.subr.mxu0 0.0
        %1935 = vmatpush1.msra.mxu0 0.0
        %1936 = vmatprep.subr.mxu0 0.0
        %1937 = vmatpush1.msra.mxu0 0.0
        %1938 = vmatprep.subr.mxu0 0.0
        %1939 = vmatpush1.msra.mxu0 0.0
        %1940 = vmatprep.subr.mxu0 0.0
        %1941 = vmatpush1.msra.mxu0 0.0
        %1942 = vmatprep.subr.mxu0 0.0
        %1943 = vmatpush1.msra.mxu0 0.0
        %1944 = vmatprep.subr.mxu0 0.0
        %1945 = vmatpush1.msra.mxu0 0.0
        %1946 = vmatprep.mubr.f32.mxu0 0.0
        %1947 = vmatmul.mubr.f32.gmra.mrb[0].mxu0 %v1880
        %v1948 = vpop.f32.mrb[0].mxu0
        %v1949 = vadd.f32 0.0, %v1948
        %v1950 = vpop.f32.mrb[0].mxu0
        %1951 = vdwg.mxu0
        %v1952 = vadd.f32 %v1866, %v1949
        %v1953 = vld [vmem:[%s6] sm:$0x1]
        %v1955 = vlaneseq
        %v1956 = vshrl.u32 %v1955, 7
        %v1957 = vsub.s32 0, %v1956
        %v1958 = vrot.slane %v1953, %v1957
        %v1960 = vadd.f32 %v1952, %v1958
        %v1961 = vmax.f32 %v1960, 0.0
        %v1962 = vld [vmem:[%s7] sm:$0xf]
        %vm1963 = vcmask 64512
        %v1965 = vsel %vm1963, %v1962, 0
        %1967 = vmatprep.subr.mxu0 0.0
        %1968 = vmatpush1.msra.mxu0 %v1961
        %1969 = vmatprep.subr.mxu0 0.0
        %1970 = vmatpush1.msra.mxu0 0.0
        %1971 = vmatprep.subr.mxu0 0.0
        %1972 = vmatpush1.msra.mxu0 0.0
        %1973 = vmatprep.subr.mxu0 0.0
        %1974 = vmatpush1.msra.mxu0 0.0
        %1975 = vmatprep.subr.mxu0 0.0
        %1976 = vmatpush1.msra.mxu0 0.0
        %1977 = vmatprep.subr.mxu0 0.0
        %1978 = vmatpush1.msra.mxu0 0.0
        %1979 = vmatprep.subr.mxu0 0.0
        %1980 = vmatpush1.msra.mxu0 0.0
        %1981 = vmatprep.subr.mxu0 0.0
        %1982 = vmatpush1.msra.mxu0 0.0
        %1983 = vmatprep.subr.mxu0 0.0
        %1984 = vmatpush1.msra.mxu0 0.0
        %1985 = vmatprep.subr.mxu0 0.0
        %1986 = vmatpush1.msra.mxu0 0.0
        %1987 = vmatprep.subr.mxu0 0.0
        %1988 = vmatpush1.msra.mxu0 0.0
        %1989 = vmatprep.subr.mxu0 0.0
        %1990 = vmatpush1.msra.mxu0 0.0
        %1991 = vmatprep.subr.mxu0 0.0
        %1992 = vmatpush1.msra.mxu0 0.0
        %1993 = vmatprep.subr.mxu0 0.0
        %1994 = vmatpush1.msra.mxu0 0.0
        %1995 = vmatprep.subr.mxu0 0.0
        %1996 = vmatpush1.msra.mxu0 0.0
        %1997 = vmatprep.subr.mxu0 0.0
        %1998 = vmatpush1.msra.mxu0 0.0
        %1999 = vmatprep.subr.mxu0 0.0
        %2000 = vmatpush1.msra.mxu0 0.0
        %2001 = vmatprep.subr.mxu0 0.0
        %2002 = vmatpush1.msra.mxu0 0.0
        %2003 = vmatprep.subr.mxu0 0.0
        %2004 = vmatpush1.msra.mxu0 0.0
        %2005 = vmatprep.subr.mxu0 0.0
        %2006 = vmatpush1.msra.mxu0 0.0
        %2007 = vmatprep.subr.mxu0 0.0
        %2008 = vmatpush1.msra.mxu0 0.0
        %2009 = vmatprep.subr.mxu0 0.0
        %2010 = vmatpush1.msra.mxu0 0.0
        %2011 = vmatprep.subr.mxu0 0.0
        %2012 = vmatpush1.msra.mxu0 0.0
        %2013 = vmatprep.subr.mxu0 0.0
        %2014 = vmatpush1.msra.mxu0 0.0
        %2015 = vmatprep.subr.mxu0 0.0
        %2016 = vmatpush1.msra.mxu0 0.0
        %2017 = vmatprep.subr.mxu0 0.0
        %2018 = vmatpush1.msra.mxu0 0.0
        %2019 = vmatprep.subr.mxu0 0.0
        %2020 = vmatpush1.msra.mxu0 0.0
        %2021 = vmatprep.subr.mxu0 0.0
        %2022 = vmatpush1.msra.mxu0 0.0
        %2023 = vmatprep.subr.mxu0 0.0
        %2024 = vmatpush1.msra.mxu0 0.0
        %2025 = vmatprep.subr.mxu0 0.0
        %2026 = vmatpush1.msra.mxu0 0.0
        %2027 = vmatprep.subr.mxu0 0.0
        %2028 = vmatpush1.msra.mxu0 0.0
        %2029 = vmatprep.subr.mxu0 0.0
        %2030 = vmatpush1.msra.mxu0 0.0
        %2031 = vmatprep.mubr.f32.mxu0 0.0
        %2032 = vmatmul.mubr.f32.gmra.mrb[0].mxu0 %v1965
        %v2033 = vpop.f32.mrb[0].mxu0
        %v2034 = vadd.f32 0.0, %v2033
        %v2035 = vpop.f32.mrb[0].mxu0
        %2036 = vdwg.mxu0
        %s2037 = scalar_lea.vmem %s7, 4
        %v2038 = vld [vmem:[%s2037] sm:$0xf]
        %v2040 = vsel %vm1963, %v2038, 0
        %2042 = vmatprep.subr.mxu0 0.0
        %2043 = vmatpush1.msra.mxu0 %v1961
        %2044 = vmatprep.subr.mxu0 0.0
        %2045 = vmatpush1.msra.mxu0 0.0
        %2046 = vmatprep.subr.mxu0 0.0
        %2047 = vmatpush1.msra.mxu0 0.0
        %2048 = vmatprep.subr.mxu0 0.0
        %2049 = vmatpush1.msra.mxu0 0.0
        %2050 = vmatprep.subr.mxu0 0.0
        %2051 = vmatpush1.msra.mxu0 0.0
        %2052 = vmatprep.subr.mxu0 0.0
        %2053 = vmatpush1.msra.mxu0 0.0
        %2054 = vmatprep.subr.mxu0 0.0
        %2055 = vmatpush1.msra.mxu0 0.0
        %2056 = vmatprep.subr.mxu0 0.0
        %2057 = vmatpush1.msra.mxu0 0.0
        %2058 = vmatprep.subr.mxu0 0.0
        %2059 = vmatpush1.msra.mxu0 0.0
        %2060 = vmatprep.subr.mxu0 0.0
        %2061 = vmatpush1.msra.mxu0 0.0
        %2062 = vmatprep.subr.mxu0 0.0
        %2063 = vmatpush1.msra.mxu0 0.0
        %2064 = vmatprep.subr.mxu0 0.0
        %2065 = vmatpush1.msra.mxu0 0.0
        %2066 = vmatprep.subr.mxu0 0.0
        %2067 = vmatpush1.msra.mxu0 0.0
        %2068 = vmatprep.subr.mxu0 0.0
        %2069 = vmatpush1.msra.mxu0 0.0
        %2070 = vmatprep.subr.mxu0 0.0
        %2071 = vmatpush1.msra.mxu0 0.0
        %2072 = vmatprep.subr.mxu0 0.0
        %2073 = vmatpush1.msra.mxu0 0.0
        %2074 = vmatprep.subr.mxu0 0.0
        %2075 = vmatpush1.msra.mxu0 0.0
        %2076 = vmatprep.subr.mxu0 0.0
        %2077 = vmatpush1.msra.mxu0 0.0
        %2078 = vmatprep.subr.mxu0 0.0
        %2079 = vmatpush1.msra.mxu0 0.0
        %2080 = vmatprep.subr.mxu0 0.0
        %2081 = vmatpush1.msra.mxu0 0.0
        %2082 = vmatprep.subr.mxu0 0.0
        %2083 = vmatpush1.msra.mxu0 0.0
        %2084 = vmatprep.subr.mxu0 0.0
        %2085 = vmatpush1.msra.mxu0 0.0
        %2086 = vmatprep.subr.mxu0 0.0
        %2087 = vmatpush1.msra.mxu0 0.0
        %2088 = vmatprep.subr.mxu0 0.0
        %2089 = vmatpush1.msra.mxu0 0.0
        %2090 = vmatprep.subr.mxu0 0.0
        %2091 = vmatpush1.msra.mxu0 0.0
        %2092 = vmatprep.subr.mxu0 0.0
        %2093 = vmatpush1.msra.mxu0 0.0
        %2094 = vmatprep.subr.mxu0 0.0
        %2095 = vmatpush1.msra.mxu0 0.0
        %2096 = vmatprep.subr.mxu0 0.0
        %2097 = vmatpush1.msra.mxu0 0.0
        %2098 = vmatprep.subr.mxu0 0.0
        %2099 = vmatpush1.msra.mxu0 0.0
        %2100 = vmatprep.subr.mxu0 0.0
        %2101 = vmatpush1.msra.mxu0 0.0
        %2102 = vmatprep.subr.mxu0 0.0
        %2103 = vmatpush1.msra.mxu0 0.0
        %2104 = vmatprep.subr.mxu0 0.0
        %2105 = vmatpush1.msra.mxu0 0.0
        %2106 = vmatprep.mubr.f32.mxu0 0.0
        %2107 = vmatmul.mubr.f32.gmra.mrb[0].mxu0 %v2040
        %v2108 = vpop.f32.mrb[0].mxu0
        %v2109 = vadd.f32 0.0, %v2108
        %v2110 = vpop.f32.mrb[0].mxu0
        %2111 = vdwg.mxu0
        %v2112 = vmax.f32 %v2034, %v2109
        %v2113 = vld [vmem:[%s8] sm:$0xff]
        %v2114 = vld [vmem:[%s8 + $0x8] sm:$0xff]
        %v2115 = vld [vmem:[%s8 + $0x10] sm:$0xff]
        %v2116 = vld [vmem:[%s8 + $0x18] sm:$0xff]
        %v2117 = vld [vmem:[%s8 + $0x20] sm:$0xff]
        %v2118 = vld [vmem:[%s8 + $0x28] sm:$0xff]
        %v2119 = vld [vmem:[%s8 + $0x30] sm:$0xff]
        %v2120 = vld [vmem:[%s8 + $0x38] sm:$0xff]
        %v2121 = vld [vmem:[%s8 + $0x40] sm:$0xff]
        %v2122 = vld [vmem:[%s8 + $0x48] sm:$0xff]
        %v2123 = vld [vmem:[%s8 + $0x50] sm:$0xff]
        %v2124 = vld [vmem:[%s8 + $0x58] sm:$0xff]
        %v2125 = vld [vmem:[%s8 + $0x60] sm:$0xff]
        %v2126 = vld [vmem:[%s8 + $0x68] sm:$0xff]
        %v2127 = vld [vmem:[%s8 + $0x70] sm:$0xff]
        %v2128 = vld [vmem:[%s8 + $0x78] sm:$0xff]
        %2129 = vmatprep.subr.mxu0 0.0
        %2130 = vmatpush1.msra.mxu0 %v2113
        %2131 = vmatprep.subr.mxu0 0.0
        %2132 = vmatpush1.msra.mxu0 %v2114
        %2133 = vmatprep.subr.mxu0 0.0
        %2134 = vmatpush1.msra.mxu0 %v2115
        %2135 = vmatprep.subr.mxu0 0.0
        %2136 = vmatpush1.msra.mxu0 %v2116
        %2137 = vmatprep.subr.mxu0 0.0
        %2138 = vmatpush1.msra.mxu0 %v2117
        %2139 = vmatprep.subr.mxu0 0.0
        %2140 = vmatpush1.msra.mxu0 %v2118
        %2141 = vmatprep.subr.mxu0 0.0
        %2142 = vmatpush1.msra.mxu0 %v2119
        %2143 = vmatprep.subr.mxu0 0.0
        %2144 = vmatpush1.msra.mxu0 %v2120
        %2145 = vmatprep.subr.mxu0 0.0
        %2146 = vmatpush1.msra.mxu0 %v2121
        %2147 = vmatprep.subr.mxu0 0.0
        %2148 = vmatpush1.msra.mxu0 %v2122
        %2149 = vmatprep.subr.mxu0 0.0
        %2150 = vmatpush1.msra.mxu0 %v2123
        %2151 = vmatprep.subr.mxu0 0.0
        %2152 = vmatpush1.msra.mxu0 %v2124
        %2153 = vmatprep.subr.mxu0 0.0
        %2154 = vmatpush1.msra.mxu0 %v2125
        %2155 = vmatprep.subr.mxu0 0.0
        %2156 = vmatpush1.msra.mxu0 %v2126
        %2157 = vmatprep.subr.mxu0 0.0
        %2158 = vmatpush1.msra.mxu0 %v2127
        %2159 = vmatprep.subr.mxu0 0.0
        %2160 = vmatpush1.msra.mxu0 %v2128
        %2161 = vmatprep.subr.mxu0 0.0
        %2162 = vmatpush1.msra.mxu0 0.0
        %2163 = vmatprep.subr.mxu0 0.0
        %2164 = vmatpush1.msra.mxu0 0.0
        %2165 = vmatprep.subr.mxu0 0.0
        %2166 = vmatpush1.msra.mxu0 0.0
        %2167 = vmatprep.subr.mxu0 0.0
        %2168 = vmatpush1.msra.mxu0 0.0
        %2169 = vmatprep.subr.mxu0 0.0
        %2170 = vmatpush1.msra.mxu0 0.0
        %2171 = vmatprep.subr.mxu0 0.0
        %2172 = vmatpush1.msra.mxu0 0.0
        %2173 = vmatprep.subr.mxu0 0.0
        %2174 = vmatpush1.msra.mxu0 0.0
        %2175 = vmatprep.subr.mxu0 0.0
        %2176 = vmatpush1.msra.mxu0 0.0
        %2177 = vmatprep.subr.mxu0 0.0
        %2178 = vmatpush1.msra.mxu0 0.0
        %2179 = vmatprep.subr.mxu0 0.0
        %2180 = vmatpush1.msra.mxu0 0.0
        %2181 = vmatprep.subr.mxu0 0.0
        %2182 = vmatpush1.msra.mxu0 0.0
        %2183 = vmatprep.subr.mxu0 0.0
        %2184 = vmatpush1.msra.mxu0 0.0
        %2185 = vmatprep.subr.mxu0 0.0
        %2186 = vmatpush1.msra.mxu0 0.0
        %2187 = vmatprep.subr.mxu0 0.0
        %2188 = vmatpush1.msra.mxu0 0.0
        %2189 = vmatprep.subr.mxu0 0.0
        %2190 = vmatpush1.msra.mxu0 0.0
        %2191 = vmatprep.subr.mxu0 0.0
        %2192 = vmatpush1.msra.mxu0 0.0
        %2193 = vmatprep.mubr.f32.mxu0 0.0
        %2194 = vmatmul.mubr.f32.gmra.mrb[0].mxu0 %v2112
        %v2195 = vpop.f32.mrb[0].mxu0
        %v2196 = vadd.f32 0.0, %v2195
        %v2197 = vpop.f32.mrb[0].mxu0
        %2198 = vdwg.mxu0
        %s2199 = scalar_lea.vmem %s8, 128
        %v2200 = vld [vmem:[%s2199] sm:$0xff]
        %v2201 = vld [vmem:[%s2199 + $0x8] sm:$0xff]
        %v2202 = vld [vmem:[%s2199 + $0x10] sm:$0xff]
        %v2203 = vld [vmem:[%s2199 + $0x18] sm:$0xff]
        %v2204 = vld [vmem:[%s2199 + $0x20] sm:$0xff]
        %v2205 = vld [vmem:[%s2199 + $0x28] sm:$0xff]
        %v2206 = vld [vmem:[%s2199 + $0x30] sm:$0xff]
        %v2207 = vld [vmem:[%s2199 + $0x38] sm:$0xff]
        %v2208 = vld [vmem:[%s2199 + $0x40] sm:$0xff]
        %v2209 = vld [vmem:[%s2199 + $0x48] sm:$0xff]
        %v2210 = vld [vmem:[%s2199 + $0x50] sm:$0xff]
        %v2211 = vld [vmem:[%s2199 + $0x58] sm:$0xff]
        %v2212 = vld [vmem:[%s2199 + $0x60] sm:$0xff]
        %v2213 = vld [vmem:[%s2199 + $0x68] sm:$0xff]
        %v2214 = vld [vmem:[%s2199 + $0x70] sm:$0xff]
        %v2215 = vld [vmem:[%s2199 + $0x78] sm:$0xff]
        %2216 = vmatprep.subr.mxu0 0.0
        %2217 = vmatpush1.msra.mxu0 %v2200
        %2218 = vmatprep.subr.mxu0 0.0
        %2219 = vmatpush1.msra.mxu0 %v2201
        %2220 = vmatprep.subr.mxu0 0.0
        %2221 = vmatpush1.msra.mxu0 %v2202
        %2222 = vmatprep.subr.mxu0 0.0
        %2223 = vmatpush1.msra.mxu0 %v2203
        %2224 = vmatprep.subr.mxu0 0.0
        %2225 = vmatpush1.msra.mxu0 %v2204
        %2226 = vmatprep.subr.mxu0 0.0
        %2227 = vmatpush1.msra.mxu0 %v2205
        %2228 = vmatprep.subr.mxu0 0.0
        %2229 = vmatpush1.msra.mxu0 %v2206
        %2230 = vmatprep.subr.mxu0 0.0
        %2231 = vmatpush1.msra.mxu0 %v2207
        %2232 = vmatprep.subr.mxu0 0.0
        %2233 = vmatpush1.msra.mxu0 %v2208
        %2234 = vmatprep.subr.mxu0 0.0
        %2235 = vmatpush1.msra.mxu0 %v2209
        %2236 = vmatprep.subr.mxu0 0.0
        %2237 = vmatpush1.msra.mxu0 %v2210
        %2238 = vmatprep.subr.mxu0 0.0
        %2239 = vmatpush1.msra.mxu0 %v2211
        %2240 = vmatprep.subr.mxu0 0.0
        %2241 = vmatpush1.msra.mxu0 %v2212
        %2242 = vmatprep.subr.mxu0 0.0
        %2243 = vmatpush1.msra.mxu0 %v2213
        %2244 = vmatprep.subr.mxu0 0.0
        %2245 = vmatpush1.msra.mxu0 %v2214
        %2246 = vmatprep.subr.mxu0 0.0
        %2247 = vmatpush1.msra.mxu0 %v2215
        %2248 = vmatprep.subr.mxu0 0.0
        %2249 = vmatpush1.msra.mxu0 0.0
        %2250 = vmatprep.subr.mxu0 0.0
        %2251 = vmatpush1.msra.mxu0 0.0
        %2252 = vmatprep.subr.mxu0 0.0
        %2253 = vmatpush1.msra.mxu0 0.0
        %2254 = vmatprep.subr.mxu0 0.0
        %2255 = vmatpush1.msra.mxu0 0.0
        %2256 = vmatprep.subr.mxu0 0.0
        %2257 = vmatpush1.msra.mxu0 0.0
        %2258 = vmatprep.subr.mxu0 0.0
        %2259 = vmatpush1.msra.mxu0 0.0
        %2260 = vmatprep.subr.mxu0 0.0
        %2261 = vmatpush1.msra.mxu0 0.0
        %2262 = vmatprep.subr.mxu0 0.0
        %2263 = vmatpush1.msra.mxu0 0.0
        %2264 = vmatprep.subr.mxu0 0.0
        %2265 = vmatpush1.msra.mxu0 0.0
        %2266 = vmatprep.subr.mxu0 0.0
        %2267 = vmatpush1.msra.mxu0 0.0
        %2268 = vmatprep.subr.mxu0 0.0
        %2269 = vmatpush1.msra.mxu0 0.0
        %2270 = vmatprep.subr.mxu0 0.0
        %2271 = vmatpush1.msra.mxu0 0.0
        %2272 = vmatprep.subr.mxu0 0.0
        %2273 = vmatpush1.msra.mxu0 0.0
        %2274 = vmatprep.subr.mxu0 0.0
        %2275 = vmatpush1.msra.mxu0 0.0
        %2276 = vmatprep.subr.mxu0 0.0
        %2277 = vmatpush1.msra.mxu0 0.0
        %2278 = vmatprep.subr.mxu0 0.0
        %2279 = vmatpush1.msra.mxu0 0.0
        %2280 = vmatprep.mubr.f32.mxu0 0.0
        %2281 = vmatmul.mubr.f32.gmra.mrb[0].mxu0 %v2112
        %v2282 = vpop.f32.mrb[0].mxu0
        %v2283 = vadd.f32 0.0, %v2282
        %v2284 = vpop.f32.mrb[0].mxu0
        %2285 = vdwg.mxu0
        %v2286 = vmax.f32 %v2196, %v2283
        %v2287 = vld [vmem:[%s10] sm:$0x1]
        %v2288 = vld [vmem:[#allocation4] sm:$0xff]
        %v2289 = vld [vmem:[#allocation4 + $0x8] sm:$0xff]
        %v2290 = vld [vmem:[#allocation4 + $0x10] sm:$0xff]
        %v2291 = vld [vmem:[#allocation4 + $0x18] sm:$0xff]
        %v2292 = vld [vmem:[#allocation4 + $0x20] sm:$0xff]
        %v2293 = vld [vmem:[#allocation4 + $0x28] sm:$0xff]
        %v2294 = vld [vmem:[#allocation4 + $0x30] sm:$0xff]
        %v2295 = vld [vmem:[#allocation4 + $0x38] sm:$0xff]
        %vm2296 = vcmask 523264
        %v2298 = vsel %vm2296, %v2286, 0
        %2300 = vmatprep.subr.mxu0 0.0
        %2301 = vmatpush1.msra.mxu0 %v2288
        %2302 = vmatprep.subr.mxu0 0.0
        %2303 = vmatpush1.msra.mxu0 %v2289
        %2304 = vmatprep.subr.mxu0 0.0
        %2305 = vmatpush1.msra.mxu0 %v2290
        %2306 = vmatprep.subr.mxu0 0.0
        %2307 = vmatpush1.msra.mxu0 %v2291
        %2308 = vmatprep.subr.mxu0 0.0
        %2309 = vmatpush1.msra.mxu0 %v2292
        %2310 = vmatprep.subr.mxu0 0.0
        %2311 = vmatpush1.msra.mxu0 %v2293
        %2312 = vmatprep.subr.mxu0 0.0
        %2313 = vmatpush1.msra.mxu0 %v2294
        %2314 = vmatprep.subr.mxu0 0.0
        %2315 = vmatpush1.msra.mxu0 %v2295
        %2316 = vmatprep.subr.mxu0 0.0
        %2317 = vmatpush1.msra.mxu0 0.0
        %2318 = vmatprep.subr.mxu0 0.0
        %2319 = vmatpush1.msra.mxu0 0.0
        %2320 = vmatprep.subr.mxu0 0.0
        %2321 = vmatpush1.msra.mxu0 0.0
        %2322 = vmatprep.subr.mxu0 0.0
        %2323 = vmatpush1.msra.mxu0 0.0
        %2324 = vmatprep.subr.mxu0 0.0
        %2325 = vmatpush1.msra.mxu0 0.0
        %2326 = vmatprep.subr.mxu0 0.0
        %2327 = vmatpush1.msra.mxu0 0.0
        %2328 = vmatprep.subr.mxu0 0.0
        %2329 = vmatpush1.msra.mxu0 0.0
        %2330 = vmatprep.subr.mxu0 0.0
        %2331 = vmatpush1.msra.mxu0 0.0
        %2332 = vmatprep.subr.mxu0 0.0
        %2333 = vmatpush1.msra.mxu0 0.0
        %2334 = vmatprep.subr.mxu0 0.0
        %2335 = vmatpush1.msra.mxu0 0.0
        %2336 = vmatprep.subr.mxu0 0.0
        %2337 = vmatpush1.msra.mxu0 0.0
        %2338 = vmatprep.subr.mxu0 0.0
        %2339 = vmatpush1.msra.mxu0 0.0
        %2340 = vmatprep.subr.mxu0 0.0
        %2341 = vmatpush1.msra.mxu0 0.0
        %2342 = vmatprep.subr.mxu0 0.0
        %2343 = vmatpush1.msra.mxu0 0.0
        %2344 = vmatprep.subr.mxu0 0.0
        %2345 = vmatpush1.msra.mxu0 0.0
        %2346 = vmatprep.subr.mxu0 0.0
        %2347 = vmatpush1.msra.mxu0 0.0
        %2348 = vmatprep.subr.mxu0 0.0
        %2349 = vmatpush1.msra.mxu0 0.0
        %2350 = vmatprep.subr.mxu0 0.0
        %2351 = vmatpush1.msra.mxu0 0.0
        %2352 = vmatprep.subr.mxu0 0.0
        %2353 = vmatpush1.msra.mxu0 0.0
        %2354 = vmatprep.subr.mxu0 0.0
        %2355 = vmatpush1.msra.mxu0 0.0
        %2356 = vmatprep.subr.mxu0 0.0
        %2357 = vmatpush1.msra.mxu0 0.0
        %2358 = vmatprep.subr.mxu0 0.0
        %2359 = vmatpush1.msra.mxu0 0.0
        %2360 = vmatprep.subr.mxu0 0.0
        %2361 = vmatpush1.msra.mxu0 0.0
        %2362 = vmatprep.subr.mxu0 0.0
        %2363 = vmatpush1.msra.mxu0 0.0
        %2364 = vmatprep.mubr.f32.mxu0 0.0
        %2365 = vmatmul.mubr.f32.gmra.mrb[0].mxu0 %v2298
        %v2366 = vpop.f32.mrb[0].mxu0
        %v2367 = vadd.f32 0.0, %v2366
        %v2368 = vpop.f32.mrb[0].mxu0
        %2369 = vdwg.mxu0
        %v2370 = vadd.f32 %v2287, %v2367
        %s2371 = scalar_lea.vmem [#allocation4], 64
        %v2372 = vld [vmem:[%s2371] sm:$0xff]
        %v2373 = vld [vmem:[%s2371 + $0x8] sm:$0xff]
        %v2374 = vld [vmem:[%s2371 + $0x10] sm:$0xff]
        %v2375 = vld [vmem:[%s2371 + $0x18] sm:$0xff]
        %v2376 = vld [vmem:[%s2371 + $0x20] sm:$0xff]
        %v2377 = vld [vmem:[%s2371 + $0x28] sm:$0xff]
        %v2378 = vld [vmem:[%s2371 + $0x30] sm:$0xff]
        %v2379 = vld [vmem:[%s2371 + $0x38] sm:$0xff]
        %v2380 = vrot.slane %v2286, 1
        %v2381 = vsel %vm2296, %v2380, 0
        %2383 = vmatprep.subr.mxu0 0.0
        %2384 = vmatpush1.msra.mxu0 %v2372
        %2385 = vmatprep.subr.mxu0 0.0
        %2386 = vmatpush1.msra.mxu0 %v2373
        %2387 = vmatprep.subr.mxu0 0.0
        %2388 = vmatpush1.msra.mxu0 %v2374
        %2389 = vmatprep.subr.mxu0 0.0
        %2390 = vmatpush1.msra.mxu0 %v2375
        %2391 = vmatprep.subr.mxu0 0.0
        %2392 = vmatpush1.msra.mxu0 %v2376
        %2393 = vmatprep.subr.mxu0 0.0
        %2394 = vmatpush1.msra.mxu0 %v2377
        %2395 = vmatprep.subr.mxu0 0.0
        %2396 = vmatpush1.msra.mxu0 %v2378
        %2397 = vmatprep.subr.mxu0 0.0
        %2398 = vmatpush1.msra.mxu0 %v2379
        %2399 = vmatprep.subr.mxu0 0.0
        %2400 = vmatpush1.msra.mxu0 0.0
        %2401 = vmatprep.subr.mxu0 0.0
        %2402 = vmatpush1.msra.mxu0 0.0
        %2403 = vmatprep.subr.mxu0 0.0
        %2404 = vmatpush1.msra.mxu0 0.0
        %2405 = vmatprep.subr.mxu0 0.0
        %2406 = vmatpush1.msra.mxu0 0.0
        %2407 = vmatprep.subr.mxu0 0.0
        %2408 = vmatpush1.msra.mxu0 0.0
        %2409 = vmatprep.subr.mxu0 0.0
        %2410 = vmatpush1.msra.mxu0 0.0
        %2411 = vmatprep.subr.mxu0 0.0
        %2412 = vmatpush1.msra.mxu0 0.0
        %2413 = vmatprep.subr.mxu0 0.0
        %2414 = vmatpush1.msra.mxu0 0.0
        %2415 = vmatprep.subr.mxu0 0.0
        %2416 = vmatpush1.msra.mxu0 0.0
        %2417 = vmatprep.subr.mxu0 0.0
        %2418 = vmatpush1.msra.mxu0 0.0
        %2419 = vmatprep.subr.mxu0 0.0
        %2420 = vmatpush1.msra.mxu0 0.0
        %2421 = vmatprep.subr.mxu0 0.0
        %2422 = vmatpush1.msra.mxu0 0.0
        %2423 = vmatprep.subr.mxu0 0.0
        %2424 = vmatpush1.msra.mxu0 0.0
        %2425 = vmatprep.subr.mxu0 0.0
        %2426 = vmatpush1.msra.mxu0 0.0
        %2427 = vmatprep.subr.mxu0 0.0
        %2428 = vmatpush1.msra.mxu0 0.0
        %2429 = vmatprep.subr.mxu0 0.0
        %2430 = vmatpush1.msra.mxu0 0.0
        %2431 = vmatprep.subr.mxu0 0.0
        %2432 = vmatpush1.msra.mxu0 0.0
        %2433 = vmatprep.subr.mxu0 0.0
        %2434 = vmatpush1.msra.mxu0 0.0
        %2435 = vmatprep.subr.mxu0 0.0
        %2436 = vmatpush1.msra.mxu0 0.0
        %2437 = vmatprep.subr.mxu0 0.0
        %2438 = vmatpush1.msra.mxu0 0.0
        %2439 = vmatprep.subr.mxu0 0.0
        %2440 = vmatpush1.msra.mxu0 0.0
        %2441 = vmatprep.subr.mxu0 0.0
        %2442 = vmatpush1.msra.mxu0 0.0
        %2443 = vmatprep.subr.mxu0 0.0
        %2444 = vmatpush1.msra.mxu0 0.0
        %2445 = vmatprep.subr.mxu0 0.0
        %2446 = vmatpush1.msra.mxu0 0.0
        %2447 = vmatprep.mubr.f32.mxu0 0.0
        %2448 = vmatmul.mubr.f32.gmra.mrb[0].mxu0 %v2381
        %v2449 = vpop.f32.mrb[0].mxu0
        %v2450 = vadd.f32 0.0, %v2449
        %v2451 = vpop.f32.mrb[0].mxu0
        %2452 = vdwg.mxu0
        %v2453 = vadd.f32 %v2370, %v2450
        %s2454 = scalar_lea.vmem [#allocation4], 128
        %v2455 = vld [vmem:[%s2454] sm:$0xff]
        %v2456 = vld [vmem:[%s2454 + $0x8] sm:$0xff]
        %v2457 = vld [vmem:[%s2454 + $0x10] sm:$0xff]
        %v2458 = vld [vmem:[%s2454 + $0x18] sm:$0xff]
        %v2459 = vld [vmem:[%s2454 + $0x20] sm:$0xff]
        %v2460 = vld [vmem:[%s2454 + $0x28] sm:$0xff]
        %v2461 = vld [vmem:[%s2454 + $0x30] sm:$0xff]
        %v2462 = vld [vmem:[%s2454 + $0x38] sm:$0xff]
        %v2463 = vrot.slane %v2286, 2
        %v2464 = vsel %vm2296, %v2463, 0
        %2466 = vmatprep.subr.mxu0 0.0
        %2467 = vmatpush1.msra.mxu0 %v2455
        %2468 = vmatprep.subr.mxu0 0.0
        %2469 = vmatpush1.msra.mxu0 %v2456
        %2470 = vmatprep.subr.mxu0 0.0
        %2471 = vmatpush1.msra.mxu0 %v2457
        %2472 = vmatprep.subr.mxu0 0.0
        %2473 = vmatpush1.msra.mxu0 %v2458
        %2474 = vmatprep.subr.mxu0 0.0
        %2475 = vmatpush1.msra.mxu0 %v2459
        %2476 = vmatprep.subr.mxu0 0.0
        %2477 = vmatpush1.msra.mxu0 %v2460
        %2478 = vmatprep.subr.mxu0 0.0
        %2479 = vmatpush1.msra.mxu0 %v2461
        %2480 = vmatprep.subr.mxu0 0.0
        %2481 = vmatpush1.msra.mxu0 %v2462
        %2482 = vmatprep.subr.mxu0 0.0
        %2483 = vmatpush1.msra.mxu0 0.0
        %2484 = vmatprep.subr.mxu0 0.0
        %2485 = vmatpush1.msra.mxu0 0.0
        %2486 = vmatprep.subr.mxu0 0.0
        %2487 = vmatpush1.msra.mxu0 0.0
        %2488 = vmatprep.subr.mxu0 0.0
        %2489 = vmatpush1.msra.mxu0 0.0
        %2490 = vmatprep.subr.mxu0 0.0
        %2491 = vmatpush1.msra.mxu0 0.0
        %2492 = vmatprep.subr.mxu0 0.0
        %2493 = vmatpush1.msra.mxu0 0.0
        %2494 = vmatprep.subr.mxu0 0.0
        %2495 = vmatpush1.msra.mxu0 0.0
        %2496 = vmatprep.subr.mxu0 0.0
        %2497 = vmatpush1.msra.mxu0 0.0
        %2498 = vmatprep.subr.mxu0 0.0
        %2499 = vmatpush1.msra.mxu0 0.0
        %2500 = vmatprep.subr.mxu0 0.0
        %2501 = vmatpush1.msra.mxu0 0.0
        %2502 = vmatprep.subr.mxu0 0.0
        %2503 = vmatpush1.msra.mxu0 0.0
        %2504 = vmatprep.subr.mxu0 0.0
        %2505 = vmatpush1.msra.mxu0 0.0
        %2506 = vmatprep.subr.mxu0 0.0
        %2507 = vmatpush1.msra.mxu0 0.0
        %2508 = vmatprep.subr.mxu0 0.0
        %2509 = vmatpush1.msra.mxu0 0.0
        %2510 = vmatprep.subr.mxu0 0.0
        %2511 = vmatpush1.msra.mxu0 0.0
        %2512 = vmatprep.subr.mxu0 0.0
        %2513 = vmatpush1.msra.mxu0 0.0
        %2514 = vmatprep.subr.mxu0 0.0
        %2515 = vmatpush1.msra.mxu0 0.0
        %2516 = vmatprep.subr.mxu0 0.0
        %2517 = vmatpush1.msra.mxu0 0.0
        %2518 = vmatprep.subr.mxu0 0.0
        %2519 = vmatpush1.msra.mxu0 0.0
        %2520 = vmatprep.subr.mxu0 0.0
        %2521 = vmatpush1.msra.mxu0 0.0
        %2522 = vmatprep.subr.mxu0 0.0
        %2523 = vmatpush1.msra.mxu0 0.0
        %2524 = vmatprep.subr.mxu0 0.0
        %2525 = vmatpush1.msra.mxu0 0.0
        %2526 = vmatprep.subr.mxu0 0.0
        %2527 = vmatpush1.msra.mxu0 0.0
        %2528 = vmatprep.subr.mxu0 0.0
        %2529 = vmatpush1.msra.mxu0 0.0
        %2530 = vmatprep.mubr.f32.mxu0 0.0
        %2531 = vmatmul.mubr.f32.gmra.mrb[0].mxu0 %v2464
        %v2532 = vpop.f32.mrb[0].mxu0
        %v2533 = vadd.f32 0.0, %v2532
        %v2534 = vpop.f32.mrb[0].mxu0
        %2535 = vdwg.mxu0
        %v2536 = vadd.f32 %v2453, %v2533
        %s2537 = scalar_lea.vmem [#allocation4], 192
        %v2538 = vld [vmem:[%s2537] sm:$0xff]
        %v2539 = vld [vmem:[%s2537 + $0x8] sm:$0xff]
        %v2540 = vld [vmem:[%s2537 + $0x10] sm:$0xff]
        %v2541 = vld [vmem:[%s2537 + $0x18] sm:$0xff]
        %v2542 = vld [vmem:[%s2537 + $0x20] sm:$0xff]
        %v2543 = vld [vmem:[%s2537 + $0x28] sm:$0xff]
        %v2544 = vld [vmem:[%s2537 + $0x30] sm:$0xff]
        %v2545 = vld [vmem:[%s2537 + $0x38] sm:$0xff]
        %v2546 = vrot.slane %v2286, 3
        %v2547 = vsel %vm2296, %v2546, 0
        %2549 = vmatprep.subr.mxu0 0.0
        %2550 = vmatpush1.msra.mxu0 %v2538
        %2551 = vmatprep.subr.mxu0 0.0
        %2552 = vmatpush1.msra.mxu0 %v2539
        %2553 = vmatprep.subr.mxu0 0.0
        %2554 = vmatpush1.msra.mxu0 %v2540
        %2555 = vmatprep.subr.mxu0 0.0
        %2556 = vmatpush1.msra.mxu0 %v2541
        %2557 = vmatprep.subr.mxu0 0.0
        %2558 = vmatpush1.msra.mxu0 %v2542
        %2559 = vmatprep.subr.mxu0 0.0
        %2560 = vmatpush1.msra.mxu0 %v2543
        %2561 = vmatprep.subr.mxu0 0.0
        %2562 = vmatpush1.msra.mxu0 %v2544
        %2563 = vmatprep.subr.mxu0 0.0
        %2564 = vmatpush1.msra.mxu0 %v2545
        %2565 = vmatprep.subr.mxu0 0.0
        %2566 = vmatpush1.msra.mxu0 0.0
        %2567 = vmatprep.subr.mxu0 0.0
        %2568 = vmatpush1.msra.mxu0 0.0
        %2569 = vmatprep.subr.mxu0 0.0
        %2570 = vmatpush1.msra.mxu0 0.0
        %2571 = vmatprep.subr.mxu0 0.0
        %2572 = vmatpush1.msra.mxu0 0.0
        %2573 = vmatprep.subr.mxu0 0.0
        %2574 = vmatpush1.msra.mxu0 0.0
        %2575 = vmatprep.subr.mxu0 0.0
        %2576 = vmatpush1.msra.mxu0 0.0
        %2577 = vmatprep.subr.mxu0 0.0
        %2578 = vmatpush1.msra.mxu0 0.0
        %2579 = vmatprep.subr.mxu0 0.0
        %2580 = vmatpush1.msra.mxu0 0.0
        %2581 = vmatprep.subr.mxu0 0.0
        %2582 = vmatpush1.msra.mxu0 0.0
        %2583 = vmatprep.subr.mxu0 0.0
        %2584 = vmatpush1.msra.mxu0 0.0
        %2585 = vmatprep.subr.mxu0 0.0
        %2586 = vmatpush1.msra.mxu0 0.0
        %2587 = vmatprep.subr.mxu0 0.0
        %2588 = vmatpush1.msra.mxu0 0.0
        %2589 = vmatprep.subr.mxu0 0.0
        %2590 = vmatpush1.msra.mxu0 0.0
        %2591 = vmatprep.subr.mxu0 0.0
        %2592 = vmatpush1.msra.mxu0 0.0
        %2593 = vmatprep.subr.mxu0 0.0
        %2594 = vmatpush1.msra.mxu0 0.0
        %2595 = vmatprep.subr.mxu0 0.0
        %2596 = vmatpush1.msra.mxu0 0.0
        %2597 = vmatprep.subr.mxu0 0.0
        %2598 = vmatpush1.msra.mxu0 0.0
        %2599 = vmatprep.subr.mxu0 0.0
        %2600 = vmatpush1.msra.mxu0 0.0
        %2601 = vmatprep.subr.mxu0 0.0
        %2602 = vmatpush1.msra.mxu0 0.0
        %2603 = vmatprep.subr.mxu0 0.0
        %2604 = vmatpush1.msra.mxu0 0.0
        %2605 = vmatprep.subr.mxu0 0.0
        %2606 = vmatpush1.msra.mxu0 0.0
        %2607 = vmatprep.subr.mxu0 0.0
        %2608 = vmatpush1.msra.mxu0 0.0
        %2609 = vmatprep.subr.mxu0 0.0
        %2610 = vmatpush1.msra.mxu0 0.0
        %2611 = vmatprep.subr.mxu0 0.0
        %2612 = vmatpush1.msra.mxu0 0.0
        %2613 = vmatprep.mubr.f32.mxu0 0.0
        %2614 = vmatmul.mubr.f32.gmra.mrb[0].mxu0 %v2547
        %v2615 = vpop.f32.mrb[0].mxu0
        %v2616 = vadd.f32 0.0, %v2615
        %v2617 = vpop.f32.mrb[0].mxu0
        %2618 = vdwg.mxu0
        %v2619 = vadd.f32 %v2536, %v2616
        %v2620 = vmax.f32 %v2619, 0.0
        %v2621 = vld [vmem:[#allocation6] sm:$0xff]
        %v2622 = vld [vmem:[#allocation6 + $0x8] sm:$0xff]
        %v2623 = vld [vmem:[#allocation6 + $0x10] sm:$0xff]
        %v2624 = vld [vmem:[#allocation6 + $0x18] sm:$0xff]
        %v2625 = vld [vmem:[#allocation6 + $0x20] sm:$0xff]
        %v2626 = vld [vmem:[#allocation6 + $0x28] sm:$0xff]
        %v2627 = vld [vmem:[#allocation6 + $0x30] sm:$0xff]
        %v2628 = vld [vmem:[#allocation6 + $0x38] sm:$0xff]
        %v2629 = vld [vmem:[#allocation6 + $0x40] sm:$0xff]
        %v2630 = vld [vmem:[#allocation6 + $0x48] sm:$0xff]
        %v2631 = vld [vmem:[#allocation6 + $0x50] sm:$0xff]
        %v2632 = vld [vmem:[#allocation6 + $0x58] sm:$0xff]
        %v2633 = vld [vmem:[#allocation6 + $0x60] sm:$0xff]
        %v2634 = vld [vmem:[#allocation6 + $0x68] sm:$0xff]
        %v2635 = vld [vmem:[#allocation6 + $0x70] sm:$0xff]
        %v2636 = vld [vmem:[#allocation6 + $0x78] sm:$0xff]
        %v2637 = vld [vmem:[%s12] sm:$0x1]
        %2638 = vmatprep.subr.mxu0 0.0
        %2639 = vmatpush1.msra.mxu0 %v2621
        %2640 = vmatprep.subr.mxu0 0.0
        %2641 = vmatpush1.msra.mxu0 %v2622
        %2642 = vmatprep.subr.mxu0 0.0
        %2643 = vmatpush1.msra.mxu0 %v2623
        %2644 = vmatprep.subr.mxu0 0.0
        %2645 = vmatpush1.msra.mxu0 %v2624
        %2646 = vmatprep.subr.mxu0 0.0
        %2647 = vmatpush1.msra.mxu0 %v2625
        %2648 = vmatprep.subr.mxu0 0.0
        %2649 = vmatpush1.msra.mxu0 %v2626
        %2650 = vmatprep.subr.mxu0 0.0
        %2651 = vmatpush1.msra.mxu0 %v2627
        %2652 = vmatprep.subr.mxu0 0.0
        %2653 = vmatpush1.msra.mxu0 %v2628
        %2654 = vmatprep.subr.mxu0 0.0
        %2655 = vmatpush1.msra.mxu0 %v2629
        %2656 = vmatprep.subr.mxu0 0.0
        %2657 = vmatpush1.msra.mxu0 %v2630
        %2658 = vmatprep.subr.mxu0 0.0
        %2659 = vmatpush1.msra.mxu0 %v2631
        %2660 = vmatprep.subr.mxu0 0.0
        %2661 = vmatpush1.msra.mxu0 %v2632
        %2662 = vmatprep.subr.mxu0 0.0
        %2663 = vmatpush1.msra.mxu0 %v2633
        %2664 = vmatprep.subr.mxu0 0.0
        %2665 = vmatpush1.msra.mxu0 %v2634
        %2666 = vmatprep.subr.mxu0 0.0
        %2667 = vmatpush1.msra.mxu0 %v2635
        %2668 = vmatprep.subr.mxu0 0.0
        %2669 = vmatpush1.msra.mxu0 %v2636
        %2670 = vmatprep.subr.mxu0 0.0
        %2671 = vmatpush1.msra.mxu0 0.0
        %2672 = vmatprep.subr.mxu0 0.0
        %2673 = vmatpush1.msra.mxu0 0.0
        %2674 = vmatprep.subr.mxu0 0.0
        %2675 = vmatpush1.msra.mxu0 0.0
        %2676 = vmatprep.subr.mxu0 0.0
        %2677 = vmatpush1.msra.mxu0 0.0
        %2678 = vmatprep.subr.mxu0 0.0
        %2679 = vmatpush1.msra.mxu0 0.0
        %2680 = vmatprep.subr.mxu0 0.0
        %2681 = vmatpush1.msra.mxu0 0.0
        %2682 = vmatprep.subr.mxu0 0.0
        %2683 = vmatpush1.msra.mxu0 0.0
        %2684 = vmatprep.subr.mxu0 0.0
        %2685 = vmatpush1.msra.mxu0 0.0
        %2686 = vmatprep.subr.mxu0 0.0
        %2687 = vmatpush1.msra.mxu0 0.0
        %2688 = vmatprep.subr.mxu0 0.0
        %2689 = vmatpush1.msra.mxu0 0.0
        %2690 = vmatprep.subr.mxu0 0.0
        %2691 = vmatpush1.msra.mxu0 0.0
        %2692 = vmatprep.subr.mxu0 0.0
        %2693 = vmatpush1.msra.mxu0 0.0
        %2694 = vmatprep.subr.mxu0 0.0
        %2695 = vmatpush1.msra.mxu0 0.0
        %2696 = vmatprep.subr.mxu0 0.0
        %2697 = vmatpush1.msra.mxu0 0.0
        %2698 = vmatprep.subr.mxu0 0.0
        %2699 = vmatpush1.msra.mxu0 0.0
        %2700 = vmatprep.subr.mxu0 0.0
        %2701 = vmatpush1.msra.mxu0 0.0
        %2702 = vmatprep.mubr.f32.mxu0 0.0
        %2703 = vmatmul.mubr.f32.gmra.mrb[0].mxu0 %v2620
        %v2704 = vpop.f32.mrb[0].mxu0
        %v2705 = vadd.f32 %v2637, %v2704
        %v2706 = vpop.f32.mrb[0].mxu0
        %2707 = vdwg.mxu0
        %v2708 = vmax.f32 %v2705, 0.0
        %v2709 = vld [vmem:[#allocation7] sm:$0xff]
        %v2710 = vld [vmem:[#allocation7 + $0x8] sm:$0xff]
        %v2711 = vld [vmem:[#allocation7 + $0x10] sm:$0xff]
        %v2712 = vld [vmem:[#allocation7 + $0x18] sm:$0xff]
        %v2713 = vld [vmem:[#allocation7 + $0x20] sm:$0xff]
        %v2714 = vld [vmem:[#allocation7 + $0x28] sm:$0xff]
        %v2715 = vld [vmem:[#allocation7 + $0x30] sm:$0xff]
        %v2716 = vld [vmem:[#allocation7 + $0x38] sm:$0xff]
        %v2717 = vld [vmem:[#allocation7 + $0x40] sm:$0xff]
        %v2718 = vld [vmem:[#allocation7 + $0x48] sm:$0xff]
        %v2719 = vld [vmem:[#allocation7 + $0x50] sm:$0xff]
        %v2720 = vld [vmem:[#allocation7 + $0x58] sm:$0xff]
        %v2721 = vld [vmem:[#allocation7 + $0x60] sm:$0xff]
        %v2722 = vld [vmem:[#allocation7 + $0x68] sm:$0xff]
        %v2723 = vld [vmem:[#allocation7 + $0x70] sm:$0xff]
        %v2724 = vld [vmem:[#allocation7 + $0x78] sm:$0xff]
        %v2725 = vld [vmem:[%s14] sm:$0x1]
        %2726 = vmatprep.subr.mxu0 0.0
        %2727 = vmatpush1.msra.mxu0 %v2709
        %2728 = vmatprep.subr.mxu0 0.0
        %2729 = vmatpush1.msra.mxu0 %v2710
        %2730 = vmatprep.subr.mxu0 0.0
        %2731 = vmatpush1.msra.mxu0 %v2711
        %2732 = vmatprep.subr.mxu0 0.0
        %2733 = vmatpush1.msra.mxu0 %v2712
        %2734 = vmatprep.subr.mxu0 0.0
        %2735 = vmatpush1.msra.mxu0 %v2713
        %2736 = vmatprep.subr.mxu0 0.0
        %2737 = vmatpush1.msra.mxu0 %v2714
        %2738 = vmatprep.subr.mxu0 0.0
        %2739 = vmatpush1.msra.mxu0 %v2715
        %2740 = vmatprep.subr.mxu0 0.0
        %2741 = vmatpush1.msra.mxu0 %v2716
        %2742 = vmatprep.subr.mxu0 0.0
        %2743 = vmatpush1.msra.mxu0 %v2717
        %2744 = vmatprep.subr.mxu0 0.0
        %2745 = vmatpush1.msra.mxu0 %v2718
        %2746 = vmatprep.subr.mxu0 0.0
        %2747 = vmatpush1.msra.mxu0 %v2719
        %2748 = vmatprep.subr.mxu0 0.0
        %2749 = vmatpush1.msra.mxu0 %v2720
        %2750 = vmatprep.subr.mxu0 0.0
        %2751 = vmatpush1.msra.mxu0 %v2721
        %2752 = vmatprep.subr.mxu0 0.0
        %2753 = vmatpush1.msra.mxu0 %v2722
        %2754 = vmatprep.subr.mxu0 0.0
        %2755 = vmatpush1.msra.mxu0 %v2723
        %2756 = vmatprep.subr.mxu0 0.0
        %2757 = vmatpush1.msra.mxu0 %v2724
        %2758 = vmatprep.subr.mxu0 0.0
        %2759 = vmatpush1.msra.mxu0 0.0
        %2760 = vmatprep.subr.mxu0 0.0
        %2761 = vmatpush1.msra.mxu0 0.0
        %2762 = vmatprep.subr.mxu0 0.0
        %2763 = vmatpush1.msra.mxu0 0.0
        %2764 = vmatprep.subr.mxu0 0.0
        %2765 = vmatpush1.msra.mxu0 0.0
        %2766 = vmatprep.subr.mxu0 0.0
        %2767 = vmatpush1.msra.mxu0 0.0
        %2768 = vmatprep.subr.mxu0 0.0
        %2769 = vmatpush1.msra.mxu0 0.0
        %2770 = vmatprep.subr.mxu0 0.0
        %2771 = vmatpush1.msra.mxu0 0.0
        %2772 = vmatprep.subr.mxu0 0.0
        %2773 = vmatpush1.msra.mxu0 0.0
        %2774 = vmatprep.subr.mxu0 0.0
        %2775 = vmatpush1.msra.mxu0 0.0
        %2776 = vmatprep.subr.mxu0 0.0
        %2777 = vmatpush1.msra.mxu0 0.0
        %2778 = vmatprep.subr.mxu0 0.0
        %2779 = vmatpush1.msra.mxu0 0.0
        %2780 = vmatprep.subr.mxu0 0.0
        %2781 = vmatpush1.msra.mxu0 0.0
        %2782 = vmatprep.subr.mxu0 0.0
        %2783 = vmatpush1.msra.mxu0 0.0
        %2784 = vmatprep.subr.mxu0 0.0
        %2785 = vmatpush1.msra.mxu0 0.0
        %2786 = vmatprep.subr.mxu0 0.0
        %2787 = vmatpush1.msra.mxu0 0.0
        %2788 = vmatprep.subr.mxu0 0.0
        %2789 = vmatpush1.msra.mxu0 0.0
        %2790 = vmatprep.mubr.f32.mxu0 0.0
        %2791 = vmatmul.mubr.f32.gmra.mrb[0].mxu0 %v2708
        %v2792 = vpop.f32.mrb[0].mxu0
        %v2793 = vadd.f32 %v2725, %v2792
        %v2794 = vpop.f32.mrb[0].mxu0
        %2795 = vdwg.mxu0
        %v2796 = vmax.f32 %v2793, 0.0
        %v2797 = vlaneseq
        %v2798 = vshrl.u32 %v2797, 7
        %v2799 = vsub.s32 0, %v2798
        %v2800 = vrot.slane %v2796, %v2799
        %2801 = vst [vmem:[%s551] sm:$0xff] %v2800
        %p2802 = scmp.lt.s32.totalorder %s29, 1
        %s2803 = scalar_select %p2802, %s29, 1
        %s2804 = smul.addr %s2803, 8
        %s2805 = scalar_lea.vmem %s15, %s2804
        // Predicated region
        $region97: #{lenet_forward.1} parent=79 // pred_check
          %p2806 = pneg %p367
        $region98: #{lenet_forward.1} parent=79 // pred_check_branch
          %2808 = sbr.rel (%p2806) target = $region100
        $region99: #{lenet_forward.1} parent=79 // pred_region
          _
        $region100: #{lenet_forward.1} parent=79 // pred_fallthru
          _
      $region80: #{lenet_forward.1} parent=5 // pred_fallthru
        _
      %p2809 = scmp.le.s32.totalorder 2, %s24
      // Predicated region
      $region101: #{lenet_forward.1} parent=5 // pred_check
        %p2810 = pneg %p2809
      $region102: #{lenet_forward.1} parent=5 // pred_check_branch
        %2812 = sbr.rel (%p2810) target = $region104
      $region103: #{lenet_forward.1} parent=5 // pred_region
        %s2813 = ssub.s32 %s24, 2
        // Predicated region
        $region105: #{lenet_forward.1} parent=103 // pred_check
          %p2814 = pneg %p373
        $region106: #{lenet_forward.1} parent=103 // pred_check_branch
          %2816 = sbr.rel (%p2814) target = $region108
        $region107: #{lenet_forward.1} parent=103 // pred_region
          %p2817 = scmp.lt.s32.totalorder %s30, 1
          %s2818 = scalar_select %p2817, %s30, 1
          %s2819 = smul.addr %s2818, 8
          %s2820 = scalar_lea.vmem %s15, %s2819
        $region108: #{lenet_forward.1} parent=103 // pred_fallthru
          _
      $region104: #{lenet_forward.1} parent=5 // pred_fallthru
        _
    $region6: #{lenet_forward.1} parent=1 // loop_footer
      %s28 = sadd.s32 1, %s24
    $region7: #{lenet_forward.1} parent=1 // loop_footer_branch
      %23 = sbr.rel target = $region3
    $region8: #{lenet_forward.1} parent=1 // loop_exit
      _
    %2821 = vsyncpa [#allocation3], 1
    %s2822 = scalar_lea.sflag [#allocation3], 1
    %2823 = vsyncpa %s2822, 1
    %2824 = vsyncpa [#allocation5], 1
    %2825 = vsyncpa [#allocation8], 1

</llo_original>
